<compile_context>
chip_gen: v6e
topology: v6e:2x2x1
jax: 0.10.0
libtpu: 0.0.40
codegen_flags: <defaults>
</compile_context>

<pallas_src>
import math
import numpy as np
import jax
import jax.numpy as jnp
from jax.experimental import pallas as pl
from jax.experimental.pallas import tpu as pltpu

# ----------------------------- configuration (small) -----------------------------
VOCAB = 256                 # vocab_size
EMB = 128                   # token_embedding_size (natural-language embedding dim)
D_MODEL = 128               # feed_forward_size -> transformer model dim
FF_HIDDEN = 128             # layer_size -> FFN hidden dim
NUM_HEADS = 8
HEAD_DIM = D_MODEL // NUM_HEADS
TIME_SEQ = 1                # time_sequence_length

NUM_IMG_TOKENS = 8          # tokens_per_context_image (TokenLearner num_tokens=8)
TOKENS_PER_ACTION = 7       # world_vector(3) + rotation_delta(3) + gripper_closedness(1)
SINGLE_STEP_TOKENS = NUM_IMG_TOKENS + TOKENS_PER_ACTION
ALL_TOKENS = TIME_SEQ * SINGLE_STEP_TOKENS          # 15
SEQ_PAD = 16                                        # padded sequence length (lane/sublane friendly)

IMG_C, IMG_H, IMG_W = 3, 16, 16
PATCH = 8
NUM_PATCHES = (IMG_H // PATCH) * (IMG_W // PATCH)   # 4
PATCH_DIM = IMG_C * PATCH * PATCH                   # 192

# action space: world_vector in [-1,1], rotation_delta in [-pi/2, pi/2] (output space halves it),
# gripper in [-1,1]
ACTION_LOW = np.concatenate([np.full(3, -1.0), np.full(3, -np.pi / 2.0), np.full(1, -1.0)]).astype(np.float32)
ACTION_HIGH = np.concatenate([np.full(3, 1.0), np.full(3, np.pi / 2.0), np.full(1, 1.0)]).astype(np.float32)


# ----------------------------- packed parameter layout -----------------------------
def _offsets(sizes):
    out, o = [], 0
    for s in sizes:
        out.append((o, o + s))
        o += s
    return out, o

# big weight slab: every (128, X) weight, concatenated along lanes (bf16)
(W_IN_SL, W_QKV_SL, W_O_SL, W_FF1_SL, W_FF2_SL, W_OUT_SL, W_CTX_SL), W_BIG_LANES = _offsets(
    [D_MODEL, 3 * D_MODEL, D_MODEL, FF_HIDDEN, D_MODEL, VOCAB, EMB])

# bias slab: every (1, X) bias, concatenated along lanes (f32)
(B_PATCH_SL, B_IN_SL, B_QKV_SL, B_O_SL, B_FF1_SL, B_FF2_SL, B_OUT_SL), B_ALL_LANES = _offsets(
    [EMB, D_MODEL, 3 * D_MODEL, D_MODEL, FF_HIDDEN, D_MODEL, VOCAB])


# ----------------------------- mask generation (exact port) -----------------------------
def _get_action_index_for_token(k):
    if k < 0 or k >= ALL_TOKENS:
        return -1
    if k % SINGLE_STEP_TOKENS < NUM_IMG_TOKENS:
        return -1
    return int(k / SINGLE_STEP_TOKENS)


def generate_default_attention_mask():
    default = np.tril(np.ones((ALL_TOKENS, ALL_TOKENS), dtype=np.int64))
    action_mask = np.zeros((ALL_TOKENS, ALL_TOKENS), dtype=np.int64)
    for i in range(ALL_TOKENS):
        for j in range(ALL_TOKENS):
            ai = _get_action_index_for_token(i)
            aj = _get_action_index_for_token(j)
            m = 0
            if ai != -1 and aj != -1:
                if aj < ai:
                    m = 1
                if aj == ai and j <= i:
                    m = 1
            action_mask[i, j] = m
    return default - action_mask  # 1 = may attend, 0 = masked


ACTION_TOKENS_MASK = []
for n in range(0, ALL_TOKENS, SINGLE_STEP_TOKENS):
    for x in range(0, TOKENS_PER_ACTION):
        ACTION_TOKENS_MASK.append(x + n + NUM_IMG_TOKENS)


# ----------------------------- fused Pallas kernel -----------------------------
def fused_forward_kernel(patches_ref, ctx_ref, w_patch_ref, w_tl_ref, w_big_ref,
                         b_all_ref, ln_ref, pos_ref, mask_ref, out_ref, seq_ref):
    """Image tokenizer + 1-layer pre-LN transformer + vocab head for TB sequences per grid step."""
    TB = out_ref.shape[0]
    R = TB * SEQ_PAD
    bf16 = jnp.bfloat16
    f32 = jnp.float32

    # ---- unpack packed weights / biases (128-aligned lane slices: cheap) ----
    w_in = w_big_ref[:, W_IN_SL[0]:W_IN_SL[1]]
    w_qkv = w_big_ref[:, W_QKV_SL[0]:W_QKV_SL[1]]
    w_o = w_big_ref[:, W_O_SL[0]:W_O_SL[1]]
    w_ff1 = w_big_ref[:, W_FF1_SL[0]:W_FF1_SL[1]]
    w_ff2 = w_big_ref[:, W_FF2_SL[0]:W_FF2_SL[1]]
    w_out = w_big_ref[:, W_OUT_SL[0]:W_OUT_SL[1]]
    w_ctx = w_big_ref[:, W_CTX_SL[0]:W_CTX_SL[1]]

    b_patch = b_all_ref[:, B_PATCH_SL[0]:B_PATCH_SL[1]]
    b_in = b_all_ref[:, B_IN_SL[0]:B_IN_SL[1]]
    b_qkv = b_all_ref[:, B_QKV_SL[0]:B_QKV_SL[1]]
    b_o = b_all_ref[:, B_O_SL[0]:B_O_SL[1]]
    b_ff1 = b_all_ref[:, B_FF1_SL[0]:B_FF1_SL[1]]
    b_ff2 = b_all_ref[:, B_FF2_SL[0]:B_FF2_SL[1]]
    b_out = b_all_ref[:, B_OUT_SL[0]:B_OUT_SL[1]]
    ln = ln_ref[...]                                    # (6, D): [ln1 g,b | ln2 g,b | lnf g,b]

    def layer_norm(v, g, b):
        mu = jnp.mean(v, axis=-1, keepdims=True)
        var = jnp.mean(jnp.square(v - mu), axis=-1, keepdims=True)
        return (v - mu) * jax.lax.rsqrt(var + 1e-6) * g + b

    def softmax_lastdim(x):
        m = jnp.max(x, axis=-1, keepdims=True)
        e = jnp.exp(x - m)
        return e * pl.reciprocal(jnp.sum(e, axis=-1, keepdims=True), approx=True)

    # ================= image tokenizer (patch embed + context + TokenLearner) =================
    p2 = patches_ref[...].reshape(TB * NUM_PATCHES, PATCH_DIM)                 # bf16
    emb2 = jnp.dot(p2, w_patch_ref[...], preferred_element_type=f32) + b_patch  # (TB*P, EMB) f32
    ctx2 = ctx_ref[...].reshape(TB, EMB)                                        # bf16
    ctx_proj = jnp.dot(ctx2, w_ctx, preferred_element_type=f32)                 # (TB, EMB) f32
    emb3 = emb2.reshape(TB, NUM_PATCHES, EMB) + ctx_proj[:, None, :]            # (TB, P, EMB)

    logits2 = jnp.dot(emb3.astype(bf16).reshape(TB * NUM_PATCHES, EMB), w_tl_ref[...],
                      preferred_element_type=f32)                               # (TB*P, 8)
    logits3 = logits2.reshape(TB, NUM_PATCHES, NUM_IMG_TOKENS)
    m_sp = jnp.max(logits3, axis=1, keepdims=True)
    e_sp = jnp.exp(logits3 - m_sp)
    wgt = e_sp * pl.reciprocal(jnp.sum(e_sp, axis=1, keepdims=True), approx=True)  # spatial softmax
    # TokenLearner pooling as broadcast-multiply + sublane reduce (no tiny transposed matmuls)
    tokens3 = jnp.sum(wgt[:, :, :, None] * emb3[:, :, None, :], axis=1)         # (TB, 8, EMB)

    # ================= assemble transformer input =================
    # Action-token embeddings are zeroed in the module (torch.zeros_like), so only the 8 image rows
    # go through the dense-in matmul; action/pad rows are bias + positional embedding only.
    tok2 = tokens3.reshape(TB * NUM_IMG_TOKENS, EMB).astype(bf16)
    h_img = jnp.dot(tok2, w_in, preferred_element_type=f32).reshape(TB, NUM_IMG_TOKENS, D_MODEL)
    seq_ref[:, 0:NUM_IMG_TOKENS, :] = h_img + b_in + pos_ref[0:NUM_IMG_TOKENS, :]
    seq_ref[:, NUM_IMG_TOKENS:SEQ_PAD, :] = jnp.broadcast_to(
        b_in + pos_ref[NUM_IMG_TOKENS:SEQ_PAD, :], (TB, SEQ_PAD - NUM_IMG_TOKENS, D_MODEL))
    h2 = seq_ref[...].reshape(R, D_MODEL)                                        # (R, D) f32

    # ================= pre-LN masked multi-head self-attention =================
    hn = layer_norm(h2, ln[0:1, :], ln[1:2, :])
    qkv = jnp.dot(hn.astype(bf16), w_qkv, preferred_element_type=f32) + b_qkv    # (R, 3D)
    qkv_b = qkv.astype(bf16)
    q3 = qkv_b[:, 0:D_MODEL].reshape(TB, SEQ_PAD, D_MODEL)
    k3 = qkv_b[:, D_MODEL:2 * D_MODEL].reshape(TB, SEQ_PAD, D_MODEL)
    v2 = qkv_b[:, 2 * D_MODEL:3 * D_MODEL]                                       # (R, D) bf16

    mask_add = mask_ref[...]                                                     # (SEQ_PAD, SEQ_PAD)
    scale = 1.0 / math.sqrt(HEAD_DIM)
    attn3 = jnp.zeros((TB, SEQ_PAD, D_MODEL), f32)
    # Per-head loop is unrolled at trace time; each iteration is TB-batched, and the head concat is
    # folded away by projecting V through the corresponding w_o row-block before the P @ V matmul.
    for hd in range(NUM_HEADS):
        lo = hd * HEAD_DIM
        hi = lo + HEAD_DIM
        sc = jnp.einsum('bqd,bkd->bqk', q3[:, :, lo:hi], k3[:, :, lo:hi],
                        preferred_element_type=f32) * scale + mask_add           # (TB, S, S)
        p = softmax_lastdim(sc)
        vo = jnp.dot(v2[:, lo:hi], w_o[lo:hi, :], preferred_element_type=f32)    # (R, D)
        vo3 = vo.astype(bf16).reshape(TB, SEQ_PAD, D_MODEL)
        attn3 = attn3 + jnp.einsum('bqk,bkd->bqd', p.astype(bf16), vo3,
                                   preferred_element_type=f32)
    h2 = h2 + attn3.reshape(R, D_MODEL) + b_o

    # ================= feed forward =================
    hn2 = layer_norm(h2, ln[2:3, :], ln[3:4, :])
    ff = jnp.maximum(jnp.dot(hn2.astype(bf16), w_ff1, preferred_element_type=f32) + b_ff1, 0.0)
    ffo = jnp.dot(ff.astype(bf16), w_ff2, preferred_element_type=f32) + b_ff2
    h2 = h2 + ffo

    # ================= output vocab head =================
    hf = layer_norm(h2, ln[4:5, :], ln[5:6, :])
    logits = jnp.dot(hf.astype(bf16), w_out, preferred_element_type=f32) + b_out  # (R, VOCAB)
    out_ref[...] = logits.reshape(TB, SEQ_PAD, VOCAB)


# ----------------------------- wrapper -----------------------------
def _pick_block(bt):
    """>=2 grid steps whenever possible (v7x megacore), up to 8 sequences per block."""
    if bt <= 1:
        return 1
    return int(min(8, max(1, (bt + 1) // 2)))


def run_fused_forward(patches, ctx, params):
    BT = patches.shape[0]
    TB = _pick_block(BT)
    nb = -(-BT // TB)
    BTp = nb * TB
    if BTp != BT:
        patches = jnp.pad(patches, ((0, BTp - BT), (0, 0), (0, 0)))
        ctx = jnp.pad(ctx, ((0, BTp - BT), (0, 0), (0, 0)))

    def const(a):
        return pl.BlockSpec(a.shape, lambda i: tuple(0 for _ in a.shape))

    out = pl.pallas_call(
        fused_forward_kernel,
        out_shape=jax.ShapeDtypeStruct((BTp, SEQ_PAD, VOCAB), jnp.float32),
        grid=(nb,),
        in_specs=[
            pl.BlockSpec((TB, NUM_PATCHES, PATCH_DIM), lambda i: (i, 0, 0)),
            pl.BlockSpec((TB, 1, EMB), lambda i: (i, 0, 0)),
            const(params["w_patch"]),
            const(params["w_tl"]),
            const(params["w_big"]),
            const(params["b_all"]),
            const(params["ln_all"]),
            const(params["pos_pad"]),
            const(params["mask_pad"]),
        ],
        out_specs=pl.BlockSpec((TB, SEQ_PAD, VOCAB), lambda i: (i, 0, 0)),
        scratch_shapes=[pltpu.VMEM((TB, SEQ_PAD, D_MODEL), jnp.float32)],
        compiler_params=pltpu.CompilerParams(dimension_semantics=("parallel",)),
    )(patches, ctx, params["w_patch"], params["w_tl"], params["w_big"],
      params["b_all"], params["ln_all"], params["pos_pad"], params["mask_pad"])
    return out[:BT]


# ----------------------------- parameter init + packing -----------------------------
def init_params(key):
    ks = jax.random.split(key, 12)
    n = lambda k, shape: 0.02 * jax.random.normal(k, shape, jnp.float32)
    gb = lambda: jnp.concatenate([jnp.ones((1, D_MODEL), jnp.float32),
                                  jnp.zeros((1, D_MODEL), jnp.float32)], axis=0)
    return {
        "w_patch": n(ks[0], (PATCH_DIM, EMB)), "b_patch": jnp.zeros((1, EMB), jnp.float32),
        "w_ctx": n(ks[1], (EMB, EMB)),
        "w_tl": n(ks[2], (EMB, NUM_IMG_TOKENS)),
        "w_in": n(ks[3], (EMB, D_MODEL)), "b_in": jnp.zeros((1, D_MODEL), jnp.float32),
        "ln1": gb(),
        "w_qkv": n(ks[4], (D_MODEL, 3 * D_MODEL)), "b_qkv": jnp.zeros((1, 3 * D_MODEL), jnp.float32),
        "w_o": n(ks[5], (D_MODEL, D_MODEL)), "b_o": jnp.zeros((1, D_MODEL), jnp.float32),
        "ln2": gb(),
        "w_ff1": n(ks[6], (D_MODEL, FF_HIDDEN)), "b_ff1": jnp.zeros((1, FF_HIDDEN), jnp.float32),
        "w_ff2": n(ks[7], (FF_HIDDEN, D_MODEL)), "b_ff2": jnp.zeros((1, D_MODEL), jnp.float32),
        "lnf": gb(),
        "w_out": n(ks[8], (D_MODEL, VOCAB)), "b_out": jnp.zeros((1, VOCAB), jnp.float32),
        "pos": n(ks[9], (ALL_TOKENS, D_MODEL)),
        # _action_token_emb exists in the module but its output is zeroed (torch.zeros_like),
        # so it contributes nothing to the sequence; weights kept for shape parity only.
        "w_action_emb": n(ks[10], (VOCAB, EMB)),
    }


def pack_params(raw):
    w_big = jnp.concatenate(
        [raw["w_in"], raw["w_qkv"], raw["w_o"], raw["w_ff1"], raw["w_ff2"], raw["w_out"],
         raw["w_ctx"]], axis=1).astype(jnp.bfloat16)                     # (128, 1280) bf16
    b_all = jnp.concatenate(
        [raw["b_patch"], raw["b_in"], raw["b_qkv"], raw["b_o"], raw["b_ff1"], raw["b_ff2"],
         raw["b_out"]], axis=1)                                          # (1, 1280) f32
    ln_all = jnp.concatenate([raw["ln1"], raw["ln2"], raw["lnf"]], axis=0)  # (6, 128) f32
    pos_pad = jnp.concatenate(
        [raw["pos"], jnp.zeros((SEQ_PAD - ALL_TOKENS, D_MODEL), jnp.float32)], axis=0)

    # additive mask (1 = attend -> 0, 0 = masked -> -1e9); pad key column masked for real queries,
    # pad query row left unmasked (uniform softmax, outputs discarded).
    mask01 = generate_default_attention_mask().astype(np.float32)
    add = np.full((SEQ_PAD, SEQ_PAD), -1e9, np.float32)
    add[:ALL_TOKENS, :ALL_TOKENS] = np.where(mask01 > 0, 0.0, -1e9)
    add[ALL_TOKENS:, :] = 0.0
    mask_pad = jnp.asarray(add)

    return {
        "w_patch": raw["w_patch"].astype(jnp.bfloat16),
        "w_tl": raw["w_tl"].astype(jnp.bfloat16),
        "w_big": w_big, "b_all": b_all, "ln_all": ln_all,
        "pos_pad": pos_pad, "mask_pad": mask_pad,
    }


# ----------------------------- forward (outer_rank == 2 path) -----------------------------
def detokenize(tokens):
    low = jnp.asarray(ACTION_LOW)
    high = jnp.asarray(ACTION_HIGH)
    frac = tokens.astype(jnp.float32) / float(VOCAB - 1)
    vals = low + frac * (high - low)
    return {
        "world_vector": vals[..., 0:3],
        "rotation_delta": vals[..., 3:6],
        "gripper_closedness_action": vals[..., 6:7],
    }


def transformer_network_forward(observations, network_state, params):
    image = observations["image"]                              # (B, T, C, H, W)  NCHW per step
    nl_emb = observations["natural_language_embedding"]        # (B, T, EMB)
    B, T = image.shape[0], image.shape[1]
    assert T == 1 and TIME_SEQ == 1  # TODO(synk): T>1 needs per-sequence regrouping of step tokens

    # --- patchify (glue), then one fused Pallas call for tokenizer + transformer + head ---
    img = image.reshape(B * T, IMG_C, IMG_H, IMG_W)
    patches = img.reshape(B * T, IMG_C, IMG_H // PATCH, PATCH, IMG_W // PATCH, PATCH)
    patches = patches.transpose(0, 2, 4, 1, 3, 5).reshape(B * T, NUM_PATCHES, PATCH_DIM)
    patches = patches.astype(jnp.bfloat16)
    ctx = nl_emb.reshape(B * T, 1, EMB).astype(jnp.bfloat16)

    out_pad = run_fused_forward(patches, ctx, params)           # (B*T, SEQ_PAD, VOCAB)
    output_tokens = out_pad[:, :ALL_TOKENS, :].reshape(B, ALL_TOKENS, VOCAB)

    # --- action tokens (self._actions is None -> zeros) ---
    action_tokens = jnp.zeros((B, T, TOKENS_PER_ACTION), dtype=jnp.int32)

    # --- slice action logits, argmax, loss, detokenize (exact port of the module's glue) ---
    # module: predicted_action_index = torch.tensor(self._action_tokens_mask) - 1
    predicted_action_index = jnp.asarray(np.array(ACTION_TOKENS_MASK, dtype=np.int32) - 1)
    action_logits = output_tokens[:, predicted_action_index]                   # (B, T*7, V)
    action_logits_for_training = action_logits.reshape(B, T, TOKENS_PER_ACTION, VOCAB)
    action_logits_for_output = action_logits_for_training[:, -1]               # (B, 7, V)
    predicted_tokens_for_output = jnp.argmax(action_logits_for_output, axis=-1)

    # module: action_loss = mean(CrossEntropyLoss(mean)(logits, labels) / num_items, dim=-1)
    # with num_items = b*t*single_time_step_num_tokens (=15); mean over dim -1 of a scalar is
    # the identity, so action_loss == CE_mean / num_items.
    logp = jax.nn.log_softmax(action_logits_for_training, axis=-1)
    nll = -jnp.take_along_axis(logp, action_tokens[..., None].astype(jnp.int32), axis=-1)[..., 0]
    ce = jnp.mean(nll)                                        # CrossEntropyLoss(reduction='mean')
    num_items = float(B * T) * SINGLE_STEP_TOKENS
    action_loss = ce / num_items

    output_actions = detokenize(predicted_tokens_for_output)
    aux = {
        "action_labels": action_tokens,
        "action_predictions": jnp.argmax(action_logits_for_training, axis=-1),
        "action_loss": action_loss,
        "actor_loss_mask": jnp.ones((B,), jnp.float32),
    }
    return output_actions, network_state, action_loss, aux


# ----------------------------- main -----------------------------
if __name__ == "__main__":
    key = jax.random.PRNGKey(0)
    k_img, k_nl, k_params = jax.random.split(key, 3)

    B, T = 4, TIME_SEQ
    observations = {
        "image": jax.random.uniform(k_img, (B, T, IMG_C, IMG_H, IMG_W), jnp.float32),
        "natural_language_embedding": jax.random.normal(k_nl, (B, T, EMB), jnp.float32),
    }
    network_state = {
        "context_image_tokens": jnp.zeros((B, T, NUM_IMG_TOKENS, EMB), jnp.float32),
        "action_tokens": jnp.zeros((B, T, TOKENS_PER_ACTION), jnp.int32),
        "seq_idx": jnp.zeros((B, 1), jnp.int32),
    }

    raw_params = init_params(k_params)
    packed_params = pack_params(raw_params)

    output_actions, new_state, loss, aux = transformer_network_forward(
        observations, network_state, packed_params)

    jax.block_until_ready(output_actions["world_vector"])
    jax.block_until_ready(output_actions["rotation_delta"])
    jax.block_until_ready(output_actions["gripper_closedness_action"])
    jax.block_until_ready(loss)

    assert output_actions["world_vector"].shape == (B, 3)
    assert output_actions["rotation_delta"].shape == (B, 3)
    assert output_actions["gripper_closedness_action"].shape == (B, 1)
    assert bool(jnp.isfinite(loss))
    print("KERNEL_OK")
</pallas_src>

<mosaic_0001>
module attributes {stable_mosaic.version = 11 : i64} {
  func.func @fused_forward_kernel(%arg0: i32, %arg1: memref<2x4x192xbf16, #tpu.memory_space<vmem>>, %arg2: memref<2x1x128xbf16, #tpu.memory_space<vmem>>, %arg3: memref<192x128xbf16, #tpu.memory_space<vmem>>, %arg4: memref<128x8xbf16, #tpu.memory_space<vmem>>, %arg5: memref<128x1280xbf16, #tpu.memory_space<vmem>>, %arg6: memref<1x1280xf32, #tpu.memory_space<vmem>>, %arg7: memref<6x128xf32, #tpu.memory_space<vmem>>, %arg8: memref<16x128xf32, #tpu.memory_space<vmem>>, %arg9: memref<16x16xf32, #tpu.memory_space<vmem>>, %arg10: memref<2x16x256xf32, #tpu.memory_space<vmem>>, %arg11: memref<2x16x128xf32, #tpu.memory_space<vmem>>) attributes {dimension_semantics = [#tpu.dimension_semantics<parallel>], iteration_bounds = array<i64: 2>, scalar_prefetch = 0 : i64, scratch_operands = 1 : i64, tpu.core_type = #tpu.core_type<tc>, window_params = [{transform_indices = @transform_0, window_bounds = array<i64: 2, 4, 192>}, {transform_indices = @transform_1, window_bounds = array<i64: 2, 1, 128>}, {pipeline_mode = #tpu.pipeline_mode<synchronous>, transform_indices = @transform_2, window_bounds = array<i64: 192, 128>}, {pipeline_mode = #tpu.pipeline_mode<synchronous>, transform_indices = @transform_3, window_bounds = array<i64: 128, 8>}, {pipeline_mode = #tpu.pipeline_mode<synchronous>, transform_indices = @transform_4, window_bounds = array<i64: 128, 1280>}, {pipeline_mode = #tpu.pipeline_mode<synchronous>, transform_indices = @transform_5, window_bounds = array<i64: 1, 1280>}, {pipeline_mode = #tpu.pipeline_mode<synchronous>, transform_indices = @transform_6, window_bounds = array<i64: 6, 128>}, {pipeline_mode = #tpu.pipeline_mode<synchronous>, transform_indices = @transform_7, window_bounds = array<i64: 16, 128>}, {pipeline_mode = #tpu.pipeline_mode<synchronous>, transform_indices = @transform_8, window_bounds = array<i64: 16, 16>}, {transform_indices = @transform_9, window_bounds = array<i64: 2, 16, 256>}]} {
    %c0 = arith.constant 0 : index
    %c0_0 = arith.constant 0 : index
    %0 = vector.load %arg5[%c0, %c0_0] : memref<128x1280xbf16, #tpu.memory_space<vmem>>, vector<128x128xbf16>
    %c0_1 = arith.constant 0 : index
    %c128 = arith.constant 128 : index
    %1 = vector.load %arg5[%c0_1, %c128] : memref<128x1280xbf16, #tpu.memory_space<vmem>>, vector<128x384xbf16>
    %c0_2 = arith.constant 0 : index
    %c512 = arith.constant 512 : index
    %2 = vector.load %arg5[%c0_2, %c512] : memref<128x1280xbf16, #tpu.memory_space<vmem>>, vector<128x128xbf16>
    %c0_3 = arith.constant 0 : index
    %c640 = arith.constant 640 : index
    %3 = vector.load %arg5[%c0_3, %c640] : memref<128x1280xbf16, #tpu.memory_space<vmem>>, vector<128x128xbf16>
    %c0_4 = arith.constant 0 : index
    %c768 = arith.constant 768 : index
    %4 = vector.load %arg5[%c0_4, %c768] : memref<128x1280xbf16, #tpu.memory_space<vmem>>, vector<128x128xbf16>
    %c0_5 = arith.constant 0 : index
    %c896 = arith.constant 896 : index
    %5 = vector.load %arg5[%c0_5, %c896] : memref<128x1280xbf16, #tpu.memory_space<vmem>>, vector<128x256xbf16>
    %c0_6 = arith.constant 0 : index
    %c1152 = arith.constant 1152 : index
    %6 = vector.load %arg5[%c0_6, %c1152] : memref<128x1280xbf16, #tpu.memory_space<vmem>>, vector<128x128xbf16>
    %c0_7 = arith.constant 0 : index
    %c0_8 = arith.constant 0 : index
    %7 = vector.load %arg6[%c0_7, %c0_8] : memref<1x1280xf32, #tpu.memory_space<vmem>>, vector<1x128xf32>
    %c0_9 = arith.constant 0 : index
    %c128_10 = arith.constant 128 : index
    %8 = vector.load %arg6[%c0_9, %c128_10] : memref<1x1280xf32, #tpu.memory_space<vmem>>, vector<1x128xf32>
    %c0_11 = arith.constant 0 : index
    %c256 = arith.constant 256 : index
    %9 = vector.load %arg6[%c0_11, %c256] : memref<1x1280xf32, #tpu.memory_space<vmem>>, vector<1x384xf32>
    %c0_12 = arith.constant 0 : index
    %c640_13 = arith.constant 640 : index
    %10 = vector.load %arg6[%c0_12, %c640_13] : memref<1x1280xf32, #tpu.memory_space<vmem>>, vector<1x128xf32>
    %c0_14 = arith.constant 0 : index
    %c768_15 = arith.constant 768 : index
    %11 = vector.load %arg6[%c0_14, %c768_15] : memref<1x1280xf32, #tpu.memory_space<vmem>>, vector<1x128xf32>
    %c0_16 = arith.constant 0 : index
    %c896_17 = arith.constant 896 : index
    %12 = vector.load %arg6[%c0_16, %c896_17] : memref<1x1280xf32, #tpu.memory_space<vmem>>, vector<1x128xf32>
    %c0_18 = arith.constant 0 : index
    %c1024 = arith.constant 1024 : index
    %13 = vector.load %arg6[%c0_18, %c1024] : memref<1x1280xf32, #tpu.memory_space<vmem>>, vector<1x256xf32>
    %c0_19 = arith.constant 0 : index
    %c0_20 = arith.constant 0 : index
    %14 = vector.load %arg7[%c0_19, %c0_20] : memref<6x128xf32, #tpu.memory_space<vmem>>, vector<6x128xf32>
    %c0_21 = arith.constant 0 : index
    %c0_22 = arith.constant 0 : index
    %c0_23 = arith.constant 0 : index
    %15 = vector.load %arg1[%c0_21, %c0_22, %c0_23] : memref<2x4x192xbf16, #tpu.memory_space<vmem>>, vector<2x4x192xbf16>
    %16 = vector.shape_cast %15 : vector<2x4x192xbf16> to vector<8x192xbf16>
    %c0_24 = arith.constant 0 : index
    %c0_25 = arith.constant 0 : index
    %17 = vector.load %arg3[%c0_24, %c0_25] : memref<192x128xbf16, #tpu.memory_space<vmem>>, vector<192x128xbf16>
    %cst = arith.constant dense<0.000000e+00> : vector<8x128xf32>
    %18 = tpu.matmul %16, %17, %cst {dimension_numbers = #tpu.dot_dimension_numbers<[1], [0], [0], [1], [0, 0, 1, 1], [], []>} : vector<8x192xbf16>, vector<192x128xbf16>, vector<8x128xf32> -> vector<8x128xf32>
    %19 = vector.broadcast %7 : vector<1x128xf32> to vector<8x128xf32>
    %20 = arith.addf %18, %19 : vector<8x128xf32>
    %c0_26 = arith.constant 0 : index
    %c0_27 = arith.constant 0 : index
    %c0_28 = arith.constant 0 : index
    %21 = vector.load %arg2[%c0_26, %c0_27, %c0_28] : memref<2x1x128xbf16, #tpu.memory_space<vmem>>, vector<2x1x128xbf16>
    %22 = vector.shape_cast %21 : vector<2x1x128xbf16> to vector<2x128xbf16>
    %cst_29 = arith.constant dense<0.000000e+00> : vector<2x128xf32>
    %23 = tpu.matmul %22, %6, %cst_29 {dimension_numbers = #tpu.dot_dimension_numbers<[1], [0], [0], [1], [0, 0, 1, 1], [], []>} : vector<2x128xbf16>, vector<128x128xbf16>, vector<2x128xf32> -> vector<2x128xf32>
    %24 = vector.shape_cast %20 : vector<8x128xf32> to vector<2x4x128xf32>
    %25 = vector.shape_cast %23 : vector<2x128xf32> to vector<2x1x128xf32>
    %26 = vector.broadcast %25 : vector<2x1x128xf32> to vector<2x4x128xf32>
    %27 = arith.addf %24, %26 : vector<2x4x128xf32>
    %28 = arith.truncf %27 : vector<2x4x128xf32> to vector<2x4x128xbf16>
    %29 = vector.shape_cast %28 : vector<2x4x128xbf16> to vector<8x128xbf16>
    %c0_30 = arith.constant 0 : index
    %c0_31 = arith.constant 0 : index
    %30 = vector.load %arg4[%c0_30, %c0_31] : memref<128x8xbf16, #tpu.memory_space<vmem>>, vector<128x8xbf16>
    %cst_32 = arith.constant dense<0.000000e+00> : vector<8x8xf32>
    %31 = tpu.matmul %29, %30, %cst_32 {dimension_numbers = #tpu.dot_dimension_numbers<[1], [0], [0], [1], [0, 0, 1, 1], [], []>} : vector<8x128xbf16>, vector<128x8xbf16>, vector<8x8xf32> -> vector<8x8xf32>
    %32 = vector.shape_cast %31 : vector<8x8xf32> to vector<2x4x8xf32>
    %cst_33 = arith.constant dense<0xFF800000> : vector<2x8xf32>
    %33 = vector.multi_reduction <maximumf>, %32, %cst_33 [1] : vector<2x4x8xf32> to vector<2x8xf32>
    %34 = vector.shape_cast %33 : vector<2x8xf32> to vector<2x1x8xf32>
    %35 = vector.broadcast %34 : vector<2x1x8xf32> to vector<2x4x8xf32>
    %36 = arith.subf %32, %35 : vector<2x4x8xf32>
    %37 = math.exp %36 : vector<2x4x8xf32>
    %cst_34 = arith.constant dense<0.000000e+00> : vector<2x8xf32>
    %38 = vector.multi_reduction <add>, %37, %cst_34 [1] : vector<2x4x8xf32> to vector<2x8xf32>
    %39 = vector.shape_cast %38 : vector<2x8xf32> to vector<2x1x8xf32>
    %40 = tpu.reciprocal %39 {approx = true} : vector<2x1x8xf32> -> vector<2x1x8xf32>
    %41 = vector.broadcast %40 : vector<2x1x8xf32> to vector<2x4x8xf32>
    %42 = arith.mulf %37, %41 : vector<2x4x8xf32>
    %43 = vector.shape_cast %42 : vector<2x4x8xf32> to vector<2x4x8x1xf32>
    %44 = vector.shape_cast %27 : vector<2x4x128xf32> to vector<2x4x1x128xf32>
    %45 = vector.broadcast %43 : vector<2x4x8x1xf32> to vector<2x4x8x128xf32>
    %46 = vector.broadcast %44 : vector<2x4x1x128xf32> to vector<2x4x8x128xf32>
    %47 = arith.mulf %45, %46 : vector<2x4x8x128xf32>
    %cst_35 = arith.constant dense<0.000000e+00> : vector<2x8x128xf32>
    %48 = vector.multi_reduction <add>, %47, %cst_35 [1] : vector<2x4x8x128xf32> to vector<2x8x128xf32>
    %49 = vector.shape_cast %48 : vector<2x8x128xf32> to vector<16x128xf32>
    %50 = arith.truncf %49 : vector<16x128xf32> to vector<16x128xbf16>
    %cst_36 = arith.constant dense<0.000000e+00> : vector<16x128xf32>
    %51 = tpu.matmul %50, %0, %cst_36 {dimension_numbers = #tpu.dot_dimension_numbers<[1], [0], [0], [1], [0, 0, 1, 1], [], []>} : vector<16x128xbf16>, vector<128x128xbf16>, vector<16x128xf32> -> vector<16x128xf32>
    %52 = vector.shape_cast %51 : vector<16x128xf32> to vector<2x8x128xf32>
    %53 = vector.shape_cast %8 : vector<1x128xf32> to vector<1x1x128xf32>
    %54 = vector.broadcast %53 : vector<1x1x128xf32> to vector<2x8x128xf32>
    %55 = arith.addf %52, %54 : vector<2x8x128xf32>
    %c0_37 = arith.constant 0 : index
    %c0_38 = arith.constant 0 : index
    %56 = vector.load %arg8[%c0_37, %c0_38] : memref<16x128xf32, #tpu.memory_space<vmem>>, vector<8x128xf32>
    %57 = vector.shape_cast %56 : vector<8x128xf32> to vector<1x8x128xf32>
    %58 = vector.broadcast %57 : vector<1x8x128xf32> to vector<2x8x128xf32>
    %59 = arith.addf %55, %58 : vector<2x8x128xf32>
    %c0_39 = arith.constant 0 : index
    %c0_40 = arith.constant 0 : index
    %c0_41 = arith.constant 0 : index
    %60 = vector.load %arg11[%c0_39, %c0_40, %c0_41] : memref<2x16x128xf32, #tpu.memory_space<vmem>>, vector<2x8x128xf32>
    tpu.vector_store %arg11[%c0_39, %c0_40, %c0_41], %59 {strides = array<i32>} : memref<2x16x128xf32, #tpu.memory_space<vmem>>, vector<2x8x128xf32>,
    %c8 = arith.constant 8 : index
    %c0_42 = arith.constant 0 : index
    %61 = vector.load %arg8[%c8, %c0_42] : memref<16x128xf32, #tpu.memory_space<vmem>>, vector<8x128xf32>
    %62 = vector.broadcast %8 : vector<1x128xf32> to vector<8x128xf32>
    %63 = arith.addf %62, %61 : vector<8x128xf32>
    %64 = vector.shape_cast %63 : vector<8x128xf32> to vector<1x8x128xf32>
    %65 = vector.broadcast %64 : vector<1x8x128xf32> to vector<2x8x128xf32>
    %c0_43 = arith.constant 0 : index
    %c8_44 = arith.constant 8 : index
    %c0_45 = arith.constant 0 : index
    %66 = vector.load %arg11[%c0_43, %c8_44, %c0_45] : memref<2x16x128xf32, #tpu.memory_space<vmem>>, vector<2x8x128xf32>
    tpu.vector_store %arg11[%c0_43, %c8_44, %c0_45], %65 {strides = array<i32>} : memref<2x16x128xf32, #tpu.memory_space<vmem>>, vector<2x8x128xf32>,
    %c0_46 = arith.constant 0 : index
    %c0_47 = arith.constant 0 : index
    %c0_48 = arith.constant 0 : index
    %67 = vector.load %arg11[%c0_46, %c0_47, %c0_48] : memref<2x16x128xf32, #tpu.memory_space<vmem>>, vector<2x16x128xf32>
    %68 = vector.shape_cast %67 : vector<2x16x128xf32> to vector<32x128xf32>
    %69 = vector.extract_strided_slice %14 {offsets = [0, 0], sizes = [1, 128], strides = [1, 1]} : vector<6x128xf32> to vector<1x128xf32>
    %70 = vector.extract_strided_slice %14 {offsets = [1, 0], sizes = [1, 128], strides = [1, 1]} : vector<6x128xf32> to vector<1x128xf32>
    %cst_49 = arith.constant dense<0.000000e+00> : vector<32xf32>
    %71 = vector.multi_reduction <add>, %68, %cst_49 [1] : vector<32x128xf32> to vector<32xf32>
    %72 = vector.shape_cast %71 : vector<32xf32> to vector<32x1xf32>
    %cst_50 = arith.constant 1.280000e+02 : f32
    %73 = vector.broadcast %cst_50 : f32 to vector<32x1xf32>
    %74 = arith.divf %72, %73 : vector<32x1xf32>
    %75 = vector.broadcast %74 : vector<32x1xf32> to vector<32x128xf32>
    %76 = arith.subf %68, %75 : vector<32x128xf32>
    %77 = arith.mulf %76, %76 : vector<32x128xf32>
    %cst_51 = arith.constant dense<0.000000e+00> : vector<32xf32>
    %78 = vector.multi_reduction <add>, %77, %cst_51 [1] : vector<32x128xf32> to vector<32xf32>
    %79 = vector.shape_cast %78 : vector<32xf32> to vector<32x1xf32>
    %cst_52 = arith.constant 1.280000e+02 : f32
    %80 = vector.broadcast %cst_52 : f32 to vector<32x1xf32>
    %81 = arith.divf %79, %80 : vector<32x1xf32>
    %82 = vector.broadcast %74 : vector<32x1xf32> to vector<32x128xf32>
    %83 = arith.subf %68, %82 : vector<32x128xf32>
    %cst_53 = arith.constant 9.99999997E-7 : f32
    %84 = vector.broadcast %cst_53 : f32 to vector<32x1xf32>
    %85 = arith.addf %81, %84 : vector<32x1xf32>
    %86 = math.rsqrt %85 : vector<32x1xf32>
    %87 = vector.broadcast %86 : vector<32x1xf32> to vector<32x128xf32>
    %88 = arith.mulf %83, %87 : vector<32x128xf32>
    %89 = vector.broadcast %69 : vector<1x128xf32> to vector<32x128xf32>
    %90 = arith.mulf %88, %89 : vector<32x128xf32>
    %91 = vector.broadcast %70 : vector<1x128xf32> to vector<32x128xf32>
    %92 = arith.addf %90, %91 : vector<32x128xf32>
    %93 = arith.truncf %92 : vector<32x128xf32> to vector<32x128xbf16>
    %cst_54 = arith.constant dense<0.000000e+00> : vector<32x384xf32>
    %94 = tpu.matmul %93, %1, %cst_54 {dimension_numbers = #tpu.dot_dimension_numbers<[1], [0], [0], [1], [0, 0, 1, 1], [], []>} : vector<32x128xbf16>, vector<128x384xbf16>, vector<32x384xf32> -> vector<32x384xf32>
    %95 = vector.broadcast %9 : vector<1x384xf32> to vector<32x384xf32>
    %96 = arith.addf %94, %95 : vector<32x384xf32>
    %97 = arith.truncf %96 : vector<32x384xf32> to vector<32x384xbf16>
    %98 = vector.extract_strided_slice %97 {offsets = [0, 0], sizes = [32, 128], strides = [1, 1]} : vector<32x384xbf16> to vector<32x128xbf16>
    %99 = vector.shape_cast %98 : vector<32x128xbf16> to vector<2x16x128xbf16>
    %100 = vector.extract_strided_slice %97 {offsets = [0, 128], sizes = [32, 128], strides = [1, 1]} : vector<32x384xbf16> to vector<32x128xbf16>
    %101 = vector.shape_cast %100 : vector<32x128xbf16> to vector<2x16x128xbf16>
    %102 = vector.extract_strided_slice %97 {offsets = [0, 256], sizes = [32, 128], strides = [1, 1]} : vector<32x384xbf16> to vector<32x128xbf16>
    %c0_55 = arith.constant 0 : index
    %c0_56 = arith.constant 0 : index
    %103 = vector.load %arg9[%c0_55, %c0_56] : memref<16x16xf32, #tpu.memory_space<vmem>>, vector<16x16xf32>
    %cst_57 = arith.constant 0.000000e+00 : f32
    %104 = vector.broadcast %cst_57 : f32 to vector<2x16x128xf32>
    %105 = vector.extract_strided_slice %99 {offsets = [0, 0, 0], sizes = [2, 16, 16], strides = [1, 1, 1]} : vector<2x16x128xbf16> to vector<2x16x16xbf16>
    %106 = vector.extract_strided_slice %101 {offsets = [0, 0, 0], sizes = [2, 16, 16], strides = [1, 1, 1]} : vector<2x16x128xbf16> to vector<2x16x16xbf16>
    "tpu.trace_start"() <{level = 10 : i32, message = "bqd,bkd->bqk"}> : () -> ()
    %cst_58 = arith.constant dense<0.000000e+00> : vector<2x16x16xf32>
    %107 = tpu.matmul %105, %106, %cst_58 {dimension_numbers = #tpu.dot_dimension_numbers<[2], [2], [1], [1], [0, 0, 0, 1, 1, 1], [0], [0]>} : vector<2x16x16xbf16>, vector<2x16x16xbf16>, vector<2x16x16xf32> -> vector<2x16x16xf32>
    "tpu.trace_stop"() : () -> ()
    %cst_59 = arith.constant 2.500000e-01 : f32
    %108 = vector.broadcast %cst_59 : f32 to vector<2x16x16xf32>
    %109 = arith.mulf %107, %108 : vector<2x16x16xf32>
    %110 = vector.shape_cast %103 : vector<16x16xf32> to vector<1x16x16xf32>
    %111 = vector.broadcast %110 : vector<1x16x16xf32> to vector<2x16x16xf32>
    %112 = arith.addf %109, %111 : vector<2x16x16xf32>
    %cst_60 = arith.constant dense<0xFF800000> : vector<2x16xf32>
    %113 = vector.multi_reduction <maximumf>, %112, %cst_60 [2] : vector<2x16x16xf32> to vector<2x16xf32>
    %114 = vector.shape_cast %113 : vector<2x16xf32> to vector<2x16x1xf32>
    %115 = vector.broadcast %114 : vector<2x16x1xf32> to vector<2x16x16xf32>
    %116 = arith.subf %112, %115 : vector<2x16x16xf32>
    %117 = math.exp %116 : vector<2x16x16xf32>
    %cst_61 = arith.constant dense<0.000000e+00> : vector<2x16xf32>
    %118 = vector.multi_reduction <add>, %117, %cst_61 [2] : vector<2x16x16xf32> to vector<2x16xf32>
    %119 = vector.shape_cast %118 : vector<2x16xf32> to vector<2x16x1xf32>
    %120 = tpu.reciprocal %119 {approx = true} : vector<2x16x1xf32> -> vector<2x16x1xf32>
    %121 = vector.broadcast %120 : vector<2x16x1xf32> to vector<2x16x16xf32>
    %122 = arith.mulf %117, %121 : vector<2x16x16xf32>
    %123 = vector.extract_strided_slice %102 {offsets = [0, 0], sizes = [32, 16], strides = [1, 1]} : vector<32x128xbf16> to vector<32x16xbf16>
    %124 = vector.extract_strided_slice %2 {offsets = [0, 0], sizes = [16, 128], strides = [1, 1]} : vector<128x128xbf16> to vector<16x128xbf16>
    %cst_62 = arith.constant dense<0.000000e+00> : vector<32x128xf32>
    %125 = tpu.matmul %123, %124, %cst_62 {dimension_numbers = #tpu.dot_dimension_numbers<[1], [0], [0], [1], [0, 0, 1, 1], [], []>} : vector<32x16xbf16>, vector<16x128xbf16>, vector<32x128xf32> -> vector<32x128xf32>
    %126 = arith.truncf %125 : vector<32x128xf32> to vector<32x128xbf16>
    %127 = vector.shape_cast %126 : vector<32x128xbf16> to vector<2x16x128xbf16>
    %128 = arith.truncf %122 : vector<2x16x16xf32> to vector<2x16x16xbf16>
    "tpu.trace_start"() <{level = 10 : i32, message = "bqk,bkd->bqd"}> : () -> ()
    %cst_63 = arith.constant dense<0.000000e+00> : vector<2x16x128xf32>
    %129 = tpu.matmul %128, %127, %cst_63 {dimension_numbers = #tpu.dot_dimension_numbers<[2], [1], [1], [2], [0, 0, 0, 1, 1, 2], [0], [0]>} : vector<2x16x16xbf16>, vector<2x16x128xbf16>, vector<2x16x128xf32> -> vector<2x16x128xf32>
    "tpu.trace_stop"() : () -> ()
    %130 = arith.addf %104, %129 : vector<2x16x128xf32>
    %131 = vector.extract_strided_slice %99 {offsets = [0, 0, 16], sizes = [2, 16, 16], strides = [1, 1, 1]} : vector<2x16x128xbf16> to vector<2x16x16xbf16>
    %132 = vector.extract_strided_slice %101 {offsets = [0, 0, 16], sizes = [2, 16, 16], strides = [1, 1, 1]} : vector<2x16x128xbf16> to vector<2x16x16xbf16>
    "tpu.trace_start"() <{level = 10 : i32, message = "bqd,bkd->bqk"}> : () -> ()
    %cst_64 = arith.constant dense<0.000000e+00> : vector<2x16x16xf32>
    %133 = tpu.matmul %131, %132, %cst_64 {dimension_numbers = #tpu.dot_dimension_numbers<[2], [2], [1], [1], [0, 0, 0, 1, 1, 1], [0], [0]>} : vector<2x16x16xbf16>, vector<2x16x16xbf16>, vector<2x16x16xf32> -> vector<2x16x16xf32>
    "tpu.trace_stop"() : () -> ()
    %cst_65 = arith.constant 2.500000e-01 : f32
    %134 = vector.broadcast %cst_65 : f32 to vector<2x16x16xf32>
    %135 = arith.mulf %133, %134 : vector<2x16x16xf32>
    %136 = vector.shape_cast %103 : vector<16x16xf32> to vector<1x16x16xf32>
    %137 = vector.broadcast %136 : vector<1x16x16xf32> to vector<2x16x16xf32>
    %138 = arith.addf %135, %137 : vector<2x16x16xf32>
    %cst_66 = arith.constant dense<0xFF800000> : vector<2x16xf32>
    %139 = vector.multi_reduction <maximumf>, %138, %cst_66 [2] : vector<2x16x16xf32> to vector<2x16xf32>
    %140 = vector.shape_cast %139 : vector<2x16xf32> to vector<2x16x1xf32>
    %141 = vector.broadcast %140 : vector<2x16x1xf32> to vector<2x16x16xf32>
    %142 = arith.subf %138, %141 : vector<2x16x16xf32>
    %143 = math.exp %142 : vector<2x16x16xf32>
    %cst_67 = arith.constant dense<0.000000e+00> : vector<2x16xf32>
    %144 = vector.multi_reduction <add>, %143, %cst_67 [2] : vector<2x16x16xf32> to vector<2x16xf32>
    %145 = vector.shape_cast %144 : vector<2x16xf32> to vector<2x16x1xf32>
    %146 = tpu.reciprocal %145 {approx = true} : vector<2x16x1xf32> -> vector<2x16x1xf32>
    %147 = vector.broadcast %146 : vector<2x16x1xf32> to vector<2x16x16xf32>
    %148 = arith.mulf %143, %147 : vector<2x16x16xf32>
    %149 = vector.extract_strided_slice %102 {offsets = [0, 16], sizes = [32, 16], strides = [1, 1]} : vector<32x128xbf16> to vector<32x16xbf16>
    %150 = vector.extract_strided_slice %2 {offsets = [16, 0], sizes = [16, 128], strides = [1, 1]} : vector<128x128xbf16> to vector<16x128xbf16>
    %cst_68 = arith.constant dense<0.000000e+00> : vector<32x128xf32>
    %151 = tpu.matmul %149, %150, %cst_68 {dimension_numbers = #tpu.dot_dimension_numbers<[1], [0], [0], [1], [0, 0, 1, 1], [], []>} : vector<32x16xbf16>, vector<16x128xbf16>, vector<32x128xf32> -> vector<32x128xf32>
    %152 = arith.truncf %151 : vector<32x128xf32> to vector<32x128xbf16>
    %153 = vector.shape_cast %152 : vector<32x128xbf16> to vector<2x16x128xbf16>
    %154 = arith.truncf %148 : vector<2x16x16xf32> to vector<2x16x16xbf16>
    "tpu.trace_start"() <{level = 10 : i32, message = "bqk,bkd->bqd"}> : () -> ()
    %cst_69 = arith.constant dense<0.000000e+00> : vector<2x16x128xf32>
    %155 = tpu.matmul %154, %153, %cst_69 {dimension_numbers = #tpu.dot_dimension_numbers<[2], [1], [1], [2], [0, 0, 0, 1, 1, 2], [0], [0]>} : vector<2x16x16xbf16>, vector<2x16x128xbf16>, vector<2x16x128xf32> -> vector<2x16x128xf32>
    "tpu.trace_stop"() : () -> ()
    %156 = arith.addf %130, %155 : vector<2x16x128xf32>
    %157 = vector.extract_strided_slice %99 {offsets = [0, 0, 32], sizes = [2, 16, 16], strides = [1, 1, 1]} : vector<2x16x128xbf16> to vector<2x16x16xbf16>
    %158 = vector.extract_strided_slice %101 {offsets = [0, 0, 32], sizes = [2, 16, 16], strides = [1, 1, 1]} : vector<2x16x128xbf16> to vector<2x16x16xbf16>
    "tpu.trace_start"() <{level = 10 : i32, message = "bqd,bkd->bqk"}> : () -> ()
    %cst_70 = arith.constant dense<0.000000e+00> : vector<2x16x16xf32>
    %159 = tpu.matmul %157, %158, %cst_70 {dimension_numbers = #tpu.dot_dimension_numbers<[2], [2], [1], [1], [0, 0, 0, 1, 1, 1], [0], [0]>} : vector<2x16x16xbf16>, vector<2x16x16xbf16>, vector<2x16x16xf32> -> vector<2x16x16xf32>
    "tpu.trace_stop"() : () -> ()
    %cst_71 = arith.constant 2.500000e-01 : f32
    %160 = vector.broadcast %cst_71 : f32 to vector<2x16x16xf32>
    %161 = arith.mulf %159, %160 : vector<2x16x16xf32>
    %162 = vector.shape_cast %103 : vector<16x16xf32> to vector<1x16x16xf32>
    %163 = vector.broadcast %162 : vector<1x16x16xf32> to vector<2x16x16xf32>
    %164 = arith.addf %161, %163 : vector<2x16x16xf32>
    %cst_72 = arith.constant dense<0xFF800000> : vector<2x16xf32>
    %165 = vector.multi_reduction <maximumf>, %164, %cst_72 [2] : vector<2x16x16xf32> to vector<2x16xf32>
    %166 = vector.shape_cast %165 : vector<2x16xf32> to vector<2x16x1xf32>
    %167 = vector.broadcast %166 : vector<2x16x1xf32> to vector<2x16x16xf32>
    %168 = arith.subf %164, %167 : vector<2x16x16xf32>
    %169 = math.exp %168 : vector<2x16x16xf32>
    %cst_73 = arith.constant dense<0.000000e+00> : vector<2x16xf32>
    %170 = vector.multi_reduction <add>, %169, %cst_73 [2] : vector<2x16x16xf32> to vector<2x16xf32>
    %171 = vector.shape_cast %170 : vector<2x16xf32> to vector<2x16x1xf32>
    %172 = tpu.reciprocal %171 {approx = true} : vector<2x16x1xf32> -> vector<2x16x1xf32>
    %173 = vector.broadcast %172 : vector<2x16x1xf32> to vector<2x16x16xf32>
    %174 = arith.mulf %169, %173 : vector<2x16x16xf32>
    %175 = vector.extract_strided_slice %102 {offsets = [0, 32], sizes = [32, 16], strides = [1, 1]} : vector<32x128xbf16> to vector<32x16xbf16>
    %176 = vector.extract_strided_slice %2 {offsets = [32, 0], sizes = [16, 128], strides = [1, 1]} : vector<128x128xbf16> to vector<16x128xbf16>
    %cst_74 = arith.constant dense<0.000000e+00> : vector<32x128xf32>
    %177 = tpu.matmul %175, %176, %cst_74 {dimension_numbers = #tpu.dot_dimension_numbers<[1], [0], [0], [1], [0, 0, 1, 1], [], []>} : vector<32x16xbf16>, vector<16x128xbf16>, vector<32x128xf32> -> vector<32x128xf32>
    %178 = arith.truncf %177 : vector<32x128xf32> to vector<32x128xbf16>
    %179 = vector.shape_cast %178 : vector<32x128xbf16> to vector<2x16x128xbf16>
    %180 = arith.truncf %174 : vector<2x16x16xf32> to vector<2x16x16xbf16>
    "tpu.trace_start"() <{level = 10 : i32, message = "bqk,bkd->bqd"}> : () -> ()
    %cst_75 = arith.constant dense<0.000000e+00> : vector<2x16x128xf32>
    %181 = tpu.matmul %180, %179, %cst_75 {dimension_numbers = #tpu.dot_dimension_numbers<[2], [1], [1], [2], [0, 0, 0, 1, 1, 2], [0], [0]>} : vector<2x16x16xbf16>, vector<2x16x128xbf16>, vector<2x16x128xf32> -> vector<2x16x128xf32>
    "tpu.trace_stop"() : () -> ()
    %182 = arith.addf %156, %181 : vector<2x16x128xf32>
    %183 = vector.extract_strided_slice %99 {offsets = [0, 0, 48], sizes = [2, 16, 16], strides = [1, 1, 1]} : vector<2x16x128xbf16> to vector<2x16x16xbf16>
    %184 = vector.extract_strided_slice %101 {offsets = [0, 0, 48], sizes = [2, 16, 16], strides = [1, 1, 1]} : vector<2x16x128xbf16> to vector<2x16x16xbf16>
    "tpu.trace_start"() <{level = 10 : i32, message = "bqd,bkd->bqk"}> : () -> ()
    %cst_76 = arith.constant dense<0.000000e+00> : vector<2x16x16xf32>
    %185 = tpu.matmul %183, %184, %cst_76 {dimension_numbers = #tpu.dot_dimension_numbers<[2], [2], [1], [1], [0, 0, 0, 1, 1, 1], [0], [0]>} : vector<2x16x16xbf16>, vector<2x16x16xbf16>, vector<2x16x16xf32> -> vector<2x16x16xf32>
    "tpu.trace_stop"() : () -> ()
    %cst_77 = arith.constant 2.500000e-01 : f32
    %186 = vector.broadcast %cst_77 : f32 to vector<2x16x16xf32>
    %187 = arith.mulf %185, %186 : vector<2x16x16xf32>
    %188 = vector.shape_cast %103 : vector<16x16xf32> to vector<1x16x16xf32>
    %189 = vector.broadcast %188 : vector<1x16x16xf32> to vector<2x16x16xf32>
    %190 = arith.addf %187, %189 : vector<2x16x16xf32>
    %cst_78 = arith.constant dense<0xFF800000> : vector<2x16xf32>
    %191 = vector.multi_reduction <maximumf>, %190, %cst_78 [2] : vector<2x16x16xf32> to vector<2x16xf32>
    %192 = vector.shape_cast %191 : vector<2x16xf32> to vector<2x16x1xf32>
    %193 = vector.broadcast %192 : vector<2x16x1xf32> to vector<2x16x16xf32>
    %194 = arith.subf %190, %193 : vector<2x16x16xf32>
    %195 = math.exp %194 : vector<2x16x16xf32>
    %cst_79 = arith.constant dense<0.000000e+00> : vector<2x16xf32>
    %196 = vector.multi_reduction <add>, %195, %cst_79 [2] : vector<2x16x16xf32> to vector<2x16xf32>
    %197 = vector.shape_cast %196 : vector<2x16xf32> to vector<2x16x1xf32>
    %198 = tpu.reciprocal %197 {approx = true} : vector<2x16x1xf32> -> vector<2x16x1xf32>
    %199 = vector.broadcast %198 : vector<2x16x1xf32> to vector<2x16x16xf32>
    %200 = arith.mulf %195, %199 : vector<2x16x16xf32>
    %201 = vector.extract_strided_slice %102 {offsets = [0, 48], sizes = [32, 16], strides = [1, 1]} : vector<32x128xbf16> to vector<32x16xbf16>
    %202 = vector.extract_strided_slice %2 {offsets = [48, 0], sizes = [16, 128], strides = [1, 1]} : vector<128x128xbf16> to vector<16x128xbf16>
    %cst_80 = arith.constant dense<0.000000e+00> : vector<32x128xf32>
    %203 = tpu.matmul %201, %202, %cst_80 {dimension_numbers = #tpu.dot_dimension_numbers<[1], [0], [0], [1], [0, 0, 1, 1], [], []>} : vector<32x16xbf16>, vector<16x128xbf16>, vector<32x128xf32> -> vector<32x128xf32>
    %204 = arith.truncf %203 : vector<32x128xf32> to vector<32x128xbf16>
    %205 = vector.shape_cast %204 : vector<32x128xbf16> to vector<2x16x128xbf16>
    %206 = arith.truncf %200 : vector<2x16x16xf32> to vector<2x16x16xbf16>
    "tpu.trace_start"() <{level = 10 : i32, message = "bqk,bkd->bqd"}> : () -> ()
    %cst_81 = arith.constant dense<0.000000e+00> : vector<2x16x128xf32>
    %207 = tpu.matmul %206, %205, %cst_81 {dimension_numbers = #tpu.dot_dimension_numbers<[2], [1], [1], [2], [0, 0, 0, 1, 1, 2], [0], [0]>} : vector<2x16x16xbf16>, vector<2x16x128xbf16>, vector<2x16x128xf32> -> vector<2x16x128xf32>
    "tpu.trace_stop"() : () -> ()
    %208 = arith.addf %182, %207 : vector<2x16x128xf32>
    %209 = vector.extract_strided_slice %99 {offsets = [0, 0, 64], sizes = [2, 16, 16], strides = [1, 1, 1]} : vector<2x16x128xbf16> to vector<2x16x16xbf16>
    %210 = vector.extract_strided_slice %101 {offsets = [0, 0, 64], sizes = [2, 16, 16], strides = [1, 1, 1]} : vector<2x16x128xbf16> to vector<2x16x16xbf16>
    "tpu.trace_start"() <{level = 10 : i32, message = "bqd,bkd->bqk"}> : () -> ()
    %cst_82 = arith.constant dense<0.000000e+00> : vector<2x16x16xf32>
    %211 = tpu.matmul %209, %210, %cst_82 {dimension_numbers = #tpu.dot_dimension_numbers<[2], [2], [1], [1], [0, 0, 0, 1, 1, 1], [0], [0]>} : vector<2x16x16xbf16>, vector<2x16x16xbf16>, vector<2x16x16xf32> -> vector<2x16x16xf32>
    "tpu.trace_stop"() : () -> ()
    %cst_83 = arith.constant 2.500000e-01 : f32
    %212 = vector.broadcast %cst_83 : f32 to vector<2x16x16xf32>
    %213 = arith.mulf %211, %212 : vector<2x16x16xf32>
    %214 = vector.shape_cast %103 : vector<16x16xf32> to vector<1x16x16xf32>
    %215 = vector.broadcast %214 : vector<1x16x16xf32> to vector<2x16x16xf32>
    %216 = arith.addf %213, %215 : vector<2x16x16xf32>
    %cst_84 = arith.constant dense<0xFF800000> : vector<2x16xf32>
    %217 = vector.multi_reduction <maximumf>, %216, %cst_84 [2] : vector<2x16x16xf32> to vector<2x16xf32>
    %218 = vector.shape_cast %217 : vector<2x16xf32> to vector<2x16x1xf32>
    %219 = vector.broadcast %218 : vector<2x16x1xf32> to vector<2x16x16xf32>
    %220 = arith.subf %216, %219 : vector<2x16x16xf32>
    %221 = math.exp %220 : vector<2x16x16xf32>
    %cst_85 = arith.constant dense<0.000000e+00> : vector<2x16xf32>
    %222 = vector.multi_reduction <add>, %221, %cst_85 [2] : vector<2x16x16xf32> to vector<2x16xf32>
    %223 = vector.shape_cast %222 : vector<2x16xf32> to vector<2x16x1xf32>
    %224 = tpu.reciprocal %223 {approx = true} : vector<2x16x1xf32> -> vector<2x16x1xf32>
    %225 = vector.broadcast %224 : vector<2x16x1xf32> to vector<2x16x16xf32>
    %226 = arith.mulf %221, %225 : vector<2x16x16xf32>
    %227 = vector.extract_strided_slice %102 {offsets = [0, 64], sizes = [32, 16], strides = [1, 1]} : vector<32x128xbf16> to vector<32x16xbf16>
    %228 = vector.extract_strided_slice %2 {offsets = [64, 0], sizes = [16, 128], strides = [1, 1]} : vector<128x128xbf16> to vector<16x128xbf16>
    %cst_86 = arith.constant dense<0.000000e+00> : vector<32x128xf32>
    %229 = tpu.matmul %227, %228, %cst_86 {dimension_numbers = #tpu.dot_dimension_numbers<[1], [0], [0], [1], [0, 0, 1, 1], [], []>} : vector<32x16xbf16>, vector<16x128xbf16>, vector<32x128xf32> -> vector<32x128xf32>
    %230 = arith.truncf %229 : vector<32x128xf32> to vector<32x128xbf16>
    %231 = vector.shape_cast %230 : vector<32x128xbf16> to vector<2x16x128xbf16>
    %232 = arith.truncf %226 : vector<2x16x16xf32> to vector<2x16x16xbf16>
    "tpu.trace_start"() <{level = 10 : i32, message = "bqk,bkd->bqd"}> : () -> ()
    %cst_87 = arith.constant dense<0.000000e+00> : vector<2x16x128xf32>
    %233 = tpu.matmul %232, %231, %cst_87 {dimension_numbers = #tpu.dot_dimension_numbers<[2], [1], [1], [2], [0, 0, 0, 1, 1, 2], [0], [0]>} : vector<2x16x16xbf16>, vector<2x16x128xbf16>, vector<2x16x128xf32> -> vector<2x16x128xf32>
    "tpu.trace_stop"() : () -> ()
    %234 = arith.addf %208, %233 : vector<2x16x128xf32>
    %235 = vector.extract_strided_slice %99 {offsets = [0, 0, 80], sizes = [2, 16, 16], strides = [1, 1, 1]} : vector<2x16x128xbf16> to vector<2x16x16xbf16>
    %236 = vector.extract_strided_slice %101 {offsets = [0, 0, 80], sizes = [2, 16, 16], strides = [1, 1, 1]} : vector<2x16x128xbf16> to vector<2x16x16xbf16>
    "tpu.trace_start"() <{level = 10 : i32, message = "bqd,bkd->bqk"}> : () -> ()
    %cst_88 = arith.constant dense<0.000000e+00> : vector<2x16x16xf32>
    %237 = tpu.matmul %235, %236, %cst_88 {dimension_numbers = #tpu.dot_dimension_numbers<[2], [2], [1], [1], [0, 0, 0, 1, 1, 1], [0], [0]>} : vector<2x16x16xbf16>, vector<2x16x16xbf16>, vector<2x16x16xf32> -> vector<2x16x16xf32>
    "tpu.trace_stop"() : () -> ()
    %cst_89 = arith.constant 2.500000e-01 : f32
    %238 = vector.broadcast %cst_89 : f32 to vector<2x16x16xf32>
    %239 = arith.mulf %237, %238 : vector<2x16x16xf32>
    %240 = vector.shape_cast %103 : vector<16x16xf32> to vector<1x16x16xf32>
    %241 = vector.broadcast %240 : vector<1x16x16xf32> to vector<2x16x16xf32>
    %242 = arith.addf %239, %241 : vector<2x16x16xf32>
    %cst_90 = arith.constant dense<0xFF800000> : vector<2x16xf32>
    %243 = vector.multi_reduction <maximumf>, %242, %cst_90 [2] : vector<2x16x16xf32> to vector<2x16xf32>
    %244 = vector.shape_cast %243 : vector<2x16xf32> to vector<2x16x1xf32>
    %245 = vector.broadcast %244 : vector<2x16x1xf32> to vector<2x16x16xf32>
    %246 = arith.subf %242, %245 : vector<2x16x16xf32>
    %247 = math.exp %246 : vector<2x16x16xf32>
    %cst_91 = arith.constant dense<0.000000e+00> : vector<2x16xf32>
    %248 = vector.multi_reduction <add>, %247, %cst_91 [2] : vector<2x16x16xf32> to vector<2x16xf32>
    %249 = vector.shape_cast %248 : vector<2x16xf32> to vector<2x16x1xf32>
    %250 = tpu.reciprocal %249 {approx = true} : vector<2x16x1xf32> -> vector<2x16x1xf32>
    %251 = vector.broadcast %250 : vector<2x16x1xf32> to vector<2x16x16xf32>
    %252 = arith.mulf %247, %251 : vector<2x16x16xf32>
    %253 = vector.extract_strided_slice %102 {offsets = [0, 80], sizes = [32, 16], strides = [1, 1]} : vector<32x128xbf16> to vector<32x16xbf16>
    %254 = vector.extract_strided_slice %2 {offsets = [80, 0], sizes = [16, 128], strides = [1, 1]} : vector<128x128xbf16> to vector<16x128xbf16>
    %cst_92 = arith.constant dense<0.000000e+00> : vector<32x128xf32>
    %255 = tpu.matmul %253, %254, %cst_92 {dimension_numbers = #tpu.dot_dimension_numbers<[1], [0], [0], [1], [0, 0, 1, 1], [], []>} : vector<32x16xbf16>, vector<16x128xbf16>, vector<32x128xf32> -> vector<32x128xf32>
    %256 = arith.truncf %255 : vector<32x128xf32> to vector<32x128xbf16>
    %257 = vector.shape_cast %256 : vector<32x128xbf16> to vector<2x16x128xbf16>
    %258 = arith.truncf %252 : vector<2x16x16xf32> to vector<2x16x16xbf16>
    "tpu.trace_start"() <{level = 10 : i32, message = "bqk,bkd->bqd"}> : () -> ()
    %cst_93 = arith.constant dense<0.000000e+00> : vector<2x16x128xf32>
    %259 = tpu.matmul %258, %257, %cst_93 {dimension_numbers = #tpu.dot_dimension_numbers<[2], [1], [1], [2], [0, 0, 0, 1, 1, 2], [0], [0]>} : vector<2x16x16xbf16>, vector<2x16x128xbf16>, vector<2x16x128xf32> -> vector<2x16x128xf32>
    "tpu.trace_stop"() : () -> ()
    %260 = arith.addf %234, %259 : vector<2x16x128xf32>
    %261 = vector.extract_strided_slice %99 {offsets = [0, 0, 96], sizes = [2, 16, 16], strides = [1, 1, 1]} : vector<2x16x128xbf16> to vector<2x16x16xbf16>
    %262 = vector.extract_strided_slice %101 {offsets = [0, 0, 96], sizes = [2, 16, 16], strides = [1, 1, 1]} : vector<2x16x128xbf16> to vector<2x16x16xbf16>
    "tpu.trace_start"() <{level = 10 : i32, message = "bqd,bkd->bqk"}> : () -> ()
    %cst_94 = arith.constant dense<0.000000e+00> : vector<2x16x16xf32>
    %263 = tpu.matmul %261, %262, %cst_94 {dimension_numbers = #tpu.dot_dimension_numbers<[2], [2], [1], [1], [0, 0, 0, 1, 1, 1], [0], [0]>} : vector<2x16x16xbf16>, vector<2x16x16xbf16>, vector<2x16x16xf32> -> vector<2x16x16xf32>
    "tpu.trace_stop"() : () -> ()
    %cst_95 = arith.constant 2.500000e-01 : f32
    %264 = vector.broadcast %cst_95 : f32 to vector<2x16x16xf32>
    %265 = arith.mulf %263, %264 : vector<2x16x16xf32>
    %266 = vector.shape_cast %103 : vector<16x16xf32> to vector<1x16x16xf32>
    %267 = vector.broadcast %266 : vector<1x16x16xf32> to vector<2x16x16xf32>
    %268 = arith.addf %265, %267 : vector<2x16x16xf32>
    %cst_96 = arith.constant dense<0xFF800000> : vector<2x16xf32>
    %269 = vector.multi_reduction <maximumf>, %268, %cst_96 [2] : vector<2x16x16xf32> to vector<2x16xf32>
    %270 = vector.shape_cast %269 : vector<2x16xf32> to vector<2x16x1xf32>
    %271 = vector.broadcast %270 : vector<2x16x1xf32> to vector<2x16x16xf32>
    %272 = arith.subf %268, %271 : vector<2x16x16xf32>
    %273 = math.exp %272 : vector<2x16x16xf32>
    %cst_97 = arith.constant dense<0.000000e+00> : vector<2x16xf32>
    %274 = vector.multi_reduction <add>, %273, %cst_97 [2] : vector<2x16x16xf32> to vector<2x16xf32>
    %275 = vector.shape_cast %274 : vector<2x16xf32> to vector<2x16x1xf32>
    %276 = tpu.reciprocal %275 {approx = true} : vector<2x16x1xf32> -> vector<2x16x1xf32>
    %277 = vector.broadcast %276 : vector<2x16x1xf32> to vector<2x16x16xf32>
    %278 = arith.mulf %273, %277 : vector<2x16x16xf32>
    %279 = vector.extract_strided_slice %102 {offsets = [0, 96], sizes = [32, 16], strides = [1, 1]} : vector<32x128xbf16> to vector<32x16xbf16>
    %280 = vector.extract_strided_slice %2 {offsets = [96, 0], sizes = [16, 128], strides = [1, 1]} : vector<128x128xbf16> to vector<16x128xbf16>
    %cst_98 = arith.constant dense<0.000000e+00> : vector<32x128xf32>
    %281 = tpu.matmul %279, %280, %cst_98 {dimension_numbers = #tpu.dot_dimension_numbers<[1], [0], [0], [1], [0, 0, 1, 1], [], []>} : vector<32x16xbf16>, vector<16x128xbf16>, vector<32x128xf32> -> vector<32x128xf32>
    %282 = arith.truncf %281 : vector<32x128xf32> to vector<32x128xbf16>
    %283 = vector.shape_cast %282 : vector<32x128xbf16> to vector<2x16x128xbf16>
    %284 = arith.truncf %278 : vector<2x16x16xf32> to vector<2x16x16xbf16>
    "tpu.trace_start"() <{level = 10 : i32, message = "bqk,bkd->bqd"}> : () -> ()
    %cst_99 = arith.constant dense<0.000000e+00> : vector<2x16x128xf32>
    %285 = tpu.matmul %284, %283, %cst_99 {dimension_numbers = #tpu.dot_dimension_numbers<[2], [1], [1], [2], [0, 0, 0, 1, 1, 2], [0], [0]>} : vector<2x16x16xbf16>, vector<2x16x128xbf16>, vector<2x16x128xf32> -> vector<2x16x128xf32>
    "tpu.trace_stop"() : () -> ()
    %286 = arith.addf %260, %285 : vector<2x16x128xf32>
    %287 = vector.extract_strided_slice %99 {offsets = [0, 0, 112], sizes = [2, 16, 16], strides = [1, 1, 1]} : vector<2x16x128xbf16> to vector<2x16x16xbf16>
    %288 = vector.extract_strided_slice %101 {offsets = [0, 0, 112], sizes = [2, 16, 16], strides = [1, 1, 1]} : vector<2x16x128xbf16> to vector<2x16x16xbf16>
    "tpu.trace_start"() <{level = 10 : i32, message = "bqd,bkd->bqk"}> : () -> ()
    %cst_100 = arith.constant dense<0.000000e+00> : vector<2x16x16xf32>
    %289 = tpu.matmul %287, %288, %cst_100 {dimension_numbers = #tpu.dot_dimension_numbers<[2], [2], [1], [1], [0, 0, 0, 1, 1, 1], [0], [0]>} : vector<2x16x16xbf16>, vector<2x16x16xbf16>, vector<2x16x16xf32> -> vector<2x16x16xf32>
    "tpu.trace_stop"() : () -> ()
    %cst_101 = arith.constant 2.500000e-01 : f32
    %290 = vector.broadcast %cst_101 : f32 to vector<2x16x16xf32>
    %291 = arith.mulf %289, %290 : vector<2x16x16xf32>
    %292 = vector.shape_cast %103 : vector<16x16xf32> to vector<1x16x16xf32>
    %293 = vector.broadcast %292 : vector<1x16x16xf32> to vector<2x16x16xf32>
    %294 = arith.addf %291, %293 : vector<2x16x16xf32>
    %cst_102 = arith.constant dense<0xFF800000> : vector<2x16xf32>
    %295 = vector.multi_reduction <maximumf>, %294, %cst_102 [2] : vector<2x16x16xf32> to vector<2x16xf32>
    %296 = vector.shape_cast %295 : vector<2x16xf32> to vector<2x16x1xf32>
    %297 = vector.broadcast %296 : vector<2x16x1xf32> to vector<2x16x16xf32>
    %298 = arith.subf %294, %297 : vector<2x16x16xf32>
    %299 = math.exp %298 : vector<2x16x16xf32>
    %cst_103 = arith.constant dense<0.000000e+00> : vector<2x16xf32>
    %300 = vector.multi_reduction <add>, %299, %cst_103 [2] : vector<2x16x16xf32> to vector<2x16xf32>
    %301 = vector.shape_cast %300 : vector<2x16xf32> to vector<2x16x1xf32>
    %302 = tpu.reciprocal %301 {approx = true} : vector<2x16x1xf32> -> vector<2x16x1xf32>
    %303 = vector.broadcast %302 : vector<2x16x1xf32> to vector<2x16x16xf32>
    %304 = arith.mulf %299, %303 : vector<2x16x16xf32>
    %305 = vector.extract_strided_slice %102 {offsets = [0, 112], sizes = [32, 16], strides = [1, 1]} : vector<32x128xbf16> to vector<32x16xbf16>
    %306 = vector.extract_strided_slice %2 {offsets = [112, 0], sizes = [16, 128], strides = [1, 1]} : vector<128x128xbf16> to vector<16x128xbf16>
    %cst_104 = arith.constant dense<0.000000e+00> : vector<32x128xf32>
    %307 = tpu.matmul %305, %306, %cst_104 {dimension_numbers = #tpu.dot_dimension_numbers<[1], [0], [0], [1], [0, 0, 1, 1], [], []>} : vector<32x16xbf16>, vector<16x128xbf16>, vector<32x128xf32> -> vector<32x128xf32>
    %308 = arith.truncf %307 : vector<32x128xf32> to vector<32x128xbf16>
    %309 = vector.shape_cast %308 : vector<32x128xbf16> to vector<2x16x128xbf16>
    %310 = arith.truncf %304 : vector<2x16x16xf32> to vector<2x16x16xbf16>
    "tpu.trace_start"() <{level = 10 : i32, message = "bqk,bkd->bqd"}> : () -> ()
    %cst_105 = arith.constant dense<0.000000e+00> : vector<2x16x128xf32>
    %311 = tpu.matmul %310, %309, %cst_105 {dimension_numbers = #tpu.dot_dimension_numbers<[2], [1], [1], [2], [0, 0, 0, 1, 1, 2], [0], [0]>} : vector<2x16x16xbf16>, vector<2x16x128xbf16>, vector<2x16x128xf32> -> vector<2x16x128xf32>
    "tpu.trace_stop"() : () -> ()
    %312 = arith.addf %286, %311 : vector<2x16x128xf32>
    %313 = vector.shape_cast %312 : vector<2x16x128xf32> to vector<32x128xf32>
    %314 = arith.addf %68, %313 : vector<32x128xf32>
    %315 = vector.broadcast %10 : vector<1x128xf32> to vector<32x128xf32>
    %316 = arith.addf %314, %315 : vector<32x128xf32>
    %317 = vector.extract_strided_slice %14 {offsets = [2, 0], sizes = [1, 128], strides = [1, 1]} : vector<6x128xf32> to vector<1x128xf32>
    %318 = vector.extract_strided_slice %14 {offsets = [3, 0], sizes = [1, 128], strides = [1, 1]} : vector<6x128xf32> to vector<1x128xf32>
    %cst_106 = arith.constant dense<0.000000e+00> : vector<32xf32>
    %319 = vector.multi_reduction <add>, %316, %cst_106 [1] : vector<32x128xf32> to vector<32xf32>
    %320 = vector.shape_cast %319 : vector<32xf32> to vector<32x1xf32>
    %cst_107 = arith.constant 1.280000e+02 : f32
    %321 = vector.broadcast %cst_107 : f32 to vector<32x1xf32>
    %322 = arith.divf %320, %321 : vector<32x1xf32>
    %323 = vector.broadcast %322 : vector<32x1xf32> to vector<32x128xf32>
    %324 = arith.subf %316, %323 : vector<32x128xf32>
    %325 = arith.mulf %324, %324 : vector<32x128xf32>
    %cst_108 = arith.constant dense<0.000000e+00> : vector<32xf32>
    %326 = vector.multi_reduction <add>, %325, %cst_108 [1] : vector<32x128xf32> to vector<32xf32>
    %327 = vector.shape_cast %326 : vector<32xf32> to vector<32x1xf32>
    %cst_109 = arith.constant 1.280000e+02 : f32
    %328 = vector.broadcast %cst_109 : f32 to vector<32x1xf32>
    %329 = arith.divf %327, %328 : vector<32x1xf32>
    %330 = vector.broadcast %322 : vector<32x1xf32> to vector<32x128xf32>
    %331 = arith.subf %316, %330 : vector<32x128xf32>
    %cst_110 = arith.constant 9.99999997E-7 : f32
    %332 = vector.broadcast %cst_110 : f32 to vector<32x1xf32>
    %333 = arith.addf %329, %332 : vector<32x1xf32>
    %334 = math.rsqrt %333 : vector<32x1xf32>
    %335 = vector.broadcast %334 : vector<32x1xf32> to vector<32x128xf32>
    %336 = arith.mulf %331, %335 : vector<32x128xf32>
    %337 = vector.broadcast %317 : vector<1x128xf32> to vector<32x128xf32>
    %338 = arith.mulf %336, %337 : vector<32x128xf32>
    %339 = vector.broadcast %318 : vector<1x128xf32> to vector<32x128xf32>
    %340 = arith.addf %338, %339 : vector<32x128xf32>
    %341 = arith.truncf %340 : vector<32x128xf32> to vector<32x128xbf16>
    %cst_111 = arith.constant dense<0.000000e+00> : vector<32x128xf32>
    %342 = tpu.matmul %341, %3, %cst_111 {dimension_numbers = #tpu.dot_dimension_numbers<[1], [0], [0], [1], [0, 0, 1, 1], [], []>} : vector<32x128xbf16>, vector<128x128xbf16>, vector<32x128xf32> -> vector<32x128xf32>
    %343 = vector.broadcast %11 : vector<1x128xf32> to vector<32x128xf32>
    %344 = arith.addf %342, %343 : vector<32x128xf32>
    %cst_112 = arith.constant 0.000000e+00 : f32
    %345 = vector.broadcast %cst_112 : f32 to vector<32x128xf32>
    %346 = arith.maximumf %344, %345 : vector<32x128xf32>
    %347 = arith.truncf %346 : vector<32x128xf32> to vector<32x128xbf16>
    %cst_113 = arith.constant dense<0.000000e+00> : vector<32x128xf32>
    %348 = tpu.matmul %347, %4, %cst_113 {dimension_numbers = #tpu.dot_dimension_numbers<[1], [0], [0], [1], [0, 0, 1, 1], [], []>} : vector<32x128xbf16>, vector<128x128xbf16>, vector<32x128xf32> -> vector<32x128xf32>
    %349 = vector.broadcast %12 : vector<1x128xf32> to vector<32x128xf32>
    %350 = arith.addf %348, %349 : vector<32x128xf32>
    %351 = arith.addf %316, %350 : vector<32x128xf32>
    %352 = vector.extract_strided_slice %14 {offsets = [4, 0], sizes = [1, 128], strides = [1, 1]} : vector<6x128xf32> to vector<1x128xf32>
    %353 = vector.extract_strided_slice %14 {offsets = [5, 0], sizes = [1, 128], strides = [1, 1]} : vector<6x128xf32> to vector<1x128xf32>
    %cst_114 = arith.constant dense<0.000000e+00> : vector<32xf32>
    %354 = vector.multi_reduction <add>, %351, %cst_114 [1] : vector<32x128xf32> to vector<32xf32>
    %355 = vector.shape_cast %354 : vector<32xf32> to vector<32x1xf32>
    %cst_115 = arith.constant 1.280000e+02 : f32
    %356 = vector.broadcast %cst_115 : f32 to vector<32x1xf32>
    %357 = arith.divf %355, %356 : vector<32x1xf32>
    %358 = vector.broadcast %357 : vector<32x1xf32> to vector<32x128xf32>
    %359 = arith.subf %351, %358 : vector<32x128xf32>
    %360 = arith.mulf %359, %359 : vector<32x128xf32>
    %cst_116 = arith.constant dense<0.000000e+00> : vector<32xf32>
    %361 = vector.multi_reduction <add>, %360, %cst_116 [1] : vector<32x128xf32> to vector<32xf32>
    %362 = vector.shape_cast %361 : vector<32xf32> to vector<32x1xf32>
    %cst_117 = arith.constant 1.280000e+02 : f32
    %363 = vector.broadcast %cst_117 : f32 to vector<32x1xf32>
    %364 = arith.divf %362, %363 : vector<32x1xf32>
    %365 = vector.broadcast %357 : vector<32x1xf32> to vector<32x128xf32>
    %366 = arith.subf %351, %365 : vector<32x128xf32>
    %cst_118 = arith.constant 9.99999997E-7 : f32
    %367 = vector.broadcast %cst_118 : f32 to vector<32x1xf32>
    %368 = arith.addf %364, %367 : vector<32x1xf32>
    %369 = math.rsqrt %368 : vector<32x1xf32>
    %370 = vector.broadcast %369 : vector<32x1xf32> to vector<32x128xf32>
    %371 = arith.mulf %366, %370 : vector<32x128xf32>
    %372 = vector.broadcast %352 : vector<1x128xf32> to vector<32x128xf32>
    %373 = arith.mulf %371, %372 : vector<32x128xf32>
    %374 = vector.broadcast %353 : vector<1x128xf32> to vector<32x128xf32>
    %375 = arith.addf %373, %374 : vector<32x128xf32>
    %376 = arith.truncf %375 : vector<32x128xf32> to vector<32x128xbf16>
    %cst_119 = arith.constant dense<0.000000e+00> : vector<32x256xf32>
    %377 = tpu.matmul %376, %5, %cst_119 {dimension_numbers = #tpu.dot_dimension_numbers<[1], [0], [0], [1], [0, 0, 1, 1], [], []>} : vector<32x128xbf16>, vector<128x256xbf16>, vector<32x256xf32> -> vector<32x256xf32>
    %378 = vector.broadcast %13 : vector<1x256xf32> to vector<32x256xf32>
    %379 = arith.addf %377, %378 : vector<32x256xf32>
    %380 = vector.shape_cast %379 : vector<32x256xf32> to vector<2x16x256xf32>
    %c0_120 = arith.constant 0 : index
    %c0_121 = arith.constant 0 : index
    %c0_122 = arith.constant 0 : index
    %381 = vector.load %arg10[%c0_120, %c0_121, %c0_122] : memref<2x16x256xf32, #tpu.memory_space<vmem>>, vector<2x16x256xf32>
    tpu.vector_store %arg10[%c0_120, %c0_121, %c0_122], %380 {strides = array<i32>} : memref<2x16x256xf32, #tpu.memory_space<vmem>>, vector<2x16x256xf32>,
    return
  }
  func.func @transform_0(%arg0: i32) -> (i32, i32, i32) {
    %c0_i32 = arith.constant 0 : i32
    %c0_i32_0 = arith.constant 0 : i32
    %c0_i32_1 = arith.constant 0 : i32
    return %arg0, %c0_i32, %c0_i32_0 : i32, i32, i32
  }
  func.func @transform_1(%arg0: i32) -> (i32, i32, i32) {
    %c0_i32 = arith.constant 0 : i32
    %c0_i32_0 = arith.constant 0 : i32
    %c0_i32_1 = arith.constant 0 : i32
    return %arg0, %c0_i32, %c0_i32_0 : i32, i32, i32
  }
  func.func @transform_2(%arg0: i32) -> (i32, i32) {
    %c0_i32 = arith.constant 0 : i32
    %c0_i32_0 = arith.constant 0 : i32
    %c0_i32_1 = arith.constant 0 : i32
    return %c0_i32, %c0_i32_0 : i32, i32
  }
  func.func @transform_3(%arg0: i32) -> (i32, i32) {
    %c0_i32 = arith.constant 0 : i32
    %c0_i32_0 = arith.constant 0 : i32
    %c0_i32_1 = arith.constant 0 : i32
    return %c0_i32, %c0_i32_0 : i32, i32
  }
  func.func @transform_4(%arg0: i32) -> (i32, i32) {
    %c0_i32 = arith.constant 0 : i32
    %c0_i32_0 = arith.constant 0 : i32
    %c0_i32_1 = arith.constant 0 : i32
    return %c0_i32, %c0_i32_0 : i32, i32
  }
  func.func @transform_5(%arg0: i32) -> (i32, i32) {
    %c0_i32 = arith.constant 0 : i32
    %c0_i32_0 = arith.constant 0 : i32
    %c0_i32_1 = arith.constant 0 : i32
    return %c0_i32, %c0_i32_0 : i32, i32
  }
  func.func @transform_6(%arg0: i32) -> (i32, i32) {
    %c0_i32 = arith.constant 0 : i32
    %c0_i32_0 = arith.constant 0 : i32
    %c0_i32_1 = arith.constant 0 : i32
    return %c0_i32, %c0_i32_0 : i32, i32
  }
  func.func @transform_7(%arg0: i32) -> (i32, i32) {
    %c0_i32 = arith.constant 0 : i32
    %c0_i32_0 = arith.constant 0 : i32
    %c0_i32_1 = arith.constant 0 : i32
    return %c0_i32, %c0_i32_0 : i32, i32
  }
  func.func @transform_8(%arg0: i32) -> (i32, i32) {
    %c0_i32 = arith.constant 0 : i32
    %c0_i32_0 = arith.constant 0 : i32
    %c0_i32_1 = arith.constant 0 : i32
    return %c0_i32, %c0_i32_0 : i32, i32
  }
  func.func @transform_9(%arg0: i32) -> (i32, i32, i32) {
    %c0_i32 = arith.constant 0 : i32
    %c0_i32_0 = arith.constant 0 : i32
    %c0_i32_1 = arith.constant 0 : i32
    return %arg0, %c0_i32, %c0_i32_0 : i32, i32, i32
  }
}

</mosaic_0001>

<llo_original>
// kernel: tpu_custom_call.1
$region0: #{tpu_custom_call.1}
  #allocation0 [shape = 'u32[]', space=smem, size = 0x4, offset = 0x4, fixed_abs, tag = 'smem constant byte address 0x4 - core index']
  #allocation1 [shape = 'u32[144,128]{1,0:T(1,128)}', space=vmem, size = 0x12000, scoped, tag = 'internal scratch']
  #allocation2 [shape = 'f32[2,16,128]{2,1,0:T(8,128)}', space=vmem, size = 0x4000, scoped, tag = 'scratch operand']
  %s0 = inlined_call_operand.vmem [shape: bf16[4,4,192], index: 0, kind: input, shape index: {}]
  %s1 = inlined_call_operand.vmem [shape: bf16[4,1,128], index: 1, kind: input, shape index: {}]
  %s2 = inlined_call_operand.hbm [shape: bf16[192,128], index: 2, kind: input, shape index: {}]
  %s3 = inlined_call_operand.vmem [shape: bf16[128,8], index: 3, kind: input, shape index: {}]
  %s4 = inlined_call_operand.hbm [shape: bf16[128,1280], index: 4, kind: input, shape index: {}]
  %s5 = inlined_call_operand.vmem [shape: f32[1,1280], index: 5, kind: input, shape index: {}]
  %s6 = inlined_call_operand.vmem [shape: f32[6,128], index: 6, kind: input, shape index: {}]
  %s7 = inlined_call_operand.vmem [shape: f32[16,128], index: 7, kind: input, shape index: {}]
  %s8 = inlined_call_operand.vmem [shape: f32[16,16], index: 8, kind: input, shape index: {}]
  %s9 = inlined_call_operand.hbm [shape: f32[4,16,256], index: 9, kind: output, shape index: {}]
  %s10 = sld [smem:[#allocation0]]
  $region77: #{tpu_custom_call.1} parent=0
    _
  %s12 = ssub.s32 1, %s10
  %s13 = scalar_select 0, %s12, %s10
  $region1: #{tpu_custom_call.1} parent=0
    #allocation3 [shape = 'u8[49152]{0}', space=vmem, size = 0xc000, scoped, tag = 'input window, operand 2, single buffered']
    #allocation4 [shape = 's32[2]{0}', space=sflag, size = 0x8, scoped, tag = 'scoped memory for tpu_custom_call.1']
    #allocation5 [shape = 's32[2]{0}', space=sflag, size = 0x8, scoped, tag = 'scoped memory for tpu_custom_call.1']
    #allocation6 [shape = 'u8[327680]{0}', space=vmem, size = 0x50000, scoped, tag = 'input window, operand 4, single buffered']
    #allocation7 [shape = 's32[1]{0}', space=sflag, size = 0x4, scoped, tag = 'scoped memory for tpu_custom_call.1']
    #allocation8 [shape = 'u8[65536]{0}', space=vmem, size = 0x10000, scoped, tag = 'output window, operand 0']
    %14 = vsyncpa [#allocation4], 0
    %15 = vsyncpa [#allocation7], 0
    %16 = vsyncpa [#allocation5], 0
    %s17 = scalar_lea.sflag [#allocation5], 1
    %18 = vsyncpa %s17, 0
    loop: start=0, step=1, limit=4
    $region2: #{tpu_custom_call.1} parent=1 // loop_pre_header
      _
    $region3: #{tpu_custom_call.1} parent=1 // loop_header
      %s20 = sphi 0, %s24
      %p21 = scmp.ge.s32.totalorder %s20, 4
      %s30 = sphi 0, %s32
      %s33 = sphi 0, %s30
      %s34 = sphi 0, %s33
      %s50 = sphi 0, %s34
      %s56 = sphi 0, %s58
      %s59 = sphi 0, %s56
      %s60 = sphi 0, %s59
      %s76 = sphi 0, %s60
      %s80 = sphi 0, %s80
      %s82 = sphi 0, %s80
      %s83 = sphi 0, %s82
      %s97 = sphi 0, %s83
      %s101 = sphi 0, %s101
      %s103 = sphi 0, %s101
      %s104 = sphi 0, %s103
      %s118 = sphi 0, %s104
      %s122 = sphi 0, %s122
      %s124 = sphi 0, %s122
      %s125 = sphi 0, %s124
      %s139 = sphi 0, %s125
      %s143 = sphi 0, %s143
      %s145 = sphi 0, %s143
      %s146 = sphi 0, %s145
      %s160 = sphi 0, %s146
      %s164 = sphi 0, %s164
      %s166 = sphi 0, %s164
      %s167 = sphi 0, %s166
      %s181 = sphi 0, %s167
      %s185 = sphi 0, %s185
      %s187 = sphi 0, %s185
      %s188 = sphi 0, %s187
      %s202 = sphi 0, %s188
      %s206 = sphi 0, %s206
      %s208 = sphi 0, %s206
      %s209 = sphi 0, %s208
      %s223 = sphi 0, %s209
      %s229 = sphi 0, %s231
      %s232 = sphi 0, %s229
      %s233 = sphi 0, %s232
      %s249 = sphi 0, %s233
    $region4: #{tpu_custom_call.1} parent=1 // loop_header_branch
      %23 = sbr.rel (%p21) target = $region8
    $region5: #{tpu_custom_call.1} parent=1 // loop_body
      %s25 = ssub.s32 %s20, 1
      %s26 = ssub.s32 %s20, 2
      %s27 = sadd.s32 %s20, 1
      %s28 = ssub.s32 %s20, %s27
      %p29 = scmp.eq.s32.totalorder %s28, 0
      %s31 = sadd.s32 %s30, 1
      %s32 = scalar_select %p29, %s30, %s31
      %p35 = pneg %p29
      %p36 = scmp.eq.s32.totalorder %s20, 1
      %p37 = por %p35, %p36
      %p38 = scmp.ne.s32.totalorder %s30, %s33
      %p39 = scmp.eq.s32.totalorder %s20, 0
      %p40 = por %p38, %p39
      %p41 = scmp.ne.s32.totalorder %s30, %s33
      %p42 = scmp.eq.s32.totalorder %s25, 1
      %p43 = por %p41, %p42
      %p44 = scmp.ne.s32.totalorder %s33, %s34
      %p45 = scmp.eq.s32.totalorder %s25, 0
      %p46 = por %p44, %p45
      %p47 = scmp.ne.s32.totalorder %s33, %s34
      %p48 = scmp.eq.s32.totalorder %s26, 1
      %p49 = por %p47, %p48
      %p51 = scmp.ne.s32.totalorder %s34, %s50
      %p52 = scmp.eq.s32.totalorder %s26, 0
      %p53 = por %p51, %p52
      %s54 = ssub.s32 %s20, %s27
      %p55 = scmp.eq.s32.totalorder %s54, 0
      %s57 = sadd.s32 %s56, 1
      %s58 = scalar_select %p55, %s56, %s57
      %p61 = pneg %p55
      %p62 = scmp.eq.s32.totalorder %s20, 1
      %p63 = por %p61, %p62
      %p64 = scmp.ne.s32.totalorder %s56, %s59
      %p65 = scmp.eq.s32.totalorder %s20, 0
      %p66 = por %p64, %p65
      %p67 = scmp.ne.s32.totalorder %s56, %s59
      %p68 = scmp.eq.s32.totalorder %s25, 1
      %p69 = por %p67, %p68
      %p70 = scmp.ne.s32.totalorder %s59, %s60
      %p71 = scmp.eq.s32.totalorder %s25, 0
      %p72 = por %p70, %p71
      %p73 = scmp.ne.s32.totalorder %s59, %s60
      %p74 = scmp.eq.s32.totalorder %s26, 1
      %p75 = por %p73, %p74
      %p77 = scmp.ne.s32.totalorder %s60, %s76
      %p78 = scmp.eq.s32.totalorder %s26, 0
      %p79 = por %p77, %p78
      %s81 = sadd.s32 %s80, 1
      %p84 = scmp.eq.s32.totalorder %s20, 1
      %p85 = scmp.ne.s32.totalorder %s80, %s82
      %p86 = scmp.eq.s32.totalorder %s20, 0
      %p87 = por %p85, %p86
      %p88 = scmp.ne.s32.totalorder %s80, %s82
      %p89 = scmp.eq.s32.totalorder %s25, 1
      %p90 = por %p88, %p89
      %p91 = scmp.ne.s32.totalorder %s82, %s83
      %p92 = scmp.eq.s32.totalorder %s25, 0
      %p93 = por %p91, %p92
      %p94 = scmp.ne.s32.totalorder %s82, %s83
      %p95 = scmp.eq.s32.totalorder %s26, 1
      %p96 = por %p94, %p95
      %p98 = scmp.ne.s32.totalorder %s83, %s97
      %p99 = scmp.eq.s32.totalorder %s26, 0
      %p100 = por %p98, %p99
      %s102 = sadd.s32 %s101, 1
      %p105 = scmp.eq.s32.totalorder %s20, 1
      %p106 = scmp.ne.s32.totalorder %s101, %s103
      %p107 = scmp.eq.s32.totalorder %s20, 0
      %p108 = por %p106, %p107
      %p109 = scmp.ne.s32.totalorder %s101, %s103
      %p110 = scmp.eq.s32.totalorder %s25, 1
      %p111 = por %p109, %p110
      %p112 = scmp.ne.s32.totalorder %s103, %s104
      %p113 = scmp.eq.s32.totalorder %s25, 0
      %p114 = por %p112, %p113
      %p115 = scmp.ne.s32.totalorder %s103, %s104
      %p116 = scmp.eq.s32.totalorder %s26, 1
      %p117 = por %p115, %p116
      %p119 = scmp.ne.s32.totalorder %s104, %s118
      %p120 = scmp.eq.s32.totalorder %s26, 0
      %p121 = por %p119, %p120
      %s123 = sadd.s32 %s122, 1
      %p126 = scmp.eq.s32.totalorder %s20, 1
      %p127 = scmp.ne.s32.totalorder %s122, %s124
      %p128 = scmp.eq.s32.totalorder %s20, 0
      %p129 = por %p127, %p128
      %p130 = scmp.ne.s32.totalorder %s122, %s124
      %p131 = scmp.eq.s32.totalorder %s25, 1
      %p132 = por %p130, %p131
      %p133 = scmp.ne.s32.totalorder %s124, %s125
      %p134 = scmp.eq.s32.totalorder %s25, 0
      %p135 = por %p133, %p134
      %p136 = scmp.ne.s32.totalorder %s124, %s125
      %p137 = scmp.eq.s32.totalorder %s26, 1
      %p138 = por %p136, %p137
      %p140 = scmp.ne.s32.totalorder %s125, %s139
      %p141 = scmp.eq.s32.totalorder %s26, 0
      %p142 = por %p140, %p141
      %s144 = sadd.s32 %s143, 1
      %p147 = scmp.eq.s32.totalorder %s20, 1
      %p148 = scmp.ne.s32.totalorder %s143, %s145
      %p149 = scmp.eq.s32.totalorder %s20, 0
      %p150 = por %p148, %p149
      %p151 = scmp.ne.s32.totalorder %s143, %s145
      %p152 = scmp.eq.s32.totalorder %s25, 1
      %p153 = por %p151, %p152
      %p154 = scmp.ne.s32.totalorder %s145, %s146
      %p155 = scmp.eq.s32.totalorder %s25, 0
      %p156 = por %p154, %p155
      %p157 = scmp.ne.s32.totalorder %s145, %s146
      %p158 = scmp.eq.s32.totalorder %s26, 1
      %p159 = por %p157, %p158
      %p161 = scmp.ne.s32.totalorder %s146, %s160
      %p162 = scmp.eq.s32.totalorder %s26, 0
      %p163 = por %p161, %p162
      %s165 = sadd.s32 %s164, 1
      %p168 = scmp.eq.s32.totalorder %s20, 1
      %p169 = scmp.ne.s32.totalorder %s164, %s166
      %p170 = scmp.eq.s32.totalorder %s20, 0
      %p171 = por %p169, %p170
      %p172 = scmp.ne.s32.totalorder %s164, %s166
      %p173 = scmp.eq.s32.totalorder %s25, 1
      %p174 = por %p172, %p173
      %p175 = scmp.ne.s32.totalorder %s166, %s167
      %p176 = scmp.eq.s32.totalorder %s25, 0
      %p177 = por %p175, %p176
      %p178 = scmp.ne.s32.totalorder %s166, %s167
      %p179 = scmp.eq.s32.totalorder %s26, 1
      %p180 = por %p178, %p179
      %p182 = scmp.ne.s32.totalorder %s167, %s181
      %p183 = scmp.eq.s32.totalorder %s26, 0
      %p184 = por %p182, %p183
      %s186 = sadd.s32 %s185, 1
      %p189 = scmp.eq.s32.totalorder %s20, 1
      %p190 = scmp.ne.s32.totalorder %s185, %s187
      %p191 = scmp.eq.s32.totalorder %s20, 0
      %p192 = por %p190, %p191
      %p193 = scmp.ne.s32.totalorder %s185, %s187
      %p194 = scmp.eq.s32.totalorder %s25, 1
      %p195 = por %p193, %p194
      %p196 = scmp.ne.s32.totalorder %s187, %s188
      %p197 = scmp.eq.s32.totalorder %s25, 0
      %p198 = por %p196, %p197
      %p199 = scmp.ne.s32.totalorder %s187, %s188
      %p200 = scmp.eq.s32.totalorder %s26, 1
      %p201 = por %p199, %p200
      %p203 = scmp.ne.s32.totalorder %s188, %s202
      %p204 = scmp.eq.s32.totalorder %s26, 0
      %p205 = por %p203, %p204
      %s207 = sadd.s32 %s206, 1
      %p210 = scmp.eq.s32.totalorder %s20, 1
      %p211 = scmp.ne.s32.totalorder %s206, %s208
      %p212 = scmp.eq.s32.totalorder %s20, 0
      %p213 = por %p211, %p212
      %p214 = scmp.ne.s32.totalorder %s206, %s208
      %p215 = scmp.eq.s32.totalorder %s25, 1
      %p216 = por %p214, %p215
      %p217 = scmp.ne.s32.totalorder %s208, %s209
      %p218 = scmp.eq.s32.totalorder %s25, 0
      %p219 = por %p217, %p218
      %p220 = scmp.ne.s32.totalorder %s208, %s209
      %p221 = scmp.eq.s32.totalorder %s26, 1
      %p222 = por %p220, %p221
      %p224 = scmp.ne.s32.totalorder %s209, %s223
      %p225 = scmp.eq.s32.totalorder %s26, 0
      %p226 = por %p224, %p225
      %s227 = ssub.s32 %s20, %s27
      %p228 = scmp.eq.s32.totalorder %s227, 0
      %s230 = sadd.s32 %s229, 1
      %s231 = scalar_select %p228, %s229, %s230
      %p234 = pneg %p228
      %p235 = scmp.eq.s32.totalorder %s20, 1
      %p236 = por %p234, %p235
      %p237 = scmp.ne.s32.totalorder %s229, %s232
      %p238 = scmp.eq.s32.totalorder %s20, 0
      %p239 = por %p237, %p238
      %p240 = scmp.ne.s32.totalorder %s229, %s232
      %p241 = scmp.eq.s32.totalorder %s25, 1
      %p242 = por %p240, %p241
      %p243 = scmp.ne.s32.totalorder %s232, %s233
      %p244 = scmp.eq.s32.totalorder %s25, 0
      %p245 = por %p243, %p244
      %p246 = scmp.ne.s32.totalorder %s232, %s233
      %p247 = scmp.eq.s32.totalorder %s26, 1
      %p248 = por %p246, %p247
      %p250 = scmp.ne.s32.totalorder %s233, %s249
      %p251 = scmp.eq.s32.totalorder %s26, 0
      %p252 = por %p250, %p251
      %p253 = scmp.le.s32.totalorder 1, %s20
      %p254 = scmp.lt.s32.totalorder %s20, 3
      %p255 = pnand %p253, %p254
      %p256 = pneg %p255
      // Predicated region
      $region9: #{tpu_custom_call.1} parent=5 // pred_check
        _
      $region10: #{tpu_custom_call.1} parent=5 // pred_check_branch
        %258 = sbr.rel (%p255) target = $region12
      $region11: #{tpu_custom_call.1} parent=5 // pred_region
        %s259 = ssub.s32 %s20, 1
        // Predicated region
        $region13: #{tpu_custom_call.1} parent=11 // pred_check
          %p260 = pneg %p93
        $region14: #{tpu_custom_call.1} parent=11 // pred_check_branch
          %262 = sbr.rel (%p260) target = $region16
        $region15: #{tpu_custom_call.1} parent=11 // pred_region
          %s264 = ssub.s32 1536, 1536
          %265 = vsyncadd [#allocation4], %s264
          %s266 = sshll.u32 [#allocation3], 4
          %s267 = int_to_ptr.vmem [resolvable:$true] %s266
          %272 = dma.hbm_to_vmem [thread:$0]  %s2, 1536, %s267, [#allocation4], 64, 64, 4
        $region16: #{tpu_custom_call.1} parent=11 // pred_fallthru
          _
        // Predicated region
        $region17: #{tpu_custom_call.1} parent=11 // pred_check
          %p273 = pneg %p114
        $region18: #{tpu_custom_call.1} parent=11 // pred_check_branch
          %275 = sbr.rel (%p273) target = $region20
        $region19: #{tpu_custom_call.1} parent=11 // pred_region
          _
        $region20: #{tpu_custom_call.1} parent=11 // pred_fallthru
          _
        // Predicated region
        $region21: #{tpu_custom_call.1} parent=11 // pred_check
          %p276 = pneg %p135
        $region22: #{tpu_custom_call.1} parent=11 // pred_check_branch
          %278 = sbr.rel (%p276) target = $region24
        $region23: #{tpu_custom_call.1} parent=11 // pred_region
          %s280 = ssub.s32 10240, 10240
          %281 = vsyncadd [#allocation7], %s280
          %s282 = sshll.u32 [#allocation6], 4
          %s283 = int_to_ptr.vmem [resolvable:$true] %s282
          %288 = dma.hbm_to_vmem [thread:$0]  %s4, 10240, %s283, [#allocation7], 640, 640, 40
        $region24: #{tpu_custom_call.1} parent=11 // pred_fallthru
          _
        // Predicated region
        $region25: #{tpu_custom_call.1} parent=11 // pred_check
          %p289 = pneg %p156
        $region26: #{tpu_custom_call.1} parent=11 // pred_check_branch
          %291 = sbr.rel (%p289) target = $region28
        $region27: #{tpu_custom_call.1} parent=11 // pred_region
          _
        $region28: #{tpu_custom_call.1} parent=11 // pred_fallthru
          _
        // Predicated region
        $region29: #{tpu_custom_call.1} parent=11 // pred_check
          %p292 = pneg %p177
        $region30: #{tpu_custom_call.1} parent=11 // pred_check_branch
          %294 = sbr.rel (%p292) target = $region32
        $region31: #{tpu_custom_call.1} parent=11 // pred_region
          _
        $region32: #{tpu_custom_call.1} parent=11 // pred_fallthru
          _
        // Predicated region
        $region33: #{tpu_custom_call.1} parent=11 // pred_check
          %p295 = pneg %p198
        $region34: #{tpu_custom_call.1} parent=11 // pred_check_branch
          %297 = sbr.rel (%p295) target = $region36
        $region35: #{tpu_custom_call.1} parent=11 // pred_region
          _
        $region36: #{tpu_custom_call.1} parent=11 // pred_fallthru
          _
        // Predicated region
        $region37: #{tpu_custom_call.1} parent=11 // pred_check
          %p298 = pneg %p219
        $region38: #{tpu_custom_call.1} parent=11 // pred_check_branch
          %300 = sbr.rel (%p298) target = $region40
        $region39: #{tpu_custom_call.1} parent=11 // pred_region
          _
        $region40: #{tpu_custom_call.1} parent=11 // pred_fallthru
          _
      $region12: #{tpu_custom_call.1} parent=5 // pred_fallthru
        _
      %p301 = scmp.lt.s32.totalorder %s20, 2
      // Predicated region
      $region41: #{tpu_custom_call.1} parent=5 // pred_check
        %p302 = pneg %p301
      $region42: #{tpu_custom_call.1} parent=5 // pred_check_branch
        %304 = sbr.rel (%p302) target = $region44
      $region43: #{tpu_custom_call.1} parent=5 // pred_region
        // Predicated region
        $region45: #{tpu_custom_call.1} parent=43 // pred_check
          %p305 = pneg %p40
        $region46: #{tpu_custom_call.1} parent=43 // pred_check_branch
          %307 = sbr.rel (%p305) target = $region48
        $region47: #{tpu_custom_call.1} parent=43 // pred_region
          %s308 = smul.u32 2, %s20
          %p309 = scmp.lt.s32.totalorder %s308, 3
          %s310 = scalar_select %p309, %s308, 3
          %s311 = smul.addr %s310, 2
          %s312 = smul.addr %s311, 2
          %s313 = scalar_lea.vmem %s0, %s312
          %s314 = smul.u32 2, %s20
        $region48: #{tpu_custom_call.1} parent=43 // pred_fallthru
          _
        // Predicated region
        $region49: #{tpu_custom_call.1} parent=43 // pred_check
          %p315 = pneg %p66
        $region50: #{tpu_custom_call.1} parent=43 // pred_check_branch
          %317 = sbr.rel (%p315) target = $region52
        $region51: #{tpu_custom_call.1} parent=43 // pred_region
          %s318 = smul.u32 2, %s20
          %p319 = scmp.lt.s32.totalorder %s318, 3
          %s320 = scalar_select %p319, %s318, 3
          %s321 = scalar_lea.vmem %s1, %s320
          %s322 = smul.u32 2, %s20
        $region52: #{tpu_custom_call.1} parent=43 // pred_fallthru
          _
      $region44: #{tpu_custom_call.1} parent=5 // pred_fallthru
        _
      %p323 = scmp.le.s32.totalorder 1, %s20
      %p324 = scmp.lt.s32.totalorder %s20, 3
      %p325 = pnand %p323, %p324
      %p326 = pneg %p325
      // Predicated region
      $region53: #{tpu_custom_call.1} parent=5 // pred_check
        _
      $region54: #{tpu_custom_call.1} parent=5 // pred_check_branch
        %328 = sbr.rel (%p325) target = $region56
      $region55: #{tpu_custom_call.1} parent=5 // pred_region
        %s329 = ssub.s32 %s20, 1
        // Predicated region
        $region57: #{tpu_custom_call.1} parent=55 // pred_check
          %p330 = pneg %p93
        $region58: #{tpu_custom_call.1} parent=55 // pred_check_branch
          %332 = sbr.rel (%p330) target = $region60
        $region59: #{tpu_custom_call.1} parent=55 // pred_region
          %333 = dma.done [#allocation4], 1536
        $region60: #{tpu_custom_call.1} parent=55 // pred_fallthru
          _
        // Predicated region
        $region61: #{tpu_custom_call.1} parent=55 // pred_check
          %p334 = pneg %p135
        $region62: #{tpu_custom_call.1} parent=55 // pred_check_branch
          %336 = sbr.rel (%p334) target = $region64
        $region63: #{tpu_custom_call.1} parent=55 // pred_region
          %337 = dma.done [#allocation7], 10240
        $region64: #{tpu_custom_call.1} parent=55 // pred_fallthru
          _
        %s338 = smul.u32 2, %s25
        %p339 = scmp.lt.s32.totalorder %s338, 3
        %s340 = scalar_select %p339, %s338, 3
        %s341 = smul.addr %s340, 2
        %s342 = smul.addr %s341, 2
        %s343 = scalar_lea.vmem %s0, %s342
        %p344 = pneg %p46
        %p345 = pneg %p43
        %s346 = smul.u32 2, %s25
        %p347 = scmp.lt.s32.totalorder %s346, 3
        %s348 = scalar_select %p347, %s346, 3
        %s349 = scalar_lea.vmem %s1, %s348
        %p350 = pneg %p72
        %p351 = pneg %p69
        %p352 = pneg %p93
        %p353 = pneg %p90
        %p354 = pneg %p114
        %p355 = pneg %p111
        %p356 = pneg %p135
        %p357 = pneg %p132
        %p358 = pneg %p156
        %p359 = pneg %p153
        %p360 = pneg %p177
        %p361 = pneg %p174
        %p362 = pneg %p198
        %p363 = pneg %p195
        %p364 = pneg %p219
        %p365 = pneg %p216
        %p366 = pneg %p245
        %p367 = pneg %p242
        %s368 = sand.u32 %s232, 1
        %s369 = scalar_lea.sflag [#allocation5], %s368
        %s370 = sand.u32 %s232, 1
        %s371 = smul.addr %s370, 64
        %s372 = scalar_lea.vmem [#allocation8], %s371
        %s373 = smul.u32 2, %s25
        %p374 = scmp.lt.s32.totalorder %s373, 3
        %s375 = scalar_select %p374, %s373, 3
        %s376 = smul.addr %s375, 2
        %s377 = smul.addr %s376, 2
        %s378 = scalar_lea.vmem %s0, %s377
        %s379 = smul.u32 2, %s25
        %s380 = smul.u32 2, %s25
        %p381 = scmp.lt.s32.totalorder %s380, 3
        %s382 = scalar_select %p381, %s380, 3
        %s383 = scalar_lea.vmem %s1, %s382
        %s384 = smul.u32 2, %s25
        %s385 = smul.u32 2, %s25
        %v387 = vld [vmem:[#allocation6] sm:$0xf]
        %v388 = vld [vmem:[#allocation6 + $0x28] sm:$0xf]
        %v389 = vld [vmem:[#allocation6 + $0x50] sm:$0xf]
        %v390 = vld [vmem:[#allocation6 + $0x78] sm:$0xf]
        %v391 = vld [vmem:[#allocation6 + $0xa0] sm:$0xf]
        %v392 = vld [vmem:[#allocation6 + $0xc8] sm:$0xf]
        %v393 = vld [vmem:[#allocation6 + $0xf0] sm:$0xf]
        %v394 = vld [vmem:[#allocation6 + $0x118] sm:$0xf]
        %v395 = vld [vmem:[#allocation6 + $0x140] sm:$0xf]
        %v396 = vld [vmem:[#allocation6 + $0x168] sm:$0xf]
        %v397 = vld [vmem:[#allocation6 + $0x190] sm:$0xf]
        %v398 = vld [vmem:[#allocation6 + $0x1b8] sm:$0xf]
        %v399 = vld [vmem:[#allocation6 + $0x1e0] sm:$0xf]
        %v400 = vld [vmem:[#allocation6 + $0x208] sm:$0xf]
        %v401 = vld [vmem:[#allocation6 + $0x230] sm:$0xf]
        %v402 = vld [vmem:[#allocation6 + $0x258] sm:$0xf]
        %v403 = vld [vmem:[#allocation6 + $0x4] sm:$0xff]
        %v404 = vld [vmem:[#allocation6 + $0xc] sm:$0xf]
        %v405 = vld [vmem:[#allocation6 + $0x2c] sm:$0xff]
        %v406 = vld [vmem:[#allocation6 + $0x34] sm:$0xf]
        %v407 = vld [vmem:[#allocation6 + $0x54] sm:$0xff]
        %v408 = vld [vmem:[#allocation6 + $0x5c] sm:$0xf]
        %v409 = vld [vmem:[#allocation6 + $0x7c] sm:$0xff]
        %v410 = vld [vmem:[#allocation6 + $0x84] sm:$0xf]
        %v411 = vld [vmem:[#allocation6 + $0xa4] sm:$0xff]
        %v412 = vld [vmem:[#allocation6 + $0xac] sm:$0xf]
        %v413 = vld [vmem:[#allocation6 + $0xcc] sm:$0xff]
        %v414 = vld [vmem:[#allocation6 + $0xd4] sm:$0xf]
        %v415 = vld [vmem:[#allocation6 + $0xf4] sm:$0xff]
        %v416 = vld [vmem:[#allocation6 + $0xfc] sm:$0xf]
        %v417 = vld [vmem:[#allocation6 + $0x11c] sm:$0xff]
        %v418 = vld [vmem:[#allocation6 + $0x124] sm:$0xf]
        %v419 = vld [vmem:[#allocation6 + $0x144] sm:$0xff]
        %v420 = vld [vmem:[#allocation6 + $0x14c] sm:$0xf]
        %v421 = vld [vmem:[#allocation6 + $0x16c] sm:$0xff]
        %v422 = vld [vmem:[#allocation6 + $0x174] sm:$0xf]
        %v423 = vld [vmem:[#allocation6 + $0x194] sm:$0xff]
        %v424 = vld [vmem:[#allocation6 + $0x19c] sm:$0xf]
        %v425 = vld [vmem:[#allocation6 + $0x1bc] sm:$0xff]
        %v426 = vld [vmem:[#allocation6 + $0x1c4] sm:$0xf]
        %v427 = vld [vmem:[#allocation6 + $0x1e4] sm:$0xff]
        %v428 = vld [vmem:[#allocation6 + $0x1ec] sm:$0xf]
        %v429 = vld [vmem:[#allocation6 + $0x20c] sm:$0xff]
        %v430 = vld [vmem:[#allocation6 + $0x214] sm:$0xf]
        %v431 = vld [vmem:[#allocation6 + $0x234] sm:$0xff]
        %v432 = vld [vmem:[#allocation6 + $0x23c] sm:$0xf]
        %v433 = vld [vmem:[#allocation6 + $0x25c] sm:$0xff]
        %v434 = vld [vmem:[#allocation6 + $0x264] sm:$0xf]
        %v435 = vld [vmem:[#allocation6 + $0x10] sm:$0xf]
        %v436 = vld [vmem:[#allocation6 + $0x38] sm:$0xf]
        %v437 = vld [vmem:[#allocation6 + $0x60] sm:$0xf]
        %v438 = vld [vmem:[#allocation6 + $0x88] sm:$0xf]
        %v439 = vld [vmem:[#allocation6 + $0xb0] sm:$0xf]
        %v440 = vld [vmem:[#allocation6 + $0xd8] sm:$0xf]
        %v441 = vld [vmem:[#allocation6 + $0x100] sm:$0xf]
        %v442 = vld [vmem:[#allocation6 + $0x128] sm:$0xf]
        %v443 = vld [vmem:[#allocation6 + $0x150] sm:$0xf]
        %v444 = vld [vmem:[#allocation6 + $0x178] sm:$0xf]
        %v445 = vld [vmem:[#allocation6 + $0x1a0] sm:$0xf]
        %v446 = vld [vmem:[#allocation6 + $0x1c8] sm:$0xf]
        %v447 = vld [vmem:[#allocation6 + $0x1f0] sm:$0xf]
        %v448 = vld [vmem:[#allocation6 + $0x218] sm:$0xf]
        %v449 = vld [vmem:[#allocation6 + $0x240] sm:$0xf]
        %v450 = vld [vmem:[#allocation6 + $0x268] sm:$0xf]
        %v451 = vld [vmem:[#allocation6 + $0x14] sm:$0xf]
        %v452 = vld [vmem:[#allocation6 + $0x3c] sm:$0xf]
        %v453 = vld [vmem:[#allocation6 + $0x64] sm:$0xf]
        %v454 = vld [vmem:[#allocation6 + $0x8c] sm:$0xf]
        %v455 = vld [vmem:[#allocation6 + $0xb4] sm:$0xf]
        %v456 = vld [vmem:[#allocation6 + $0xdc] sm:$0xf]
        %v457 = vld [vmem:[#allocation6 + $0x104] sm:$0xf]
        %v458 = vld [vmem:[#allocation6 + $0x12c] sm:$0xf]
        %v459 = vld [vmem:[#allocation6 + $0x154] sm:$0xf]
        %v460 = vld [vmem:[#allocation6 + $0x17c] sm:$0xf]
        %v461 = vld [vmem:[#allocation6 + $0x1a4] sm:$0xf]
        %v462 = vld [vmem:[#allocation6 + $0x1cc] sm:$0xf]
        %v463 = vld [vmem:[#allocation6 + $0x1f4] sm:$0xf]
        %v464 = vld [vmem:[#allocation6 + $0x21c] sm:$0xf]
        %v465 = vld [vmem:[#allocation6 + $0x244] sm:$0xf]
        %v466 = vld [vmem:[#allocation6 + $0x26c] sm:$0xf]
        %v467 = vld [vmem:[#allocation6 + $0x18] sm:$0xf]
        %v468 = vld [vmem:[#allocation6 + $0x40] sm:$0xf]
        %v469 = vld [vmem:[#allocation6 + $0x68] sm:$0xf]
        %v470 = vld [vmem:[#allocation6 + $0x90] sm:$0xf]
        %v471 = vld [vmem:[#allocation6 + $0xb8] sm:$0xf]
        %v472 = vld [vmem:[#allocation6 + $0xe0] sm:$0xf]
        %v473 = vld [vmem:[#allocation6 + $0x108] sm:$0xf]
        %v474 = vld [vmem:[#allocation6 + $0x130] sm:$0xf]
        %v475 = vld [vmem:[#allocation6 + $0x158] sm:$0xf]
        %v476 = vld [vmem:[#allocation6 + $0x180] sm:$0xf]
        %v477 = vld [vmem:[#allocation6 + $0x1a8] sm:$0xf]
        %v478 = vld [vmem:[#allocation6 + $0x1d0] sm:$0xf]
        %v479 = vld [vmem:[#allocation6 + $0x1f8] sm:$0xf]
        %v480 = vld [vmem:[#allocation6 + $0x220] sm:$0xf]
        %v481 = vld [vmem:[#allocation6 + $0x248] sm:$0xf]
        %v482 = vld [vmem:[#allocation6 + $0x270] sm:$0xf]
        %v483 = vld [vmem:[#allocation6 + $0x1c] sm:$0xff]
        %v484 = vld [vmem:[#allocation6 + $0x44] sm:$0xff]
        %v485 = vld [vmem:[#allocation6 + $0x6c] sm:$0xff]
        %v486 = vld [vmem:[#allocation6 + $0x94] sm:$0xff]
        %v487 = vld [vmem:[#allocation6 + $0xbc] sm:$0xff]
        %v488 = vld [vmem:[#allocation6 + $0xe4] sm:$0xff]
        %v489 = vld [vmem:[#allocation6 + $0x10c] sm:$0xff]
        %v490 = vld [vmem:[#allocation6 + $0x134] sm:$0xff]
        %v491 = vld [vmem:[#allocation6 + $0x15c] sm:$0xff]
        %v492 = vld [vmem:[#allocation6 + $0x184] sm:$0xff]
        %v493 = vld [vmem:[#allocation6 + $0x1ac] sm:$0xff]
        %v494 = vld [vmem:[#allocation6 + $0x1d4] sm:$0xff]
        %v495 = vld [vmem:[#allocation6 + $0x1fc] sm:$0xff]
        %v496 = vld [vmem:[#allocation6 + $0x224] sm:$0xff]
        %v497 = vld [vmem:[#allocation6 + $0x24c] sm:$0xff]
        %v498 = vld [vmem:[#allocation6 + $0x274] sm:$0xff]
        %v499 = vld [vmem:[#allocation6 + $0x24] sm:$0xf]
        %v500 = vld [vmem:[#allocation6 + $0x4c] sm:$0xf]
        %v501 = vld [vmem:[#allocation6 + $0x74] sm:$0xf]
        %v502 = vld [vmem:[#allocation6 + $0x9c] sm:$0xf]
        %v503 = vld [vmem:[#allocation6 + $0xc4] sm:$0xf]
        %v504 = vld [vmem:[#allocation6 + $0xec] sm:$0xf]
        %v505 = vld [vmem:[#allocation6 + $0x114] sm:$0xf]
        %v506 = vld [vmem:[#allocation6 + $0x13c] sm:$0xf]
        %v507 = vld [vmem:[#allocation6 + $0x164] sm:$0xf]
        %v508 = vld [vmem:[#allocation6 + $0x18c] sm:$0xf]
        %v509 = vld [vmem:[#allocation6 + $0x1b4] sm:$0xf]
        %v510 = vld [vmem:[#allocation6 + $0x1dc] sm:$0xf]
        %v511 = vld [vmem:[#allocation6 + $0x204] sm:$0xf]
        %v512 = vld [vmem:[#allocation6 + $0x22c] sm:$0xf]
        %v513 = vld [vmem:[#allocation6 + $0x254] sm:$0xf]
        %v514 = vld [vmem:[#allocation6 + $0x27c] sm:$0xf]
        %v515 = vld [vmem:[%s5] sm:$0x1]
        %v516 = vld [vmem:[%s5 + $0x1] sm:$0x1]
        %v517 = vld [vmem:[%s5 + $0x2] sm:$0x7]
        %v518 = vld [vmem:[%s5 + $0x5] sm:$0x1]
        %v519 = vld [vmem:[%s5 + $0x6] sm:$0x1]
        %v520 = vld [vmem:[%s5 + $0x7] sm:$0x1]
        %v521 = vld [vmem:[%s5 + $0x8] sm:$0x3]
        %v522 = vld [vmem:[%s6] sm:$0x3f]
        %v523 = vld [vmem:[%s378] sm:$0xf]
        %v524 = vld [vmem:[%s378 + $0x4] sm:$0xf]
        %v525 = vld [vmem:[#allocation3] sm:$0xf]
        %v526 = vld [vmem:[#allocation3 + $0x4] sm:$0xf]
        %v527 = vld [vmem:[#allocation3 + $0x8] sm:$0xf]
        %v528 = vld [vmem:[#allocation3 + $0xc] sm:$0xf]
        %v529 = vld [vmem:[#allocation3 + $0x10] sm:$0xf]
        %v530 = vld [vmem:[#allocation3 + $0x14] sm:$0xf]
        %v531 = vld [vmem:[#allocation3 + $0x18] sm:$0xf]
        %v532 = vld [vmem:[#allocation3 + $0x1c] sm:$0xf]
        %v533 = vld [vmem:[#allocation3 + $0x20] sm:$0xf]
        %v534 = vld [vmem:[#allocation3 + $0x24] sm:$0xf]
        %v535 = vld [vmem:[#allocation3 + $0x28] sm:$0xf]
        %v536 = vld [vmem:[#allocation3 + $0x2c] sm:$0xf]
        %v537 = vld [vmem:[#allocation3 + $0x30] sm:$0xf]
        %v538 = vld [vmem:[#allocation3 + $0x34] sm:$0xf]
        %v539 = vld [vmem:[#allocation3 + $0x38] sm:$0xf]
        %v540 = vld [vmem:[#allocation3 + $0x3c] sm:$0xf]
        %v541 = vld [vmem:[#allocation3 + $0x40] sm:$0xf]
        %v542 = vld [vmem:[#allocation3 + $0x44] sm:$0xf]
        %v543 = vld [vmem:[#allocation3 + $0x48] sm:$0xf]
        %v544 = vld [vmem:[#allocation3 + $0x4c] sm:$0xf]
        %v545 = vld [vmem:[#allocation3 + $0x50] sm:$0xf]
        %v546 = vld [vmem:[#allocation3 + $0x54] sm:$0xf]
        %v547 = vld [vmem:[#allocation3 + $0x58] sm:$0xf]
        %v548 = vld [vmem:[#allocation3 + $0x5c] sm:$0xf]
        %v550 = vlaneseq
        %v551 = vshrl.u32 %v550, 7
        %v552 = vsub.s32 0, %v551
        %v553 = vrot.slane %v515, %v552
        %v557 = vcombine.low %v523, %v524
        %v559 = vunpack.c.l.s4 1983009808
        %v560 = vunpack.c.0.s8 %v559
        %v561 = vlaneseq
        %v562 = vshrl.u32 %v561, 7
        %v563 = vsub.s32 %v560, %v562
        %v564 = vrot.slane %v557, %v563
        %v565 = vcombine.high %v564, %v564
        %v591 = vunpack.c.l.b16 %v525
        %v592 = vunpack.c.l.b16 %v526
        %v593 = vunpack.c.l.b16 %v527
        %v594 = vunpack.c.l.b16 %v528
        %v595 = vunpack.c.l.b16 %v529
        %v596 = vunpack.c.l.b16 %v530
        %v597 = vunpack.c.l.b16 %v531
        %v598 = vunpack.c.l.b16 %v532
        %v599 = vunpack.c.l.b16 %v533
        %v600 = vunpack.c.l.b16 %v534
        %v601 = vunpack.c.l.b16 %v535
        %v602 = vunpack.c.l.b16 %v536
        %v603 = vunpack.c.l.b16 %v537
        %v604 = vunpack.c.l.b16 %v538
        %v605 = vunpack.c.l.b16 %v539
        %v606 = vunpack.c.l.b16 %v540
        %v607 = vunpack.c.l.b16 %v541
        %v608 = vunpack.c.l.b16 %v542
        %v609 = vunpack.c.l.b16 %v543
        %v610 = vunpack.c.l.b16 %v544
        %v611 = vunpack.c.l.b16 %v545
        %v612 = vunpack.c.l.b16 %v546
        %v613 = vunpack.c.l.b16 %v547
        %v614 = vunpack.c.l.b16 %v548
        %v615 = vpack.c.b16 %v592, %v591
        %v616 = vpack.c.b16 %v594, %v593
        %v617 = vpack.c.b16 %v596, %v595
        %v618 = vpack.c.b16 %v598, %v597
        %v619 = vpack.c.b16 %v600, %v599
        %v620 = vpack.c.b16 %v602, %v601
        %v621 = vpack.c.b16 %v604, %v603
        %v622 = vpack.c.b16 %v606, %v605
        %v623 = vpack.c.b16 %v608, %v607
        %v624 = vpack.c.b16 %v610, %v609
        %v625 = vpack.c.b16 %v612, %v611
        %v626 = vpack.c.b16 %v614, %v613
        %vm639 = vcmask 523264
        %v641 = vsel %vm639, %v565, 0
        %643 = vmatprep.subr.bf16.mxu0 0
        %644 = vmatpush1.bf16.msra.mxu0 %v622
        %645 = vmatprep.subr.bf16.mxu0 0
        %646 = vmatpush1.bf16.msra.mxu0 %v621
        %647 = vmatprep.subr.bf16.mxu0 0
        %648 = vmatpush1.bf16.msra.mxu0 %v620
        %649 = vmatprep.subr.bf16.mxu0 0
        %650 = vmatpush1.bf16.msra.mxu0 %v619
        %651 = vmatprep.subr.bf16.mxu0 0
        %652 = vmatpush1.bf16.msra.mxu0 %v618
        %653 = vmatprep.subr.bf16.mxu0 0
        %654 = vmatpush1.bf16.msra.mxu0 %v617
        %655 = vmatprep.subr.bf16.mxu0 0
        %656 = vmatpush1.bf16.msra.mxu0 %v616
        %657 = vmatprep.subr.bf16.mxu0 0
        %658 = vmatpush1.bf16.msra.mxu0 %v615
        %659 = vmatprep.subr.bf16.mxu0 0
        %660 = vmatpush2.bf16.msra.mxu0 0
        %661 = vmatprep.subr.bf16.mxu0 0
        %662 = vmatpush2.bf16.msra.mxu0 0
        %663 = vmatprep.subr.bf16.mxu0 0
        %664 = vmatpush2.bf16.msra.mxu0 0
        %665 = vmatprep.subr.bf16.mxu0 0
        %666 = vmatpush2.bf16.msra.mxu0 0
        %667 = vmatprep.subr.bf16.mxu0 0
        %668 = vmatpush2.bf16.msra.mxu0 %v626
        %669 = vmatprep.subr.bf16.mxu0 0
        %670 = vmatpush2.bf16.msra.mxu0 %v625
        %671 = vmatprep.subr.bf16.mxu0 0
        %672 = vmatpush2.bf16.msra.mxu0 %v624
        %673 = vmatprep.subr.bf16.mxu0 0
        %674 = vmatpush2.bf16.msra.mxu0 %v623
        %675 = vmatprep.mubr.bf16.mxu0 %v641
        %676 = vmatmul.mubr.bf16.gmra.mxu0 %v564
        %v677 = vpop.f32.mrf.mxu0
        %v678 = vadd.f32 %v553, %v677
        %v679 = vpop.f32.mrf.mxu0
        %v680 = vpop.f32.mrf.mxu0
        %v681 = vpop.f32.mrf.mxu0
        %682 = vdwg.mxu0
        %v683 = vld [vmem:[%s383] sm:$0x1]
        %v684 = vld [vmem:[%s383 + $0x1] sm:$0x1]
        %v688 = vunpack.c.l.s4 1966171168
        %v689 = vunpack.c.0.s8 %v688
        %v690 = vlaneseq
        %v691 = vshrl.u32 %v690, 7
        %v692 = vsub.s32 %v689, %v691
        %v693 = vrot.slane %v683, %v692
        %v695 = vunpack.c.l.s4 1966171168
        %v696 = vunpack.c.0.s8 %v695
        %v697 = vlaneseq
        %v698 = vshrl.u32 %v697, 7
        %v699 = vsub.s32 %v696, %v698
        %v700 = vrot.slane %v693, %v699
        %v702 = vunpack.c.l.s4 1966171168
        %v703 = vunpack.c.0.s8 %v702
        %v704 = vlaneseq
        %v705 = vshrl.u32 %v704, 7
        %v706 = vsub.s32 %v703, %v705
        %v707 = vrot.slane %v684, %v706
        %v709 = vunpack.c.l.s4 1966171168
        %v710 = vunpack.c.0.s8 %v709
        %v711 = vlaneseq
        %v712 = vshrl.u32 %v711, 7
        %v713 = vsub.s32 %v710, %v712
        %v714 = vrot.slane %v707, %v713
        %v715 = vunpack.c.l.b16 %v700
        %v716 = vunpack.c.l.b16 %v714
        %v717 = vrot.slane %v716, 7
        %vm718 = vcmask 1041409
        %v719 = vsel %vm718, %v717, %v715
        %v720 = vpack.c.b16 %v719, %v719
        %v738 = vunpack.c.l.b16 %v499
        %v739 = vunpack.c.l.b16 %v500
        %v740 = vunpack.c.l.b16 %v501
        %v741 = vunpack.c.l.b16 %v502
        %v742 = vunpack.c.l.b16 %v503
        %v743 = vunpack.c.l.b16 %v504
        %v744 = vunpack.c.l.b16 %v505
        %v745 = vunpack.c.l.b16 %v506
        %v746 = vunpack.c.l.b16 %v507
        %v747 = vunpack.c.l.b16 %v508
        %v748 = vunpack.c.l.b16 %v509
        %v749 = vunpack.c.l.b16 %v510
        %v750 = vunpack.c.l.b16 %v511
        %v751 = vunpack.c.l.b16 %v512
        %v752 = vunpack.c.l.b16 %v513
        %v753 = vunpack.c.l.b16 %v514
        %v754 = vpack.c.b16 %v739, %v738
        %v755 = vpack.c.b16 %v741, %v740
        %v756 = vpack.c.b16 %v743, %v742
        %v757 = vpack.c.b16 %v745, %v744
        %v758 = vpack.c.b16 %v747, %v746
        %v759 = vpack.c.b16 %v749, %v748
        %v760 = vpack.c.b16 %v751, %v750
        %v761 = vpack.c.b16 %v753, %v752
        %770 = vmatprep.subr.bf16.mxu0 0
        %771 = vmatpush1.bf16.msra.mxu0 %v761
        %772 = vmatprep.subr.bf16.mxu0 0
        %773 = vmatpush1.bf16.msra.mxu0 %v760
        %774 = vmatprep.subr.bf16.mxu0 0
        %775 = vmatpush1.bf16.msra.mxu0 %v759
        %776 = vmatprep.subr.bf16.mxu0 0
        %777 = vmatpush1.bf16.msra.mxu0 %v758
        %778 = vmatprep.subr.bf16.mxu0 0
        %779 = vmatpush1.bf16.msra.mxu0 %v757
        %780 = vmatprep.subr.bf16.mxu0 0
        %781 = vmatpush1.bf16.msra.mxu0 %v756
        %782 = vmatprep.subr.bf16.mxu0 0
        %783 = vmatpush1.bf16.msra.mxu0 %v755
        %784 = vmatprep.subr.bf16.mxu0 0
        %785 = vmatpush1.bf16.msra.mxu0 %v754
        %786 = vmatprep.subr.bf16.mxu0 0
        %787 = vmatpush2.bf16.msra.mxu0 0
        %788 = vmatprep.subr.bf16.mxu0 0
        %789 = vmatpush2.bf16.msra.mxu0 0
        %790 = vmatprep.subr.bf16.mxu0 0
        %791 = vmatpush2.bf16.msra.mxu0 0
        %792 = vmatprep.subr.bf16.mxu0 0
        %793 = vmatpush2.bf16.msra.mxu0 0
        %794 = vmatprep.subr.bf16.mxu0 0
        %795 = vmatpush2.bf16.msra.mxu0 0
        %796 = vmatprep.subr.bf16.mxu0 0
        %797 = vmatpush2.bf16.msra.mxu0 0
        %798 = vmatprep.subr.bf16.mxu0 0
        %799 = vmatpush2.bf16.msra.mxu0 0
        %800 = vmatprep.subr.bf16.mxu0 0
        %801 = vmatpush2.bf16.msra.mxu0 0
        %802 = vmatprep.mubr.bf16.mxu0 0
        %803 = vmatmul.mubr.bf16.gmra.mxu0 %v720
        %v804 = vpop.f32.mrf.mxu0
        %v805 = vadd.f32 0.0, %v804
        %v806 = vpop.f32.mrf.mxu0
        %v807 = vpop.f32.mrf.mxu0
        %v808 = vpop.f32.mrf.mxu0
        %809 = vdwg.mxu0
        %v811 = vcombine.high %v678, %v678
        %v815 = vunpack.c.l.s4 1966171168
        %v816 = vunpack.c.0.s8 %v815
        %v817 = vlaneseq
        %v818 = vshrl.u32 %v817, 7
        %v819 = vsub.s32 %v816, %v818
        %v820 = vrot.slane %v805, %v819
        %v821 = vcombine.high %v820, %v820
        %v823 = vunpack.c.l.s4 1966171168
        %v824 = vunpack.c.0.s8 %v823
        %v825 = vlaneseq
        %v826 = vshrl.u32 %v825, 7
        %v827 = vsub.s32 %v824, %v826
        %v828 = vrot.slane %v820, %v827
        %v830 = vunpack.c.l.s4 1966171168
        %v831 = vunpack.c.0.s8 %v830
        %v832 = vlaneseq
        %v833 = vshrl.u32 %v832, 7
        %v834 = vsub.s32 %v831, %v833
        %v835 = vrot.slane %v821, %v834
        %v836 = vlaneseq
        %v837 = vshrl.u32 %v836, 7
        %v838 = vsub.s32 0, %v837
        %v839 = vrot.slane %v828, %v838
        %v840 = vlaneseq
        %v841 = vshrl.u32 %v840, 7
        %v842 = vsub.s32 0, %v841
        %v843 = vrot.slane %v835, %v842
        %v846 = vadd.f32 %v678, %v839
        %v847 = vadd.f32 %v811, %v843
        %v848 = vpack.c.bf16 %v846, %v846
        %v849 = vpack.c.bf16 %v847, %v847
        %v850 = vld [vmem:[%s3] sm:$0xf]
        %v851 = vld [vmem:[%s3 + $0x4] sm:$0xf]
        %v852 = vld [vmem:[%s3 + $0x8] sm:$0xf]
        %v853 = vld [vmem:[%s3 + $0xc] sm:$0xf]
        %v854 = vld [vmem:[%s3 + $0x10] sm:$0xf]
        %v855 = vld [vmem:[%s3 + $0x14] sm:$0xf]
        %v856 = vld [vmem:[%s3 + $0x18] sm:$0xf]
        %v857 = vld [vmem:[%s3 + $0x1c] sm:$0xf]
        %v858 = vld [vmem:[%s3 + $0x20] sm:$0xf]
        %v859 = vld [vmem:[%s3 + $0x24] sm:$0xf]
        %v860 = vld [vmem:[%s3 + $0x28] sm:$0xf]
        %v861 = vld [vmem:[%s3 + $0x2c] sm:$0xf]
        %v862 = vld [vmem:[%s3 + $0x30] sm:$0xf]
        %v863 = vld [vmem:[%s3 + $0x34] sm:$0xf]
        %v864 = vld [vmem:[%s3 + $0x38] sm:$0xf]
        %v865 = vld [vmem:[%s3 + $0x3c] sm:$0xf]
        %v868 = vcombine.low %v848, %v849
        %v870 = vunpack.c.l.s4 1983009808
        %v871 = vunpack.c.0.s8 %v870
        %v872 = vlaneseq
        %v873 = vshrl.u32 %v872, 7
        %v874 = vsub.s32 %v871, %v873
        %v875 = vrot.slane %v868, %v874
        %v893 = vunpack.c.l.b16 %v850
        %v894 = vunpack.c.l.b16 %v851
        %v895 = vunpack.c.l.b16 %v852
        %v896 = vunpack.c.l.b16 %v853
        %v897 = vunpack.c.l.b16 %v854
        %v898 = vunpack.c.l.b16 %v855
        %v899 = vunpack.c.l.b16 %v856
        %v900 = vunpack.c.l.b16 %v857
        %v901 = vunpack.c.l.b16 %v858
        %v902 = vunpack.c.l.b16 %v859
        %v903 = vunpack.c.l.b16 %v860
        %v904 = vunpack.c.l.b16 %v861
        %v905 = vunpack.c.l.b16 %v862
        %v906 = vunpack.c.l.b16 %v863
        %v907 = vunpack.c.l.b16 %v864
        %v908 = vunpack.c.l.b16 %v865
        %v909 = vpack.c.b16 %v894, %v893
        %v910 = vpack.c.b16 %v896, %v895
        %v911 = vpack.c.b16 %v898, %v897
        %v912 = vpack.c.b16 %v900, %v899
        %v913 = vpack.c.b16 %v902, %v901
        %v914 = vpack.c.b16 %v904, %v903
        %v915 = vpack.c.b16 %v906, %v905
        %v916 = vpack.c.b16 %v908, %v907
        %925 = vmatprep.subr.bf16.mxu0 0
        %926 = vmatpush1.bf16.msra.mxu0 %v916
        %927 = vmatprep.subr.bf16.mxu0 0
        %928 = vmatpush1.bf16.msra.mxu0 %v915
        %929 = vmatprep.subr.bf16.mxu0 0
        %930 = vmatpush1.bf16.msra.mxu0 %v914
        %931 = vmatprep.subr.bf16.mxu0 0
        %932 = vmatpush1.bf16.msra.mxu0 %v913
        %933 = vmatprep.subr.bf16.mxu0 0
        %934 = vmatpush1.bf16.msra.mxu0 %v912
        %935 = vmatprep.subr.bf16.mxu0 0
        %936 = vmatpush1.bf16.msra.mxu0 %v911
        %937 = vmatprep.subr.bf16.mxu0 0
        %938 = vmatpush1.bf16.msra.mxu0 %v910
        %939 = vmatprep.subr.bf16.mxu0 0
        %940 = vmatpush1.bf16.msra.mxu0 %v909
        %941 = vmatprep.subr.bf16.mxu0 0
        %942 = vmatpush2.bf16.msra.mxu0 0
        %943 = vmatprep.subr.bf16.mxu0 0
        %944 = vmatpush2.bf16.msra.mxu0 0
        %945 = vmatprep.subr.bf16.mxu0 0
        %946 = vmatpush2.bf16.msra.mxu0 0
        %947 = vmatprep.subr.bf16.mxu0 0
        %948 = vmatpush2.bf16.msra.mxu0 0
        %949 = vmatprep.subr.bf16.mxu0 0
        %950 = vmatpush2.bf16.msra.mxu0 0
        %951 = vmatprep.subr.bf16.mxu0 0
        %952 = vmatpush2.bf16.msra.mxu0 0
        %953 = vmatprep.subr.bf16.mxu0 0
        %954 = vmatpush2.bf16.msra.mxu0 0
        %955 = vmatprep.subr.bf16.mxu0 0
        %956 = vmatpush2.bf16.msra.mxu0 0
        %957 = vmatprep.mubr.bf16.mxu0 0
        %958 = vmatmul.mubr.bf16.gmra.mxu0 %v875
        %v959 = vpop.f32.mrf.mxu0
        %v960 = vadd.f32 0.0, %v959
        %v961 = vpop.f32.mrf.mxu0
        %v962 = vpop.f32.mrf.mxu0
        %v963 = vpop.f32.mrf.mxu0
        %964 = vdwg.mxu0
        %v966 = vcombine.high %v960, %v960
        %vm968 = vcmask 60416
        %v969 = vsel %vm968, %v960, -inf
        %v970 = vrot.slane %v969, 4
        %v971 = vmax.f32 %v969, %v970
        %v972 = vrot.slane %v971, 2
        %v973 = vmax.f32 %v971, %v972
        %v974 = vrot.slane %v973, 1
        %v975 = vmax.f32 %v973, %v974
        %v976 = vsel %vm968, %v966, -inf
        %v977 = vrot.slane %v976, 4
        %v978 = vmax.f32 %v976, %v977
        %v979 = vrot.slane %v978, 2
        %v980 = vmax.f32 %v978, %v979
        %v981 = vrot.slane %v980, 1
        %v982 = vmax.f32 %v980, %v981
        %v983 = vsub.f32 %v960, %v975
        %v984 = vsub.f32 %v966, %v982
        %v985 = vmul.f32 %v983, 1.442695
        %v986 = vpow.pop %v985
        %v987 = vmul.f32 %v984, 1.442695
        %v988 = vpow.pop %v987
        %v989 = vsel %vm968, %v986, 0.0
        %v990 = vrot.slane %v989, 4
        %v991 = vadd.f32 %v989, %v990
        %v992 = vrot.slane %v991, 2
        %v993 = vadd.f32 %v991, %v992
        %v994 = vrot.slane %v993, 1
        %v995 = vadd.f32 %v993, %v994
        %v996 = vsel %vm968, %v988, 0.0
        %v997 = vrot.slane %v996, 4
        %v998 = vadd.f32 %v996, %v997
        %v999 = vrot.slane %v998, 2
        %v1000 = vadd.f32 %v998, %v999
        %v1001 = vrot.slane %v1000, 1
        %v1002 = vadd.f32 %v1000, %v1001
        %v1003 = vrcp.pop %v995
        %v1004 = vrcp.pop %v1002
        %v1005 = vmul.f32 %v986, %v1003
        %v1006 = vmul.f32 %v988, %v1004
        %v1007 = vlaneseq
        %v1008 = vshrl.u32 %v1007, 7
        %v1009 = vsub.s32 0, %v1008
        %v1010 = vrot.slane %v1005, %v1009
        %1012 = vbcast.lane.b32.xlu0 %v1010, 256
        %v1013 = vpop.permute.xlu0 %1012
        %v1014 = vlaneseq
        %v1015 = vshrl.u32 %v1014, 7
        %v1016 = vsub.s32 1, %v1015
        %v1017 = vrot.slane %v1005, %v1016
        %1019 = vbcast.lane.b32.xlu0 %v1017, 256
        %v1020 = vpop.permute.xlu0 %1019
        %v1021 = vlaneseq
        %v1022 = vshrl.u32 %v1021, 7
        %v1023 = vsub.s32 2, %v1022
        %v1024 = vrot.slane %v1005, %v1023
        %1026 = vbcast.lane.b32.xlu0 %v1024, 256
        %v1027 = vpop.permute.xlu0 %1026
        %v1028 = vlaneseq
        %v1029 = vshrl.u32 %v1028, 7
        %v1030 = vsub.s32 3, %v1029
        %v1031 = vrot.slane %v1005, %v1030
        %1033 = vbcast.lane.b32.xlu0 %v1031, 256
        %v1034 = vpop.permute.xlu0 %1033
        %v1035 = vlaneseq
        %v1036 = vshrl.u32 %v1035, 7
        %v1037 = vsub.s32 0, %v1036
        %v1038 = vrot.slane %v1006, %v1037
        %1040 = vbcast.lane.b32.xlu0 %v1038, 256
        %v1041 = vpop.permute.xlu0 %1040
        %v1042 = vlaneseq
        %v1043 = vshrl.u32 %v1042, 7
        %v1044 = vsub.s32 1, %v1043
        %v1045 = vrot.slane %v1006, %v1044
        %1047 = vbcast.lane.b32.xlu0 %v1045, 256
        %v1048 = vpop.permute.xlu0 %1047
        %v1049 = vlaneseq
        %v1050 = vshrl.u32 %v1049, 7
        %v1051 = vsub.s32 2, %v1050
        %v1052 = vrot.slane %v1006, %v1051
        %1054 = vbcast.lane.b32.xlu0 %v1052, 256
        %v1055 = vpop.permute.xlu0 %1054
        %v1056 = vlaneseq
        %v1057 = vshrl.u32 %v1056, 7
        %v1058 = vsub.s32 3, %v1057
        %v1059 = vrot.slane %v1006, %v1058
        %1061 = vbcast.lane.b32.xlu0 %v1059, 256
        %v1062 = vpop.permute.xlu0 %1061
        %v1066 = vunpack.c.l.s4 1966171168
        %v1067 = vunpack.c.0.s8 %v1066
        %v1068 = vlaneseq
        %v1069 = vshrl.u32 %v1068, 7
        %v1070 = vsub.s32 %v1067, %v1069
        %v1071 = vrot.slane %v846, %v1070
        %v1072 = vcombine.high %v1071, %v1071
        %v1074 = vunpack.c.l.s4 1966171168
        %v1075 = vunpack.c.0.s8 %v1074
        %v1076 = vlaneseq
        %v1077 = vshrl.u32 %v1076, 7
        %v1078 = vsub.s32 %v1075, %v1077
        %v1079 = vrot.slane %v1071, %v1078
        %v1081 = vunpack.c.l.s4 1966171168
        %v1082 = vunpack.c.0.s8 %v1081
        %v1083 = vlaneseq
        %v1084 = vshrl.u32 %v1083, 7
        %v1085 = vsub.s32 %v1082, %v1084
        %v1086 = vrot.slane %v1072, %v1085
        %v1087 = vcombine.high %v1079, %v1079
        %v1088 = vcombine.high %v1086, %v1086
        %v1090 = vunpack.c.l.s4 1966171168
        %v1091 = vunpack.c.0.s8 %v1090
        %v1092 = vlaneseq
        %v1093 = vshrl.u32 %v1092, 7
        %v1094 = vsub.s32 %v1091, %v1093
        %v1095 = vrot.slane %v847, %v1094
        %v1096 = vcombine.high %v1095, %v1095
        %v1098 = vunpack.c.l.s4 1966171168
        %v1099 = vunpack.c.0.s8 %v1098
        %v1100 = vlaneseq
        %v1101 = vshrl.u32 %v1100, 7
        %v1102 = vsub.s32 %v1099, %v1101
        %v1103 = vrot.slane %v1095, %v1102
        %v1105 = vunpack.c.l.s4 1966171168
        %v1106 = vunpack.c.0.s8 %v1105
        %v1107 = vlaneseq
        %v1108 = vshrl.u32 %v1107, 7
        %v1109 = vsub.s32 %v1106, %v1108
        %v1110 = vrot.slane %v1096, %v1109
        %v1111 = vcombine.high %v1103, %v1103
        %v1112 = vcombine.high %v1110, %v1110
        %v1113 = vlaneseq
        %v1114 = vshrl.u32 %v1113, 7
        %v1115 = vsub.s32 0, %v1114
        %v1116 = vrot.slane %v1079, %v1115
        %v1117 = vlaneseq
        %v1118 = vshrl.u32 %v1117, 7
        %v1119 = vsub.s32 0, %v1118
        %v1120 = vrot.slane %v1086, %v1119
        %v1121 = vlaneseq
        %v1122 = vshrl.u32 %v1121, 7
        %v1123 = vsub.s32 0, %v1122
        %v1124 = vrot.slane %v1087, %v1123
        %v1125 = vlaneseq
        %v1126 = vshrl.u32 %v1125, 7
        %v1127 = vsub.s32 0, %v1126
        %v1128 = vrot.slane %v1088, %v1127
        %v1129 = vlaneseq
        %v1130 = vshrl.u32 %v1129, 7
        %v1131 = vsub.s32 0, %v1130
        %v1132 = vrot.slane %v1103, %v1131
        %v1133 = vlaneseq
        %v1134 = vshrl.u32 %v1133, 7
        %v1135 = vsub.s32 0, %v1134
        %v1136 = vrot.slane %v1110, %v1135
        %v1137 = vlaneseq
        %v1138 = vshrl.u32 %v1137, 7
        %v1139 = vsub.s32 0, %v1138
        %v1140 = vrot.slane %v1111, %v1139
        %v1141 = vlaneseq
        %v1142 = vshrl.u32 %v1141, 7
        %v1143 = vsub.s32 0, %v1142
        %v1144 = vrot.slane %v1112, %v1143
        %v1153 = vmul.f32 %v1013, %v1116
        %v1154 = vmul.f32 %v1020, %v1120
        %v1155 = vmul.f32 %v1027, %v1124
        %v1156 = vmul.f32 %v1034, %v1128
        %v1157 = vmul.f32 %v1041, %v1132
        %v1158 = vmul.f32 %v1048, %v1136
        %v1159 = vmul.f32 %v1055, %v1140
        %v1160 = vmul.f32 %v1062, %v1144
        %v1161 = vadd.f32 %v1153, %v1154
        %v1162 = vadd.f32 %v1161, %v1155
        %v1163 = vadd.f32 %v1162, %v1156
        %v1164 = vadd.f32 %v1157, %v1158
        %v1165 = vadd.f32 %v1164, %v1159
        %v1166 = vadd.f32 %v1165, %v1160
        %v1167 = vpack.c.bf16 %v1166, %v1163
        %v1184 = vunpack.c.l.b16 %v387
        %v1185 = vunpack.c.l.b16 %v388
        %v1186 = vunpack.c.l.b16 %v389
        %v1187 = vunpack.c.l.b16 %v390
        %v1188 = vunpack.c.l.b16 %v391
        %v1189 = vunpack.c.l.b16 %v392
        %v1190 = vunpack.c.l.b16 %v393
        %v1191 = vunpack.c.l.b16 %v394
        %v1192 = vunpack.c.l.b16 %v395
        %v1193 = vunpack.c.l.b16 %v396
        %v1194 = vunpack.c.l.b16 %v397
        %v1195 = vunpack.c.l.b16 %v398
        %v1196 = vunpack.c.l.b16 %v399
        %v1197 = vunpack.c.l.b16 %v400
        %v1198 = vunpack.c.l.b16 %v401
        %v1199 = vunpack.c.l.b16 %v402
        %v1200 = vpack.c.b16 %v1185, %v1184
        %v1201 = vpack.c.b16 %v1187, %v1186
        %v1202 = vpack.c.b16 %v1189, %v1188
        %v1203 = vpack.c.b16 %v1191, %v1190
        %v1204 = vpack.c.b16 %v1193, %v1192
        %v1205 = vpack.c.b16 %v1195, %v1194
        %v1206 = vpack.c.b16 %v1197, %v1196
        %v1207 = vpack.c.b16 %v1199, %v1198
        %1216 = vmatprep.subr.bf16.mxu0 0
        %1217 = vmatpush1.bf16.msra.mxu0 %v1207
        %1218 = vmatprep.subr.bf16.mxu0 0
        %1219 = vmatpush1.bf16.msra.mxu0 %v1206
        %1220 = vmatprep.subr.bf16.mxu0 0
        %1221 = vmatpush1.bf16.msra.mxu0 %v1205
        %1222 = vmatprep.subr.bf16.mxu0 0
        %1223 = vmatpush1.bf16.msra.mxu0 %v1204
        %1224 = vmatprep.subr.bf16.mxu0 0
        %1225 = vmatpush1.bf16.msra.mxu0 %v1203
        %1226 = vmatprep.subr.bf16.mxu0 0
        %1227 = vmatpush1.bf16.msra.mxu0 %v1202
        %1228 = vmatprep.subr.bf16.mxu0 0
        %1229 = vmatpush1.bf16.msra.mxu0 %v1201
        %1230 = vmatprep.subr.bf16.mxu0 0
        %1231 = vmatpush1.bf16.msra.mxu0 %v1200
        %1232 = vmatprep.subr.bf16.mxu0 0
        %1233 = vmatpush2.bf16.msra.mxu0 0
        %1234 = vmatprep.subr.bf16.mxu0 0
        %1235 = vmatpush2.bf16.msra.mxu0 0
        %1236 = vmatprep.subr.bf16.mxu0 0
        %1237 = vmatpush2.bf16.msra.mxu0 0
        %1238 = vmatprep.subr.bf16.mxu0 0
        %1239 = vmatpush2.bf16.msra.mxu0 0
        %1240 = vmatprep.subr.bf16.mxu0 0
        %1241 = vmatpush2.bf16.msra.mxu0 0
        %1242 = vmatprep.subr.bf16.mxu0 0
        %1243 = vmatpush2.bf16.msra.mxu0 0
        %1244 = vmatprep.subr.bf16.mxu0 0
        %1245 = vmatpush2.bf16.msra.mxu0 0
        %1246 = vmatprep.subr.bf16.mxu0 0
        %1247 = vmatpush2.bf16.msra.mxu0 0
        %1248 = vmatprep.mubr.bf16.mxu0 0
        %1249 = vmatmul.mubr.bf16.gmra.mxu0 %v1167
        %v1250 = vpop.f32.mrf.mxu0
        %v1251 = vadd.f32 0.0, %v1250
        %v1252 = vpop.f32.mrf.mxu0
        %v1253 = vpop.f32.mrf.mxu0
        %v1254 = vadd.f32 0.0, %v1253
        %v1255 = vpop.f32.mrf.mxu0
        %1256 = vdwg.mxu0
        %v1258 = vlaneseq
        %v1259 = vshrl.u32 %v1258, 7
        %v1260 = vsub.s32 0, %v1259
        %v1261 = vrot.slane %v516, %v1260
        %v1263 = vadd.f32 %v1251, %v1261
        %v1264 = vadd.f32 %v1254, %v1261
        %v1265 = vld [vmem:[%s7] sm:$0xff]
        %v1266 = vadd.f32 %v1263, %v1265
        %v1267 = vadd.f32 %v1264, %v1265
        %1268 = vst [vmem:[#allocation2] sm:$0xff] %v1266
        %1269 = vst [vmem:[#allocation2 + $0x10] sm:$0xff] %v1267
        %v1270 = vld [vmem:[%s7 + $0x8] sm:$0xff]
        %v1271 = vadd.f32 %v1261, %v1270
        %1272 = vst [vmem:[#allocation2 + $0x8] sm:$0xff] %v1271
        %1273 = vst [vmem:[#allocation2 + $0x18] sm:$0xff] %v1271
        %v1274 = vld [vmem:[#allocation2] sm:$0xff]
        %v1275 = vld [vmem:[#allocation2 + $0x8] sm:$0xff]
        %v1276 = vld [vmem:[#allocation2 + $0x10] sm:$0xff]
        %v1277 = vld [vmem:[#allocation2 + $0x18] sm:$0xff]
        %1278 = vadd.xlane.f32.xlu0 %v1274
        %v1279 = vpop.xlane.xlu0 %1278
        %1280 = vadd.xlane.f32.xlu0 %v1275
        %v1281 = vpop.xlane.xlu0 %1280
        %1282 = vadd.xlane.f32.xlu0 %v1276
        %v1283 = vpop.xlane.xlu0 %1282
        %1284 = vadd.xlane.f32.xlu0 %v1277
        %v1285 = vpop.xlane.xlu0 %1284
        %v1286 = vrcp.pop 128.0
        %v1287 = vmul.f32 %v1279, %v1286
        %v1288 = vmul.f32 %v1281, %v1286
        %v1289 = vmul.f32 %v1283, %v1286
        %v1290 = vmul.f32 %v1285, %v1286
        %v1291 = vsub.f32 %v1274, %v1287
        %v1292 = vsub.f32 %v1275, %v1288
        %v1293 = vsub.f32 %v1276, %v1289
        %v1294 = vsub.f32 %v1277, %v1290
        %v1295 = vmul.f32 %v1291, %v1291
        %v1296 = vmul.f32 %v1292, %v1292
        %v1297 = vmul.f32 %v1293, %v1293
        %v1298 = vmul.f32 %v1294, %v1294
        %1299 = vadd.xlane.f32.xlu0 %v1295
        %v1300 = vpop.xlane.xlu0 %1299
        %1301 = vadd.xlane.f32.xlu0 %v1296
        %v1302 = vpop.xlane.xlu0 %1301
        %1303 = vadd.xlane.f32.xlu0 %v1297
        %v1304 = vpop.xlane.xlu0 %1303
        %1305 = vadd.xlane.f32.xlu0 %v1298
        %v1306 = vpop.xlane.xlu0 %1305
        %v1307 = vmul.f32 %v1300, %v1286
        %v1308 = vmul.f32 %v1302, %v1286
        %v1309 = vmul.f32 %v1304, %v1286
        %v1310 = vmul.f32 %v1306, %v1286
        %v1311 = vadd.f32 %v1307, 1e-06
        %v1312 = vadd.f32 %v1308, 1e-06
        %v1313 = vadd.f32 %v1309, 1e-06
        %v1314 = vadd.f32 %v1310, 1e-06
        %v1315 = vrsqrt.pop %v1311
        %v1316 = vrsqrt.pop %v1312
        %v1317 = vrsqrt.pop %v1313
        %v1318 = vrsqrt.pop %v1314
        %v1319 = vmul.f32 %v1291, %v1315
        %v1320 = vmul.f32 %v1292, %v1316
        %v1321 = vmul.f32 %v1293, %v1317
        %v1322 = vmul.f32 %v1294, %v1318
        %v1323 = vlaneseq
        %v1324 = vshrl.u32 %v1323, 7
        %v1325 = vsub.s32 0, %v1324
        %v1326 = vrot.slane %v522, %v1325
        %v1327 = vmul.f32 %v1319, %v1326
        %v1328 = vmul.f32 %v1320, %v1326
        %v1329 = vmul.f32 %v1321, %v1326
        %v1330 = vmul.f32 %v1322, %v1326
        %v1331 = vlaneseq
        %v1332 = vshrl.u32 %v1331, 7
        %v1333 = vsub.s32 1, %v1332
        %v1334 = vrot.slane %v522, %v1333
        %v1335 = vadd.f32 %v1327, %v1334
        %v1336 = vadd.f32 %v1328, %v1334
        %v1337 = vadd.f32 %v1329, %v1334
        %v1338 = vadd.f32 %v1330, %v1334
        %v1339 = vpack.c.bf16 %v1336, %v1335
        %v1340 = vpack.c.bf16 %v1338, %v1337
        %v1342 = vlaneseq
        %v1343 = vshrl.u32 %v1342, 7
        %v1344 = vsub.s32 0, %v1343
        %v1345 = vrot.slane %v517, %v1344
        %v1346 = vlaneseq
        %v1347 = vshrl.u32 %v1346, 7
        %v1348 = vsub.s32 1, %v1347
        %v1349 = vrot.slane %v517, %v1348
        %v1350 = vlaneseq
        %v1351 = vshrl.u32 %v1350, 7
        %v1352 = vsub.s32 2, %v1351
        %v1353 = vrot.slane %v517, %v1352
        %v1389 = vunpack.c.l.b16 %v403
        %v1390 = vunpack.c.h.b16 %v403
        %v1391 = vunpack.c.l.b16 %v404
        %v1392 = vunpack.c.l.b16 %v405
        %v1393 = vunpack.c.h.b16 %v405
        %v1394 = vunpack.c.l.b16 %v406
        %v1395 = vunpack.c.l.b16 %v407
        %v1396 = vunpack.c.h.b16 %v407
        %v1397 = vunpack.c.l.b16 %v408
        %v1398 = vunpack.c.l.b16 %v409
        %v1399 = vunpack.c.h.b16 %v409
        %v1400 = vunpack.c.l.b16 %v410
        %v1401 = vunpack.c.l.b16 %v411
        %v1402 = vunpack.c.h.b16 %v411
        %v1403 = vunpack.c.l.b16 %v412
        %v1404 = vunpack.c.l.b16 %v413
        %v1405 = vunpack.c.h.b16 %v413
        %v1406 = vunpack.c.l.b16 %v414
        %v1407 = vunpack.c.l.b16 %v415
        %v1408 = vunpack.c.h.b16 %v415
        %v1409 = vunpack.c.l.b16 %v416
        %v1410 = vunpack.c.l.b16 %v417
        %v1411 = vunpack.c.h.b16 %v417
        %v1412 = vunpack.c.l.b16 %v418
        %v1413 = vunpack.c.l.b16 %v419
        %v1414 = vunpack.c.h.b16 %v419
        %v1415 = vunpack.c.l.b16 %v420
        %v1416 = vunpack.c.l.b16 %v421
        %v1417 = vunpack.c.h.b16 %v421
        %v1418 = vunpack.c.l.b16 %v422
        %v1419 = vunpack.c.l.b16 %v423
        %v1420 = vunpack.c.h.b16 %v423
        %v1421 = vunpack.c.l.b16 %v424
        %v1422 = vunpack.c.l.b16 %v425
        %v1423 = vunpack.c.h.b16 %v425
        %v1424 = vunpack.c.l.b16 %v426
        %v1425 = vunpack.c.l.b16 %v427
        %v1426 = vunpack.c.h.b16 %v427
        %v1427 = vunpack.c.l.b16 %v428
        %v1428 = vunpack.c.l.b16 %v429
        %v1429 = vunpack.c.h.b16 %v429
        %v1430 = vunpack.c.l.b16 %v430
        %v1431 = vunpack.c.l.b16 %v431
        %v1432 = vunpack.c.h.b16 %v431
        %v1433 = vunpack.c.l.b16 %v432
        %v1434 = vunpack.c.l.b16 %v433
        %v1435 = vunpack.c.h.b16 %v433
        %v1436 = vunpack.c.l.b16 %v434
        %v1437 = vpack.c.b16 %v1392, %v1389
        %v1438 = vpack.c.b16 %v1393, %v1390
        %v1439 = vpack.c.b16 %v1394, %v1391
        %v1440 = vpack.c.b16 %v1398, %v1395
        %v1441 = vpack.c.b16 %v1399, %v1396
        %v1442 = vpack.c.b16 %v1400, %v1397
        %v1443 = vpack.c.b16 %v1404, %v1401
        %v1444 = vpack.c.b16 %v1405, %v1402
        %v1445 = vpack.c.b16 %v1406, %v1403
        %v1446 = vpack.c.b16 %v1410, %v1407
        %v1447 = vpack.c.b16 %v1411, %v1408
        %v1448 = vpack.c.b16 %v1412, %v1409
        %v1449 = vpack.c.b16 %v1416, %v1413
        %v1450 = vpack.c.b16 %v1417, %v1414
        %v1451 = vpack.c.b16 %v1418, %v1415
        %v1452 = vpack.c.b16 %v1422, %v1419
        %v1453 = vpack.c.b16 %v1423, %v1420
        %v1454 = vpack.c.b16 %v1424, %v1421
        %v1455 = vpack.c.b16 %v1428, %v1425
        %v1456 = vpack.c.b16 %v1429, %v1426
        %v1457 = vpack.c.b16 %v1430, %v1427
        %v1458 = vpack.c.b16 %v1434, %v1431
        %v1459 = vpack.c.b16 %v1435, %v1432
        %v1460 = vpack.c.b16 %v1436, %v1433
        %1485 = vmatprep.subr.bf16.mxu0 %v1459
        %1486 = vmatpush1.bf16.msra.mxu0 %v1458
        %1487 = vmatprep.subr.bf16.mxu0 %v1456
        %1488 = vmatpush1.bf16.msra.mxu0 %v1455
        %1489 = vmatprep.subr.bf16.mxu0 %v1453
        %1490 = vmatpush1.bf16.msra.mxu0 %v1452
        %1491 = vmatprep.subr.bf16.mxu0 %v1450
        %1492 = vmatpush1.bf16.msra.mxu0 %v1449
        %1493 = vmatprep.subr.bf16.mxu0 %v1447
        %1494 = vmatpush1.bf16.msra.mxu0 %v1446
        %1495 = vmatprep.subr.bf16.mxu0 %v1444
        %1496 = vmatpush1.bf16.msra.mxu0 %v1443
        %1497 = vmatprep.subr.bf16.mxu0 %v1441
        %1498 = vmatpush1.bf16.msra.mxu0 %v1440
        %1499 = vmatprep.subr.bf16.mxu0 %v1438
        %1500 = vmatpush1.bf16.msra.mxu0 %v1437
        %1501 = vmatprep.subr.bf16.mxu0 0
        %1502 = vmatpush2.bf16.msra.mxu0 0
        %1503 = vmatprep.subr.bf16.mxu0 0
        %1504 = vmatpush2.bf16.msra.mxu0 0
        %1505 = vmatprep.subr.bf16.mxu0 0
        %1506 = vmatpush2.bf16.msra.mxu0 0
        %1507 = vmatprep.subr.bf16.mxu0 0
        %1508 = vmatpush2.bf16.msra.mxu0 0
        %1509 = vmatprep.subr.bf16.mxu0 0
        %1510 = vmatpush2.bf16.msra.mxu0 0
        %1511 = vmatprep.subr.bf16.mxu0 0
        %1512 = vmatpush2.bf16.msra.mxu0 0
        %1513 = vmatprep.subr.bf16.mxu0 0
        %1514 = vmatpush2.bf16.msra.mxu0 0
        %1515 = vmatprep.subr.bf16.mxu0 0
        %1516 = vmatpush2.bf16.msra.mxu0 0
        %1517 = vmatprep.mubr.bf16.mxu0 0
        %1518 = vmatmul.mubr.bf16.gmra.mxu0 %v1339
        %v1519 = vpop.f32.mrf.mxu0
        %v1520 = vadd.f32 %v1345, %v1519
        %v1521 = vpop.f32.mrf.mxu0
        %v1522 = vadd.f32 %v1349, %v1521
        %v1523 = vpop.f32.mrf.mxu0
        %v1524 = vadd.f32 %v1345, %v1523
        %v1525 = vpop.f32.mrf.mxu0
        %v1526 = vadd.f32 %v1349, %v1525
        %1527 = vmatprep.mubr.bf16.mxu0 0
        %1528 = vmatmul.mubr.bf16.gmra.mxu0 %v1340
        %v1529 = vpop.f32.mrf.mxu0
        %v1530 = vadd.f32 %v1345, %v1529
        %v1531 = vpop.f32.mrf.mxu0
        %v1532 = vadd.f32 %v1349, %v1531
        %v1533 = vpop.f32.mrf.mxu0
        %v1534 = vadd.f32 %v1345, %v1533
        %v1535 = vpop.f32.mrf.mxu0
        %v1536 = vadd.f32 %v1349, %v1535
        %1537 = vdwg.mxu0
        %1538 = vmatprep.subr.bf16.mxu0 0
        %1539 = vmatpush1.bf16.msra.mxu0 %v1460
        %1540 = vmatprep.subr.bf16.mxu0 0
        %1541 = vmatpush1.bf16.msra.mxu0 %v1457
        %1542 = vmatprep.subr.bf16.mxu0 0
        %1543 = vmatpush1.bf16.msra.mxu0 %v1454
        %1544 = vmatprep.subr.bf16.mxu0 0
        %1545 = vmatpush1.bf16.msra.mxu0 %v1451
        %1546 = vmatprep.subr.bf16.mxu0 0
        %1547 = vmatpush1.bf16.msra.mxu0 %v1448
        %1548 = vmatprep.subr.bf16.mxu0 0
        %1549 = vmatpush1.bf16.msra.mxu0 %v1445
        %1550 = vmatprep.subr.bf16.mxu0 0
        %1551 = vmatpush1.bf16.msra.mxu0 %v1442
        %1552 = vmatprep.subr.bf16.mxu0 0
        %1553 = vmatpush1.bf16.msra.mxu0 %v1439
        %1554 = vmatprep.subr.bf16.mxu0 0
        %1555 = vmatpush2.bf16.msra.mxu0 0
        %1556 = vmatprep.subr.bf16.mxu0 0
        %1557 = vmatpush2.bf16.msra.mxu0 0
        %1558 = vmatprep.subr.bf16.mxu0 0
        %1559 = vmatpush2.bf16.msra.mxu0 0
        %1560 = vmatprep.subr.bf16.mxu0 0
        %1561 = vmatpush2.bf16.msra.mxu0 0
        %1562 = vmatprep.subr.bf16.mxu0 0
        %1563 = vmatpush2.bf16.msra.mxu0 0
        %1564 = vmatprep.subr.bf16.mxu0 0
        %1565 = vmatpush2.bf16.msra.mxu0 0
        %1566 = vmatprep.subr.bf16.mxu0 0
        %1567 = vmatpush2.bf16.msra.mxu0 0
        %1568 = vmatprep.subr.bf16.mxu0 0
        %1569 = vmatpush2.bf16.msra.mxu0 0
        %1570 = vmatprep.mubr.bf16.mxu0 0
        %1571 = vmatmul.mubr.bf16.gmra.mxu0 %v1339
        %v1572 = vpop.f32.mrf.mxu0
        %v1573 = vadd.f32 %v1353, %v1572
        %v1574 = vpop.f32.mrf.mxu0
        %v1575 = vpop.f32.mrf.mxu0
        %v1576 = vadd.f32 %v1353, %v1575
        %v1577 = vpop.f32.mrf.mxu0
        %1578 = vmatprep.mubr.bf16.mxu0 0
        %1579 = vmatmul.mubr.bf16.gmra.mxu0 %v1340
        %v1580 = vpop.f32.mrf.mxu0
        %v1581 = vadd.f32 %v1353, %v1580
        %v1582 = vpop.f32.mrf.mxu0
        %v1583 = vpop.f32.mrf.mxu0
        %v1584 = vadd.f32 %v1353, %v1583
        %v1585 = vpop.f32.mrf.mxu0
        %1586 = vdwg.mxu0
        %v1587 = vpack.c.bf16 %v1524, %v1520
        %v1588 = vpack.c.bf16 %v1526, %v1522
        %v1589 = vpack.c.bf16 %v1576, %v1573
        %v1590 = vpack.c.bf16 %v1534, %v1530
        %v1591 = vpack.c.bf16 %v1536, %v1532
        %v1592 = vpack.c.bf16 %v1584, %v1581
        %v1593 = vld [vmem:[%s8] sm:$0xff]
        %v1594 = vld [vmem:[%s8 + $0x8] sm:$0xff]
        %vm1595 = vcmask 130048
        %v1597 = vsel %vm1595, %v1587, 0
        %v1600 = vsel %vm1595, %v1588, 0
        %1602 = vmatprep.subr.bf16.mxu0 0
        %1603 = vmatpush1.bf16.xpose.msra.mxu0 0
        %1604 = vmatprep.subr.bf16.mxu0 0
        %1605 = vmatpush1.bf16.xpose.msra.mxu0 0
        %1606 = vmatprep.subr.bf16.mxu0 0
        %1607 = vmatpush1.bf16.xpose.msra.mxu0 0
        %1608 = vmatprep.subr.bf16.mxu0 0
        %1609 = vmatpush1.bf16.xpose.msra.mxu0 0
        %1610 = vmatprep.subr.bf16.mxu0 0
        %1611 = vmatpush1.bf16.xpose.msra.mxu0 0
        %1612 = vmatprep.subr.bf16.mxu0 0
        %1613 = vmatpush1.bf16.xpose.msra.mxu0 0
        %1614 = vmatprep.subr.bf16.mxu0 0
        %1615 = vmatpush1.bf16.xpose.msra.mxu0 0
        %1616 = vmatprep.subr.bf16.mxu0 0
        %1617 = vmatpush1.bf16.xpose.msra.mxu0 %v1600
        %1618 = vmatprep.subr.bf16.mxu0 0
        %1619 = vmatpush2.bf16.xpose.msra.mxu0 0
        %1620 = vmatprep.subr.bf16.mxu0 0
        %1621 = vmatpush2.bf16.xpose.msra.mxu0 0
        %1622 = vmatprep.subr.bf16.mxu0 0
        %1623 = vmatpush2.bf16.xpose.msra.mxu0 0
        %1624 = vmatprep.subr.bf16.mxu0 0
        %1625 = vmatpush2.bf16.xpose.msra.mxu0 0
        %1626 = vmatprep.subr.bf16.mxu0 0
        %1627 = vmatpush2.bf16.xpose.msra.mxu0 0
        %1628 = vmatprep.subr.bf16.mxu0 0
        %1629 = vmatpush2.bf16.xpose.msra.mxu0 0
        %1630 = vmatprep.subr.bf16.mxu0 0
        %1631 = vmatpush2.bf16.xpose.msra.mxu0 0
        %1632 = vmatprep.subr.bf16.mxu0 0
        %1633 = vmatpush2.bf16.xpose.msra.mxu0 0
        %1634 = vmatprep.mubr.bf16.mxu0 0
        %1635 = vmatmul.mubr.bf16.gmra.mxu0 %v1597
        %v1636 = vpop.f32.mrf.mxu0
        %v1637 = vadd.f32 0.0, %v1636
        %v1638 = vpop.f32.mrf.mxu0
        %v1639 = vpop.f32.mrf.mxu0
        %v1640 = vadd.f32 0.0, %v1639
        %v1641 = vpop.f32.mrf.mxu0
        %1642 = vdwg.mxu0
        %v1644 = vsel %vm1595, %v1590, 0
        %v1647 = vsel %vm1595, %v1591, 0
        %1649 = vmatprep.subr.bf16.mxu0 0
        %1650 = vmatpush1.bf16.xpose.msra.mxu0 0
        %1651 = vmatprep.subr.bf16.mxu0 0
        %1652 = vmatpush1.bf16.xpose.msra.mxu0 0
        %1653 = vmatprep.subr.bf16.mxu0 0
        %1654 = vmatpush1.bf16.xpose.msra.mxu0 0
        %1655 = vmatprep.subr.bf16.mxu0 0
        %1656 = vmatpush1.bf16.xpose.msra.mxu0 0
        %1657 = vmatprep.subr.bf16.mxu0 0
        %1658 = vmatpush1.bf16.xpose.msra.mxu0 0
        %1659 = vmatprep.subr.bf16.mxu0 0
        %1660 = vmatpush1.bf16.xpose.msra.mxu0 0
        %1661 = vmatprep.subr.bf16.mxu0 0
        %1662 = vmatpush1.bf16.xpose.msra.mxu0 0
        %1663 = vmatprep.subr.bf16.mxu0 0
        %1664 = vmatpush1.bf16.xpose.msra.mxu0 %v1647
        %1665 = vmatprep.subr.bf16.mxu0 0
        %1666 = vmatpush2.bf16.xpose.msra.mxu0 0
        %1667 = vmatprep.subr.bf16.mxu0 0
        %1668 = vmatpush2.bf16.xpose.msra.mxu0 0
        %1669 = vmatprep.subr.bf16.mxu0 0
        %1670 = vmatpush2.bf16.xpose.msra.mxu0 0
        %1671 = vmatprep.subr.bf16.mxu0 0
        %1672 = vmatpush2.bf16.xpose.msra.mxu0 0
        %1673 = vmatprep.subr.bf16.mxu0 0
        %1674 = vmatpush2.bf16.xpose.msra.mxu0 0
        %1675 = vmatprep.subr.bf16.mxu0 0
        %1676 = vmatpush2.bf16.xpose.msra.mxu0 0
        %1677 = vmatprep.subr.bf16.mxu0 0
        %1678 = vmatpush2.bf16.xpose.msra.mxu0 0
        %1679 = vmatprep.subr.bf16.mxu0 0
        %1680 = vmatpush2.bf16.xpose.msra.mxu0 0
        %1681 = vmatprep.mubr.bf16.mxu0 0
        %1682 = vmatmul.mubr.bf16.gmra.mxu0 %v1644
        %v1683 = vpop.f32.mrf.mxu0
        %v1684 = vadd.f32 0.0, %v1683
        %v1685 = vpop.f32.mrf.mxu0
        %v1686 = vpop.f32.mrf.mxu0
        %v1687 = vadd.f32 0.0, %v1686
        %v1688 = vpop.f32.mrf.mxu0
        %1689 = vdwg.mxu0
        %v1690 = vmul.f32 %v1637, 0.25
        %v1691 = vmul.f32 %v1640, 0.25
        %v1692 = vmul.f32 %v1684, 0.25
        %v1693 = vmul.f32 %v1687, 0.25
        %v1694 = vadd.f32 %v1690, %v1593
        %v1695 = vadd.f32 %v1691, %v1594
        %v1696 = vadd.f32 %v1692, %v1593
        %v1697 = vadd.f32 %v1693, %v1594
        %v1698 = vsel %vm1595, %v1694, -inf
        %1699 = vmax.xlane.f32.xlu0 %v1698
        %v1700 = vpop.xlane.xlu0 %1699
        %v1701 = vsel %vm1595, %v1695, -inf
        %1702 = vmax.xlane.f32.xlu0 %v1701
        %v1703 = vpop.xlane.xlu0 %1702
        %v1704 = vsel %vm1595, %v1696, -inf
        %1705 = vmax.xlane.f32.xlu0 %v1704
        %v1706 = vpop.xlane.xlu0 %1705
        %v1707 = vsel %vm1595, %v1697, -inf
        %1708 = vmax.xlane.f32.xlu0 %v1707
        %v1709 = vpop.xlane.xlu0 %1708
        %v1710 = vsub.f32 %v1694, %v1700
        %v1711 = vsub.f32 %v1695, %v1703
        %v1712 = vsub.f32 %v1696, %v1706
        %v1713 = vsub.f32 %v1697, %v1709
        %v1714 = vmul.f32 %v1710, 1.442695
        %v1715 = vpow.pop %v1714
        %v1716 = vmul.f32 %v1711, 1.442695
        %v1717 = vpow.pop %v1716
        %v1718 = vmul.f32 %v1712, 1.442695
        %v1719 = vpow.pop %v1718
        %v1720 = vmul.f32 %v1713, 1.442695
        %v1721 = vpow.pop %v1720
        %v1722 = vsel %vm1595, %v1715, 0.0
        %1723 = vadd.xlane.f32.xlu0 %v1722
        %v1724 = vpop.xlane.xlu0 %1723
        %v1725 = vsel %vm1595, %v1717, 0.0
        %1726 = vadd.xlane.f32.xlu0 %v1725
        %v1727 = vpop.xlane.xlu0 %1726
        %v1728 = vsel %vm1595, %v1719, 0.0
        %1729 = vadd.xlane.f32.xlu0 %v1728
        %v1730 = vpop.xlane.xlu0 %1729
        %v1731 = vsel %vm1595, %v1721, 0.0
        %1732 = vadd.xlane.f32.xlu0 %v1731
        %v1733 = vpop.xlane.xlu0 %1732
        %v1734 = vrcp.pop %v1724
        %v1735 = vrcp.pop %v1727
        %v1736 = vrcp.pop %v1730
        %v1737 = vrcp.pop %v1733
        %v1738 = vmul.f32 %v1715, %v1734
        %v1739 = vmul.f32 %v1717, %v1735
        %v1740 = vmul.f32 %v1719, %v1736
        %v1741 = vmul.f32 %v1721, %v1737
        %v1744 = vunpack.c.l.b16 %v435
        %v1745 = vunpack.c.l.b16 %v436
        %v1746 = vpack.c.b16 %v1745, %v1744
        %v1749 = vsel %vm1595, %v1589, 0
        %v1752 = vsel %vm1595, %v1592, 0
        %1754 = vmatprep.subr.bf16.mxu0 0
        %1755 = vmatpush1.bf16.msra.mxu0 0
        %1756 = vmatprep.subr.bf16.mxu0 0
        %1757 = vmatpush1.bf16.msra.mxu0 0
        %1758 = vmatprep.subr.bf16.mxu0 0
        %1759 = vmatpush1.bf16.msra.mxu0 0
        %1760 = vmatprep.subr.bf16.mxu0 0
        %1761 = vmatpush1.bf16.msra.mxu0 0
        %1762 = vmatprep.subr.bf16.mxu0 0
        %1763 = vmatpush1.bf16.msra.mxu0 0
        %1764 = vmatprep.subr.bf16.mxu0 0
        %1765 = vmatpush1.bf16.msra.mxu0 0
        %1766 = vmatprep.subr.bf16.mxu0 0
        %1767 = vmatpush1.bf16.msra.mxu0 0
        %1768 = vmatprep.subr.bf16.mxu0 0
        %1769 = vmatpush1.bf16.msra.mxu0 %v1746
        %1770 = vmatprep.subr.bf16.mxu0 0
        %1771 = vmatpush2.bf16.msra.mxu0 0
        %1772 = vmatprep.subr.bf16.mxu0 0
        %1773 = vmatpush2.bf16.msra.mxu0 0
        %1774 = vmatprep.subr.bf16.mxu0 0
        %1775 = vmatpush2.bf16.msra.mxu0 0
        %1776 = vmatprep.subr.bf16.mxu0 0
        %1777 = vmatpush2.bf16.msra.mxu0 0
        %1778 = vmatprep.subr.bf16.mxu0 0
        %1779 = vmatpush2.bf16.msra.mxu0 0
        %1780 = vmatprep.subr.bf16.mxu0 0
        %1781 = vmatpush2.bf16.msra.mxu0 0
        %1782 = vmatprep.subr.bf16.mxu0 0
        %1783 = vmatpush2.bf16.msra.mxu0 0
        %1784 = vmatprep.subr.bf16.mxu0 0
        %1785 = vmatpush2.bf16.msra.mxu0 0
        %1786 = vmatprep.mubr.bf16.mxu0 0
        %1787 = vmatmul.mubr.bf16.gmra.mxu0 %v1749
        %v1788 = vpop.f32.mrf.mxu0
        %v1789 = vadd.f32 0.0, %v1788
        %v1790 = vpop.f32.mrf.mxu0
        %v1791 = vpop.f32.mrf.mxu0
        %v1792 = vadd.f32 0.0, %v1791
        %v1793 = vpop.f32.mrf.mxu0
        %1794 = vmatprep.mubr.bf16.mxu0 0
        %1795 = vmatmul.mubr.bf16.gmra.mxu0 %v1752
        %v1796 = vpop.f32.mrf.mxu0
        %v1797 = vadd.f32 0.0, %v1796
        %v1798 = vpop.f32.mrf.mxu0
        %v1799 = vpop.f32.mrf.mxu0
        %v1800 = vadd.f32 0.0, %v1799
        %v1801 = vpop.f32.mrf.mxu0
        %1802 = vdwg.mxu0
        %v1803 = vpack.c.bf16 %v1792, %v1789
        %v1804 = vpack.c.bf16 %v1800, %v1797
        %v1805 = vpack.c.bf16 %v1739, %v1738
        %v1806 = vpack.c.bf16 %v1741, %v1740
        %1808 = vrot.lane.b32.xlu0 %v1587, 112
        %v1809 = vpop.permute.xlu0 %1808
        %1811 = vrot.lane.b32.xlu0 %v1588, 112
        %v1812 = vpop.permute.xlu0 %1811
        %v1814 = vsel %vm1595, %v1809, 0
        %v1817 = vsel %vm1595, %v1812, 0
        %1819 = vmatprep.subr.bf16.mxu0 0
        %1820 = vmatpush1.bf16.xpose.msra.mxu0 0
        %1821 = vmatprep.subr.bf16.mxu0 0
        %1822 = vmatpush1.bf16.xpose.msra.mxu0 0
        %1823 = vmatprep.subr.bf16.mxu0 0
        %1824 = vmatpush1.bf16.xpose.msra.mxu0 0
        %1825 = vmatprep.subr.bf16.mxu0 0
        %1826 = vmatpush1.bf16.xpose.msra.mxu0 0
        %1827 = vmatprep.subr.bf16.mxu0 0
        %1828 = vmatpush1.bf16.xpose.msra.mxu0 0
        %1829 = vmatprep.subr.bf16.mxu0 0
        %1830 = vmatpush1.bf16.xpose.msra.mxu0 0
        %1831 = vmatprep.subr.bf16.mxu0 0
        %1832 = vmatpush1.bf16.xpose.msra.mxu0 0
        %1833 = vmatprep.subr.bf16.mxu0 0
        %1834 = vmatpush1.bf16.xpose.msra.mxu0 %v1817
        %1835 = vmatprep.subr.bf16.mxu0 0
        %1836 = vmatpush2.bf16.xpose.msra.mxu0 0
        %1837 = vmatprep.subr.bf16.mxu0 0
        %1838 = vmatpush2.bf16.xpose.msra.mxu0 0
        %1839 = vmatprep.subr.bf16.mxu0 0
        %1840 = vmatpush2.bf16.xpose.msra.mxu0 0
        %1841 = vmatprep.subr.bf16.mxu0 0
        %1842 = vmatpush2.bf16.xpose.msra.mxu0 0
        %1843 = vmatprep.subr.bf16.mxu0 0
        %1844 = vmatpush2.bf16.xpose.msra.mxu0 0
        %1845 = vmatprep.subr.bf16.mxu0 0
        %1846 = vmatpush2.bf16.xpose.msra.mxu0 0
        %1847 = vmatprep.subr.bf16.mxu0 0
        %1848 = vmatpush2.bf16.xpose.msra.mxu0 0
        %1849 = vmatprep.subr.bf16.mxu0 0
        %1850 = vmatpush2.bf16.xpose.msra.mxu0 0
        %1851 = vmatprep.mubr.bf16.mxu0 0
        %1852 = vmatmul.mubr.bf16.gmra.mxu0 %v1814
        %v1853 = vpop.f32.mrf.mxu0
        %v1854 = vadd.f32 0.0, %v1853
        %v1855 = vpop.f32.mrf.mxu0
        %v1856 = vpop.f32.mrf.mxu0
        %v1857 = vadd.f32 0.0, %v1856
        %v1858 = vpop.f32.mrf.mxu0
        %1859 = vdwg.mxu0
        %1861 = vrot.lane.b32.xlu0 %v1590, 112
        %v1862 = vpop.permute.xlu0 %1861
        %1864 = vrot.lane.b32.xlu0 %v1591, 112
        %v1865 = vpop.permute.xlu0 %1864
        %v1867 = vsel %vm1595, %v1862, 0
        %v1870 = vsel %vm1595, %v1865, 0
        %1872 = vmatprep.subr.bf16.mxu0 0
        %1873 = vmatpush1.bf16.xpose.msra.mxu0 0
        %1874 = vmatprep.subr.bf16.mxu0 0
        %1875 = vmatpush1.bf16.xpose.msra.mxu0 0
        %1876 = vmatprep.subr.bf16.mxu0 0
        %1877 = vmatpush1.bf16.xpose.msra.mxu0 0
        %1878 = vmatprep.subr.bf16.mxu0 0
        %1879 = vmatpush1.bf16.xpose.msra.mxu0 0
        %1880 = vmatprep.subr.bf16.mxu0 0
        %1881 = vmatpush1.bf16.xpose.msra.mxu0 0
        %1882 = vmatprep.subr.bf16.mxu0 0
        %1883 = vmatpush1.bf16.xpose.msra.mxu0 0
        %1884 = vmatprep.subr.bf16.mxu0 0
        %1885 = vmatpush1.bf16.xpose.msra.mxu0 0
        %1886 = vmatprep.subr.bf16.mxu0 0
        %1887 = vmatpush1.bf16.xpose.msra.mxu0 %v1870
        %1888 = vmatprep.subr.bf16.mxu0 0
        %1889 = vmatpush2.bf16.xpose.msra.mxu0 0
        %1890 = vmatprep.subr.bf16.mxu0 0
        %1891 = vmatpush2.bf16.xpose.msra.mxu0 0
        %1892 = vmatprep.subr.bf16.mxu0 0
        %1893 = vmatpush2.bf16.xpose.msra.mxu0 0
        %1894 = vmatprep.subr.bf16.mxu0 0
        %1895 = vmatpush2.bf16.xpose.msra.mxu0 0
        %1896 = vmatprep.subr.bf16.mxu0 0
        %1897 = vmatpush2.bf16.xpose.msra.mxu0 0
        %1898 = vmatprep.subr.bf16.mxu0 0
        %1899 = vmatpush2.bf16.xpose.msra.mxu0 0
        %1900 = vmatprep.subr.bf16.mxu0 0
        %1901 = vmatpush2.bf16.xpose.msra.mxu0 0
        %1902 = vmatprep.subr.bf16.mxu0 0
        %1903 = vmatpush2.bf16.xpose.msra.mxu0 0
        %1904 = vmatprep.mubr.bf16.mxu0 0
        %1905 = vmatmul.mubr.bf16.gmra.mxu0 %v1867
        %v1906 = vpop.f32.mrf.mxu0
        %v1907 = vadd.f32 0.0, %v1906
        %v1908 = vpop.f32.mrf.mxu0
        %v1909 = vpop.f32.mrf.mxu0
        %v1910 = vadd.f32 0.0, %v1909
        %v1911 = vpop.f32.mrf.mxu0
        %1912 = vdwg.mxu0
        %v1913 = vmul.f32 %v1854, 0.25
        %v1914 = vmul.f32 %v1857, 0.25
        %v1915 = vmul.f32 %v1907, 0.25
        %v1916 = vmul.f32 %v1910, 0.25
        %v1917 = vadd.f32 %v1913, %v1593
        %v1918 = vadd.f32 %v1914, %v1594
        %v1919 = vadd.f32 %v1915, %v1593
        %v1920 = vadd.f32 %v1916, %v1594
        %v1921 = vsel %vm1595, %v1917, -inf
        %1922 = vmax.xlane.f32.xlu0 %v1921
        %v1923 = vpop.xlane.xlu0 %1922
        %v1924 = vsel %vm1595, %v1918, -inf
        %1925 = vmax.xlane.f32.xlu0 %v1924
        %v1926 = vpop.xlane.xlu0 %1925
        %v1927 = vsel %vm1595, %v1919, -inf
        %1928 = vmax.xlane.f32.xlu0 %v1927
        %v1929 = vpop.xlane.xlu0 %1928
        %v1930 = vsel %vm1595, %v1920, -inf
        %1931 = vmax.xlane.f32.xlu0 %v1930
        %v1932 = vpop.xlane.xlu0 %1931
        %v1933 = vsub.f32 %v1917, %v1923
        %v1934 = vsub.f32 %v1918, %v1926
        %v1935 = vsub.f32 %v1919, %v1929
        %v1936 = vsub.f32 %v1920, %v1932
        %v1937 = vmul.f32 %v1933, 1.442695
        %v1938 = vpow.pop %v1937
        %v1939 = vmul.f32 %v1934, 1.442695
        %v1940 = vpow.pop %v1939
        %v1941 = vmul.f32 %v1935, 1.442695
        %v1942 = vpow.pop %v1941
        %v1943 = vmul.f32 %v1936, 1.442695
        %v1944 = vpow.pop %v1943
        %v1945 = vsel %vm1595, %v1938, 0.0
        %1946 = vadd.xlane.f32.xlu0 %v1945
        %v1947 = vpop.xlane.xlu0 %1946
        %v1948 = vsel %vm1595, %v1940, 0.0
        %1949 = vadd.xlane.f32.xlu0 %v1948
        %v1950 = vpop.xlane.xlu0 %1949
        %v1951 = vsel %vm1595, %v1942, 0.0
        %1952 = vadd.xlane.f32.xlu0 %v1951
        %v1953 = vpop.xlane.xlu0 %1952
        %v1954 = vsel %vm1595, %v1944, 0.0
        %1955 = vadd.xlane.f32.xlu0 %v1954
        %v1956 = vpop.xlane.xlu0 %1955
        %v1957 = vrcp.pop %v1947
        %v1958 = vrcp.pop %v1950
        %v1959 = vrcp.pop %v1953
        %v1960 = vrcp.pop %v1956
        %v1961 = vmul.f32 %v1938, %v1957
        %v1962 = vmul.f32 %v1940, %v1958
        %v1963 = vmul.f32 %v1942, %v1959
        %v1964 = vmul.f32 %v1944, %v1960
        %1967 = vrot.lane.b32.xlu0 %v1589, 112
        %v1968 = vpop.permute.xlu0 %1967
        %1969 = vrot.lane.b32.xlu0 %v1592, 112
        %v1970 = vpop.permute.xlu0 %1969
        %v1973 = vunpack.c.l.b16 %v437
        %v1974 = vunpack.c.l.b16 %v438
        %v1975 = vpack.c.b16 %v1974, %v1973
        %v1978 = vsel %vm1595, %v1968, 0
        %v1981 = vsel %vm1595, %v1970, 0
        %1983 = vmatprep.subr.bf16.mxu0 0
        %1984 = vmatpush1.bf16.msra.mxu0 0
        %1985 = vmatprep.subr.bf16.mxu0 0
        %1986 = vmatpush1.bf16.msra.mxu0 0
        %1987 = vmatprep.subr.bf16.mxu0 0
        %1988 = vmatpush1.bf16.msra.mxu0 0
        %1989 = vmatprep.subr.bf16.mxu0 0
        %1990 = vmatpush1.bf16.msra.mxu0 0
        %1991 = vmatprep.subr.bf16.mxu0 0
        %1992 = vmatpush1.bf16.msra.mxu0 0
        %1993 = vmatprep.subr.bf16.mxu0 0
        %1994 = vmatpush1.bf16.msra.mxu0 0
        %1995 = vmatprep.subr.bf16.mxu0 0
        %1996 = vmatpush1.bf16.msra.mxu0 0
        %1997 = vmatprep.subr.bf16.mxu0 0
        %1998 = vmatpush1.bf16.msra.mxu0 %v1975
        %1999 = vmatprep.subr.bf16.mxu0 0
        %2000 = vmatpush2.bf16.msra.mxu0 0
        %2001 = vmatprep.subr.bf16.mxu0 0
        %2002 = vmatpush2.bf16.msra.mxu0 0
        %2003 = vmatprep.subr.bf16.mxu0 0
        %2004 = vmatpush2.bf16.msra.mxu0 0
        %2005 = vmatprep.subr.bf16.mxu0 0
        %2006 = vmatpush2.bf16.msra.mxu0 0
        %2007 = vmatprep.subr.bf16.mxu0 0
        %2008 = vmatpush2.bf16.msra.mxu0 0
        %2009 = vmatprep.subr.bf16.mxu0 0
        %2010 = vmatpush2.bf16.msra.mxu0 0
        %2011 = vmatprep.subr.bf16.mxu0 0
        %2012 = vmatpush2.bf16.msra.mxu0 0
        %2013 = vmatprep.subr.bf16.mxu0 0
        %2014 = vmatpush2.bf16.msra.mxu0 0
        %2015 = vmatprep.mubr.bf16.mxu0 0
        %2016 = vmatmul.mubr.bf16.gmra.mxu0 %v1978
        %v2017 = vpop.f32.mrf.mxu0
        %v2018 = vadd.f32 0.0, %v2017
        %v2019 = vpop.f32.mrf.mxu0
        %v2020 = vpop.f32.mrf.mxu0
        %v2021 = vadd.f32 0.0, %v2020
        %v2022 = vpop.f32.mrf.mxu0
        %2023 = vmatprep.mubr.bf16.mxu0 0
        %2024 = vmatmul.mubr.bf16.gmra.mxu0 %v1981
        %v2025 = vpop.f32.mrf.mxu0
        %v2026 = vadd.f32 0.0, %v2025
        %v2027 = vpop.f32.mrf.mxu0
        %v2028 = vpop.f32.mrf.mxu0
        %v2029 = vadd.f32 0.0, %v2028
        %v2030 = vpop.f32.mrf.mxu0
        %2031 = vdwg.mxu0
        %v2032 = vpack.c.bf16 %v2021, %v2018
        %v2033 = vpack.c.bf16 %v2029, %v2026
        %v2034 = vpack.c.bf16 %v1962, %v1961
        %v2035 = vpack.c.bf16 %v1964, %v1963
        %v2037 = vsel %vm1595, %v2034, 0
        %2039 = vmatprep.subr.bf16.mxu0 0
        %2040 = vmatpush1.bf16.msra.mxu0 0
        %2041 = vmatprep.subr.bf16.mxu0 0
        %2042 = vmatpush1.bf16.msra.mxu0 0
        %2043 = vmatprep.subr.bf16.mxu0 0
        %2044 = vmatpush1.bf16.msra.mxu0 0
        %2045 = vmatprep.subr.bf16.mxu0 0
        %2046 = vmatpush1.bf16.msra.mxu0 0
        %2047 = vmatprep.subr.bf16.mxu0 0
        %2048 = vmatpush1.bf16.msra.mxu0 0
        %2049 = vmatprep.subr.bf16.mxu0 0
        %2050 = vmatpush1.bf16.msra.mxu0 0
        %2051 = vmatprep.subr.bf16.mxu0 0
        %2052 = vmatpush1.bf16.msra.mxu0 0
        %2053 = vmatprep.subr.bf16.mxu0 0
        %2054 = vmatpush1.bf16.msra.mxu0 %v2032
        %2055 = vmatprep.subr.bf16.mxu0 0
        %2056 = vmatpush2.bf16.msra.mxu0 0
        %2057 = vmatprep.subr.bf16.mxu0 0
        %2058 = vmatpush2.bf16.msra.mxu0 0
        %2059 = vmatprep.subr.bf16.mxu0 0
        %2060 = vmatpush2.bf16.msra.mxu0 0
        %2061 = vmatprep.subr.bf16.mxu0 0
        %2062 = vmatpush2.bf16.msra.mxu0 0
        %2063 = vmatprep.subr.bf16.mxu0 0
        %2064 = vmatpush2.bf16.msra.mxu0 0
        %2065 = vmatprep.subr.bf16.mxu0 0
        %2066 = vmatpush2.bf16.msra.mxu0 0
        %2067 = vmatprep.subr.bf16.mxu0 0
        %2068 = vmatpush2.bf16.msra.mxu0 0
        %2069 = vmatprep.subr.bf16.mxu0 0
        %2070 = vmatpush2.bf16.msra.mxu0 0
        %2071 = vmatprep.mubr.bf16.mxu0 0
        %2072 = vmatmul.mubr.bf16.gmra.mxu0 %v2037
        %v2073 = vpop.f32.mrf.mxu0
        %v2074 = vadd.f32 0.0, %v2073
        %v2075 = vpop.f32.mrf.mxu0
        %v2076 = vpop.f32.mrf.mxu0
        %v2077 = vadd.f32 0.0, %v2076
        %v2078 = vpop.f32.mrf.mxu0
        %2079 = vdwg.mxu0
        %v2081 = vsel %vm1595, %v2035, 0
        %2083 = vmatprep.subr.bf16.mxu0 0
        %2084 = vmatpush1.bf16.msra.mxu0 0
        %2085 = vmatprep.subr.bf16.mxu0 0
        %2086 = vmatpush1.bf16.msra.mxu0 0
        %2087 = vmatprep.subr.bf16.mxu0 0
        %2088 = vmatpush1.bf16.msra.mxu0 0
        %2089 = vmatprep.subr.bf16.mxu0 0
        %2090 = vmatpush1.bf16.msra.mxu0 0
        %2091 = vmatprep.subr.bf16.mxu0 0
        %2092 = vmatpush1.bf16.msra.mxu0 0
        %2093 = vmatprep.subr.bf16.mxu0 0
        %2094 = vmatpush1.bf16.msra.mxu0 0
        %2095 = vmatprep.subr.bf16.mxu0 0
        %2096 = vmatpush1.bf16.msra.mxu0 0
        %2097 = vmatprep.subr.bf16.mxu0 0
        %2098 = vmatpush1.bf16.msra.mxu0 %v2033
        %2099 = vmatprep.subr.bf16.mxu0 0
        %2100 = vmatpush2.bf16.msra.mxu0 0
        %2101 = vmatprep.subr.bf16.mxu0 0
        %2102 = vmatpush2.bf16.msra.mxu0 0
        %2103 = vmatprep.subr.bf16.mxu0 0
        %2104 = vmatpush2.bf16.msra.mxu0 0
        %2105 = vmatprep.subr.bf16.mxu0 0
        %2106 = vmatpush2.bf16.msra.mxu0 0
        %2107 = vmatprep.subr.bf16.mxu0 0
        %2108 = vmatpush2.bf16.msra.mxu0 0
        %2109 = vmatprep.subr.bf16.mxu0 0
        %2110 = vmatpush2.bf16.msra.mxu0 0
        %2111 = vmatprep.subr.bf16.mxu0 0
        %2112 = vmatpush2.bf16.msra.mxu0 0
        %2113 = vmatprep.subr.bf16.mxu0 0
        %2114 = vmatpush2.bf16.msra.mxu0 0
        %2115 = vmatprep.mubr.bf16.mxu0 0
        %2116 = vmatmul.mubr.bf16.gmra.mxu0 %v2081
        %v2117 = vpop.f32.mrf.mxu0
        %v2118 = vadd.f32 0.0, %v2117
        %v2119 = vpop.f32.mrf.mxu0
        %v2120 = vpop.f32.mrf.mxu0
        %v2121 = vadd.f32 0.0, %v2120
        %v2122 = vpop.f32.mrf.mxu0
        %2123 = vdwg.mxu0
        %v2125 = vsel %vm1595, %v1805, 0
        %2127 = vmatprep.subr.bf16.mxu0 0
        %2128 = vmatpush1.bf16.msra.mxu0 0
        %2129 = vmatprep.subr.bf16.mxu0 0
        %2130 = vmatpush1.bf16.msra.mxu0 0
        %2131 = vmatprep.subr.bf16.mxu0 0
        %2132 = vmatpush1.bf16.msra.mxu0 0
        %2133 = vmatprep.subr.bf16.mxu0 0
        %2134 = vmatpush1.bf16.msra.mxu0 0
        %2135 = vmatprep.subr.bf16.mxu0 0
        %2136 = vmatpush1.bf16.msra.mxu0 0
        %2137 = vmatprep.subr.bf16.mxu0 0
        %2138 = vmatpush1.bf16.msra.mxu0 0
        %2139 = vmatprep.subr.bf16.mxu0 0
        %2140 = vmatpush1.bf16.msra.mxu0 0
        %2141 = vmatprep.subr.bf16.mxu0 0
        %2142 = vmatpush1.bf16.msra.mxu0 %v1803
        %2143 = vmatprep.subr.bf16.mxu0 0
        %2144 = vmatpush2.bf16.msra.mxu0 0
        %2145 = vmatprep.subr.bf16.mxu0 0
        %2146 = vmatpush2.bf16.msra.mxu0 0
        %2147 = vmatprep.subr.bf16.mxu0 0
        %2148 = vmatpush2.bf16.msra.mxu0 0
        %2149 = vmatprep.subr.bf16.mxu0 0
        %2150 = vmatpush2.bf16.msra.mxu0 0
        %2151 = vmatprep.subr.bf16.mxu0 0
        %2152 = vmatpush2.bf16.msra.mxu0 0
        %2153 = vmatprep.subr.bf16.mxu0 0
        %2154 = vmatpush2.bf16.msra.mxu0 0
        %2155 = vmatprep.subr.bf16.mxu0 0
        %2156 = vmatpush2.bf16.msra.mxu0 0
        %2157 = vmatprep.subr.bf16.mxu0 0
        %2158 = vmatpush2.bf16.msra.mxu0 0
        %2159 = vmatprep.mubr.bf16.mxu0 0
        %2160 = vmatmul.mubr.bf16.gmra.mxu0 %v2125
        %v2161 = vpop.f32.mrf.mxu0
        %v2162 = vadd.f32 %v2074, %v2161
        %v2163 = vpop.f32.mrf.mxu0
        %v2164 = vpop.f32.mrf.mxu0
        %v2165 = vadd.f32 %v2077, %v2164
        %v2166 = vpop.f32.mrf.mxu0
        %2167 = vdwg.mxu0
        %v2169 = vsel %vm1595, %v1806, 0
        %2171 = vmatprep.subr.bf16.mxu0 0
        %2172 = vmatpush1.bf16.msra.mxu0 0
        %2173 = vmatprep.subr.bf16.mxu0 0
        %2174 = vmatpush1.bf16.msra.mxu0 0
        %2175 = vmatprep.subr.bf16.mxu0 0
        %2176 = vmatpush1.bf16.msra.mxu0 0
        %2177 = vmatprep.subr.bf16.mxu0 0
        %2178 = vmatpush1.bf16.msra.mxu0 0
        %2179 = vmatprep.subr.bf16.mxu0 0
        %2180 = vmatpush1.bf16.msra.mxu0 0
        %2181 = vmatprep.subr.bf16.mxu0 0
        %2182 = vmatpush1.bf16.msra.mxu0 0
        %2183 = vmatprep.subr.bf16.mxu0 0
        %2184 = vmatpush1.bf16.msra.mxu0 0
        %2185 = vmatprep.subr.bf16.mxu0 0
        %2186 = vmatpush1.bf16.msra.mxu0 %v1804
        %2187 = vmatprep.subr.bf16.mxu0 0
        %2188 = vmatpush2.bf16.msra.mxu0 0
        %2189 = vmatprep.subr.bf16.mxu0 0
        %2190 = vmatpush2.bf16.msra.mxu0 0
        %2191 = vmatprep.subr.bf16.mxu0 0
        %2192 = vmatpush2.bf16.msra.mxu0 0
        %2193 = vmatprep.subr.bf16.mxu0 0
        %2194 = vmatpush2.bf16.msra.mxu0 0
        %2195 = vmatprep.subr.bf16.mxu0 0
        %2196 = vmatpush2.bf16.msra.mxu0 0
        %2197 = vmatprep.subr.bf16.mxu0 0
        %2198 = vmatpush2.bf16.msra.mxu0 0
        %2199 = vmatprep.subr.bf16.mxu0 0
        %2200 = vmatpush2.bf16.msra.mxu0 0
        %2201 = vmatprep.subr.bf16.mxu0 0
        %2202 = vmatpush2.bf16.msra.mxu0 0
        %2203 = vmatprep.mubr.bf16.mxu0 0
        %2204 = vmatmul.mubr.bf16.gmra.mxu0 %v2169
        %v2205 = vpop.f32.mrf.mxu0
        %v2206 = vadd.f32 %v2118, %v2205
        %v2207 = vpop.f32.mrf.mxu0
        %v2208 = vpop.f32.mrf.mxu0
        %v2209 = vadd.f32 %v2121, %v2208
        %v2210 = vpop.f32.mrf.mxu0
        %2211 = vdwg.mxu0
        %2212 = vrot.lane.b32.xlu0 %v1587, 96
        %v2213 = vpop.permute.xlu0 %2212
        %2214 = vrot.lane.b32.xlu0 %v1588, 96
        %v2215 = vpop.permute.xlu0 %2214
        %v2217 = vsel %vm1595, %v2213, 0
        %v2220 = vsel %vm1595, %v2215, 0
        %2222 = vmatprep.subr.bf16.mxu0 0
        %2223 = vmatpush1.bf16.xpose.msra.mxu0 0
        %2224 = vmatprep.subr.bf16.mxu0 0
        %2225 = vmatpush1.bf16.xpose.msra.mxu0 0
        %2226 = vmatprep.subr.bf16.mxu0 0
        %2227 = vmatpush1.bf16.xpose.msra.mxu0 0
        %2228 = vmatprep.subr.bf16.mxu0 0
        %2229 = vmatpush1.bf16.xpose.msra.mxu0 0
        %2230 = vmatprep.subr.bf16.mxu0 0
        %2231 = vmatpush1.bf16.xpose.msra.mxu0 0
        %2232 = vmatprep.subr.bf16.mxu0 0
        %2233 = vmatpush1.bf16.xpose.msra.mxu0 0
        %2234 = vmatprep.subr.bf16.mxu0 0
        %2235 = vmatpush1.bf16.xpose.msra.mxu0 0
        %2236 = vmatprep.subr.bf16.mxu0 0
        %2237 = vmatpush1.bf16.xpose.msra.mxu0 %v2220
        %2238 = vmatprep.subr.bf16.mxu0 0
        %2239 = vmatpush2.bf16.xpose.msra.mxu0 0
        %2240 = vmatprep.subr.bf16.mxu0 0
        %2241 = vmatpush2.bf16.xpose.msra.mxu0 0
        %2242 = vmatprep.subr.bf16.mxu0 0
        %2243 = vmatpush2.bf16.xpose.msra.mxu0 0
        %2244 = vmatprep.subr.bf16.mxu0 0
        %2245 = vmatpush2.bf16.xpose.msra.mxu0 0
        %2246 = vmatprep.subr.bf16.mxu0 0
        %2247 = vmatpush2.bf16.xpose.msra.mxu0 0
        %2248 = vmatprep.subr.bf16.mxu0 0
        %2249 = vmatpush2.bf16.xpose.msra.mxu0 0
        %2250 = vmatprep.subr.bf16.mxu0 0
        %2251 = vmatpush2.bf16.xpose.msra.mxu0 0
        %2252 = vmatprep.subr.bf16.mxu0 0
        %2253 = vmatpush2.bf16.xpose.msra.mxu0 0
        %2254 = vmatprep.mubr.bf16.mxu0 0
        %2255 = vmatmul.mubr.bf16.gmra.mxu0 %v2217
        %v2256 = vpop.f32.mrf.mxu0
        %v2257 = vadd.f32 0.0, %v2256
        %v2258 = vpop.f32.mrf.mxu0
        %v2259 = vpop.f32.mrf.mxu0
        %v2260 = vadd.f32 0.0, %v2259
        %v2261 = vpop.f32.mrf.mxu0
        %2262 = vdwg.mxu0
        %2263 = vrot.lane.b32.xlu0 %v1590, 96
        %v2264 = vpop.permute.xlu0 %2263
        %2265 = vrot.lane.b32.xlu0 %v1591, 96
        %v2266 = vpop.permute.xlu0 %2265
        %v2268 = vsel %vm1595, %v2264, 0
        %v2271 = vsel %vm1595, %v2266, 0
        %2273 = vmatprep.subr.bf16.mxu0 0
        %2274 = vmatpush1.bf16.xpose.msra.mxu0 0
        %2275 = vmatprep.subr.bf16.mxu0 0
        %2276 = vmatpush1.bf16.xpose.msra.mxu0 0
        %2277 = vmatprep.subr.bf16.mxu0 0
        %2278 = vmatpush1.bf16.xpose.msra.mxu0 0
        %2279 = vmatprep.subr.bf16.mxu0 0
        %2280 = vmatpush1.bf16.xpose.msra.mxu0 0
        %2281 = vmatprep.subr.bf16.mxu0 0
        %2282 = vmatpush1.bf16.xpose.msra.mxu0 0
        %2283 = vmatprep.subr.bf16.mxu0 0
        %2284 = vmatpush1.bf16.xpose.msra.mxu0 0
        %2285 = vmatprep.subr.bf16.mxu0 0
        %2286 = vmatpush1.bf16.xpose.msra.mxu0 0
        %2287 = vmatprep.subr.bf16.mxu0 0
        %2288 = vmatpush1.bf16.xpose.msra.mxu0 %v2271
        %2289 = vmatprep.subr.bf16.mxu0 0
        %2290 = vmatpush2.bf16.xpose.msra.mxu0 0
        %2291 = vmatprep.subr.bf16.mxu0 0
        %2292 = vmatpush2.bf16.xpose.msra.mxu0 0
        %2293 = vmatprep.subr.bf16.mxu0 0
        %2294 = vmatpush2.bf16.xpose.msra.mxu0 0
        %2295 = vmatprep.subr.bf16.mxu0 0
        %2296 = vmatpush2.bf16.xpose.msra.mxu0 0
        %2297 = vmatprep.subr.bf16.mxu0 0
        %2298 = vmatpush2.bf16.xpose.msra.mxu0 0
        %2299 = vmatprep.subr.bf16.mxu0 0
        %2300 = vmatpush2.bf16.xpose.msra.mxu0 0
        %2301 = vmatprep.subr.bf16.mxu0 0
        %2302 = vmatpush2.bf16.xpose.msra.mxu0 0
        %2303 = vmatprep.subr.bf16.mxu0 0
        %2304 = vmatpush2.bf16.xpose.msra.mxu0 0
        %2305 = vmatprep.mubr.bf16.mxu0 0
        %2306 = vmatmul.mubr.bf16.gmra.mxu0 %v2268
        %v2307 = vpop.f32.mrf.mxu0
        %v2308 = vadd.f32 0.0, %v2307
        %v2309 = vpop.f32.mrf.mxu0
        %v2310 = vpop.f32.mrf.mxu0
        %v2311 = vadd.f32 0.0, %v2310
        %v2312 = vpop.f32.mrf.mxu0
        %2313 = vdwg.mxu0
        %v2314 = vmul.f32 %v2257, 0.25
        %v2315 = vmul.f32 %v2260, 0.25
        %v2316 = vmul.f32 %v2308, 0.25
        %v2317 = vmul.f32 %v2311, 0.25
        %v2318 = vadd.f32 %v2314, %v1593
        %v2319 = vadd.f32 %v2315, %v1594
        %v2320 = vadd.f32 %v2316, %v1593
        %v2321 = vadd.f32 %v2317, %v1594
        %v2322 = vsel %vm1595, %v2318, -inf
        %2323 = vmax.xlane.f32.xlu0 %v2322
        %v2324 = vpop.xlane.xlu0 %2323
        %v2325 = vsel %vm1595, %v2319, -inf
        %2326 = vmax.xlane.f32.xlu0 %v2325
        %v2327 = vpop.xlane.xlu0 %2326
        %v2328 = vsel %vm1595, %v2320, -inf
        %2329 = vmax.xlane.f32.xlu0 %v2328
        %v2330 = vpop.xlane.xlu0 %2329
        %v2331 = vsel %vm1595, %v2321, -inf
        %2332 = vmax.xlane.f32.xlu0 %v2331
        %v2333 = vpop.xlane.xlu0 %2332
        %v2334 = vsub.f32 %v2318, %v2324
        %v2335 = vsub.f32 %v2319, %v2327
        %v2336 = vsub.f32 %v2320, %v2330
        %v2337 = vsub.f32 %v2321, %v2333
        %v2338 = vmul.f32 %v2334, 1.442695
        %v2339 = vpow.pop %v2338
        %v2340 = vmul.f32 %v2335, 1.442695
        %v2341 = vpow.pop %v2340
        %v2342 = vmul.f32 %v2336, 1.442695
        %v2343 = vpow.pop %v2342
        %v2344 = vmul.f32 %v2337, 1.442695
        %v2345 = vpow.pop %v2344
        %v2346 = vsel %vm1595, %v2339, 0.0
        %2347 = vadd.xlane.f32.xlu0 %v2346
        %v2348 = vpop.xlane.xlu0 %2347
        %v2349 = vsel %vm1595, %v2341, 0.0
        %2350 = vadd.xlane.f32.xlu0 %v2349
        %v2351 = vpop.xlane.xlu0 %2350
        %v2352 = vsel %vm1595, %v2343, 0.0
        %2353 = vadd.xlane.f32.xlu0 %v2352
        %v2354 = vpop.xlane.xlu0 %2353
        %v2355 = vsel %vm1595, %v2345, 0.0
        %2356 = vadd.xlane.f32.xlu0 %v2355
        %v2357 = vpop.xlane.xlu0 %2356
        %v2358 = vrcp.pop %v2348
        %v2359 = vrcp.pop %v2351
        %v2360 = vrcp.pop %v2354
        %v2361 = vrcp.pop %v2357
        %v2362 = vmul.f32 %v2339, %v2358
        %v2363 = vmul.f32 %v2341, %v2359
        %v2364 = vmul.f32 %v2343, %v2360
        %v2365 = vmul.f32 %v2345, %v2361
        %2366 = vrot.lane.b32.xlu0 %v1589, 96
        %v2367 = vpop.permute.xlu0 %2366
        %2368 = vrot.lane.b32.xlu0 %v1592, 96
        %v2369 = vpop.permute.xlu0 %2368
        %v2372 = vunpack.c.l.b16 %v439
        %v2373 = vunpack.c.l.b16 %v440
        %v2374 = vpack.c.b16 %v2373, %v2372
        %v2377 = vsel %vm1595, %v2367, 0
        %v2380 = vsel %vm1595, %v2369, 0
        %2382 = vmatprep.subr.bf16.mxu0 0
        %2383 = vmatpush1.bf16.msra.mxu0 0
        %2384 = vmatprep.subr.bf16.mxu0 0
        %2385 = vmatpush1.bf16.msra.mxu0 0
        %2386 = vmatprep.subr.bf16.mxu0 0
        %2387 = vmatpush1.bf16.msra.mxu0 0
        %2388 = vmatprep.subr.bf16.mxu0 0
        %2389 = vmatpush1.bf16.msra.mxu0 0
        %2390 = vmatprep.subr.bf16.mxu0 0
        %2391 = vmatpush1.bf16.msra.mxu0 0
        %2392 = vmatprep.subr.bf16.mxu0 0
        %2393 = vmatpush1.bf16.msra.mxu0 0
        %2394 = vmatprep.subr.bf16.mxu0 0
        %2395 = vmatpush1.bf16.msra.mxu0 0
        %2396 = vmatprep.subr.bf16.mxu0 0
        %2397 = vmatpush1.bf16.msra.mxu0 %v2374
        %2398 = vmatprep.subr.bf16.mxu0 0
        %2399 = vmatpush2.bf16.msra.mxu0 0
        %2400 = vmatprep.subr.bf16.mxu0 0
        %2401 = vmatpush2.bf16.msra.mxu0 0
        %2402 = vmatprep.subr.bf16.mxu0 0
        %2403 = vmatpush2.bf16.msra.mxu0 0
        %2404 = vmatprep.subr.bf16.mxu0 0
        %2405 = vmatpush2.bf16.msra.mxu0 0
        %2406 = vmatprep.subr.bf16.mxu0 0
        %2407 = vmatpush2.bf16.msra.mxu0 0
        %2408 = vmatprep.subr.bf16.mxu0 0
        %2409 = vmatpush2.bf16.msra.mxu0 0
        %2410 = vmatprep.subr.bf16.mxu0 0
        %2411 = vmatpush2.bf16.msra.mxu0 0
        %2412 = vmatprep.subr.bf16.mxu0 0
        %2413 = vmatpush2.bf16.msra.mxu0 0
        %2414 = vmatprep.mubr.bf16.mxu0 0
        %2415 = vmatmul.mubr.bf16.gmra.mxu0 %v2377
        %v2416 = vpop.f32.mrf.mxu0
        %v2417 = vadd.f32 0.0, %v2416
        %v2418 = vpop.f32.mrf.mxu0
        %v2419 = vpop.f32.mrf.mxu0
        %v2420 = vadd.f32 0.0, %v2419
        %v2421 = vpop.f32.mrf.mxu0
        %2422 = vmatprep.mubr.bf16.mxu0 0
        %2423 = vmatmul.mubr.bf16.gmra.mxu0 %v2380
        %v2424 = vpop.f32.mrf.mxu0
        %v2425 = vadd.f32 0.0, %v2424
        %v2426 = vpop.f32.mrf.mxu0
        %v2427 = vpop.f32.mrf.mxu0
        %v2428 = vadd.f32 0.0, %v2427
        %v2429 = vpop.f32.mrf.mxu0
        %2430 = vdwg.mxu0
        %v2431 = vpack.c.bf16 %v2420, %v2417
        %v2432 = vpack.c.bf16 %v2428, %v2425
        %v2433 = vpack.c.bf16 %v2363, %v2362
        %v2434 = vpack.c.bf16 %v2365, %v2364
        %v2436 = vsel %vm1595, %v2433, 0
        %2438 = vmatprep.subr.bf16.mxu0 0
        %2439 = vmatpush1.bf16.msra.mxu0 0
        %2440 = vmatprep.subr.bf16.mxu0 0
        %2441 = vmatpush1.bf16.msra.mxu0 0
        %2442 = vmatprep.subr.bf16.mxu0 0
        %2443 = vmatpush1.bf16.msra.mxu0 0
        %2444 = vmatprep.subr.bf16.mxu0 0
        %2445 = vmatpush1.bf16.msra.mxu0 0
        %2446 = vmatprep.subr.bf16.mxu0 0
        %2447 = vmatpush1.bf16.msra.mxu0 0
        %2448 = vmatprep.subr.bf16.mxu0 0
        %2449 = vmatpush1.bf16.msra.mxu0 0
        %2450 = vmatprep.subr.bf16.mxu0 0
        %2451 = vmatpush1.bf16.msra.mxu0 0
        %2452 = vmatprep.subr.bf16.mxu0 0
        %2453 = vmatpush1.bf16.msra.mxu0 %v2431
        %2454 = vmatprep.subr.bf16.mxu0 0
        %2455 = vmatpush2.bf16.msra.mxu0 0
        %2456 = vmatprep.subr.bf16.mxu0 0
        %2457 = vmatpush2.bf16.msra.mxu0 0
        %2458 = vmatprep.subr.bf16.mxu0 0
        %2459 = vmatpush2.bf16.msra.mxu0 0
        %2460 = vmatprep.subr.bf16.mxu0 0
        %2461 = vmatpush2.bf16.msra.mxu0 0
        %2462 = vmatprep.subr.bf16.mxu0 0
        %2463 = vmatpush2.bf16.msra.mxu0 0
        %2464 = vmatprep.subr.bf16.mxu0 0
        %2465 = vmatpush2.bf16.msra.mxu0 0
        %2466 = vmatprep.subr.bf16.mxu0 0
        %2467 = vmatpush2.bf16.msra.mxu0 0
        %2468 = vmatprep.subr.bf16.mxu0 0
        %2469 = vmatpush2.bf16.msra.mxu0 0
        %2470 = vmatprep.mubr.bf16.mxu0 0
        %2471 = vmatmul.mubr.bf16.gmra.mxu0 %v2436
        %v2472 = vpop.f32.mrf.mxu0
        %v2473 = vadd.f32 0.0, %v2472
        %v2474 = vpop.f32.mrf.mxu0
        %v2475 = vpop.f32.mrf.mxu0
        %v2476 = vadd.f32 0.0, %v2475
        %v2477 = vpop.f32.mrf.mxu0
        %2478 = vdwg.mxu0
        %v2480 = vsel %vm1595, %v2434, 0
        %2482 = vmatprep.subr.bf16.mxu0 0
        %2483 = vmatpush1.bf16.msra.mxu0 0
        %2484 = vmatprep.subr.bf16.mxu0 0
        %2485 = vmatpush1.bf16.msra.mxu0 0
        %2486 = vmatprep.subr.bf16.mxu0 0
        %2487 = vmatpush1.bf16.msra.mxu0 0
        %2488 = vmatprep.subr.bf16.mxu0 0
        %2489 = vmatpush1.bf16.msra.mxu0 0
        %2490 = vmatprep.subr.bf16.mxu0 0
        %2491 = vmatpush1.bf16.msra.mxu0 0
        %2492 = vmatprep.subr.bf16.mxu0 0
        %2493 = vmatpush1.bf16.msra.mxu0 0
        %2494 = vmatprep.subr.bf16.mxu0 0
        %2495 = vmatpush1.bf16.msra.mxu0 0
        %2496 = vmatprep.subr.bf16.mxu0 0
        %2497 = vmatpush1.bf16.msra.mxu0 %v2432
        %2498 = vmatprep.subr.bf16.mxu0 0
        %2499 = vmatpush2.bf16.msra.mxu0 0
        %2500 = vmatprep.subr.bf16.mxu0 0
        %2501 = vmatpush2.bf16.msra.mxu0 0
        %2502 = vmatprep.subr.bf16.mxu0 0
        %2503 = vmatpush2.bf16.msra.mxu0 0
        %2504 = vmatprep.subr.bf16.mxu0 0
        %2505 = vmatpush2.bf16.msra.mxu0 0
        %2506 = vmatprep.subr.bf16.mxu0 0
        %2507 = vmatpush2.bf16.msra.mxu0 0
        %2508 = vmatprep.subr.bf16.mxu0 0
        %2509 = vmatpush2.bf16.msra.mxu0 0
        %2510 = vmatprep.subr.bf16.mxu0 0
        %2511 = vmatpush2.bf16.msra.mxu0 0
        %2512 = vmatprep.subr.bf16.mxu0 0
        %2513 = vmatpush2.bf16.msra.mxu0 0
        %2514 = vmatprep.mubr.bf16.mxu0 0
        %2515 = vmatmul.mubr.bf16.gmra.mxu0 %v2480
        %v2516 = vpop.f32.mrf.mxu0
        %v2517 = vadd.f32 0.0, %v2516
        %v2518 = vpop.f32.mrf.mxu0
        %v2519 = vpop.f32.mrf.mxu0
        %v2520 = vadd.f32 0.0, %v2519
        %v2521 = vpop.f32.mrf.mxu0
        %2522 = vdwg.mxu0
        %v2523 = vadd.f32 %v2162, %v2473
        %v2524 = vadd.f32 %v2165, %v2476
        %v2525 = vadd.f32 %v2206, %v2517
        %v2526 = vadd.f32 %v2209, %v2520
        %2527 = vrot.lane.b32.xlu0 %v1587, 80
        %v2528 = vpop.permute.xlu0 %2527
        %2529 = vrot.lane.b32.xlu0 %v1588, 80
        %v2530 = vpop.permute.xlu0 %2529
        %v2532 = vsel %vm1595, %v2528, 0
        %v2535 = vsel %vm1595, %v2530, 0
        %2537 = vmatprep.subr.bf16.mxu0 0
        %2538 = vmatpush1.bf16.xpose.msra.mxu0 0
        %2539 = vmatprep.subr.bf16.mxu0 0
        %2540 = vmatpush1.bf16.xpose.msra.mxu0 0
        %2541 = vmatprep.subr.bf16.mxu0 0
        %2542 = vmatpush1.bf16.xpose.msra.mxu0 0
        %2543 = vmatprep.subr.bf16.mxu0 0
        %2544 = vmatpush1.bf16.xpose.msra.mxu0 0
        %2545 = vmatprep.subr.bf16.mxu0 0
        %2546 = vmatpush1.bf16.xpose.msra.mxu0 0
        %2547 = vmatprep.subr.bf16.mxu0 0
        %2548 = vmatpush1.bf16.xpose.msra.mxu0 0
        %2549 = vmatprep.subr.bf16.mxu0 0
        %2550 = vmatpush1.bf16.xpose.msra.mxu0 0
        %2551 = vmatprep.subr.bf16.mxu0 0
        %2552 = vmatpush1.bf16.xpose.msra.mxu0 %v2535
        %2553 = vmatprep.subr.bf16.mxu0 0
        %2554 = vmatpush2.bf16.xpose.msra.mxu0 0
        %2555 = vmatprep.subr.bf16.mxu0 0
        %2556 = vmatpush2.bf16.xpose.msra.mxu0 0
        %2557 = vmatprep.subr.bf16.mxu0 0
        %2558 = vmatpush2.bf16.xpose.msra.mxu0 0
        %2559 = vmatprep.subr.bf16.mxu0 0
        %2560 = vmatpush2.bf16.xpose.msra.mxu0 0
        %2561 = vmatprep.subr.bf16.mxu0 0
        %2562 = vmatpush2.bf16.xpose.msra.mxu0 0
        %2563 = vmatprep.subr.bf16.mxu0 0
        %2564 = vmatpush2.bf16.xpose.msra.mxu0 0
        %2565 = vmatprep.subr.bf16.mxu0 0
        %2566 = vmatpush2.bf16.xpose.msra.mxu0 0
        %2567 = vmatprep.subr.bf16.mxu0 0
        %2568 = vmatpush2.bf16.xpose.msra.mxu0 0
        %2569 = vmatprep.mubr.bf16.mxu0 0
        %2570 = vmatmul.mubr.bf16.gmra.mxu0 %v2532
        %v2571 = vpop.f32.mrf.mxu0
        %v2572 = vadd.f32 0.0, %v2571
        %v2573 = vpop.f32.mrf.mxu0
        %v2574 = vpop.f32.mrf.mxu0
        %v2575 = vadd.f32 0.0, %v2574
        %v2576 = vpop.f32.mrf.mxu0
        %2577 = vdwg.mxu0
        %2578 = vrot.lane.b32.xlu0 %v1590, 80
        %v2579 = vpop.permute.xlu0 %2578
        %2580 = vrot.lane.b32.xlu0 %v1591, 80
        %v2581 = vpop.permute.xlu0 %2580
        %v2583 = vsel %vm1595, %v2579, 0
        %v2586 = vsel %vm1595, %v2581, 0
        %2588 = vmatprep.subr.bf16.mxu0 0
        %2589 = vmatpush1.bf16.xpose.msra.mxu0 0
        %2590 = vmatprep.subr.bf16.mxu0 0
        %2591 = vmatpush1.bf16.xpose.msra.mxu0 0
        %2592 = vmatprep.subr.bf16.mxu0 0
        %2593 = vmatpush1.bf16.xpose.msra.mxu0 0
        %2594 = vmatprep.subr.bf16.mxu0 0
        %2595 = vmatpush1.bf16.xpose.msra.mxu0 0
        %2596 = vmatprep.subr.bf16.mxu0 0
        %2597 = vmatpush1.bf16.xpose.msra.mxu0 0
        %2598 = vmatprep.subr.bf16.mxu0 0
        %2599 = vmatpush1.bf16.xpose.msra.mxu0 0
        %2600 = vmatprep.subr.bf16.mxu0 0
        %2601 = vmatpush1.bf16.xpose.msra.mxu0 0
        %2602 = vmatprep.subr.bf16.mxu0 0
        %2603 = vmatpush1.bf16.xpose.msra.mxu0 %v2586
        %2604 = vmatprep.subr.bf16.mxu0 0
        %2605 = vmatpush2.bf16.xpose.msra.mxu0 0
        %2606 = vmatprep.subr.bf16.mxu0 0
        %2607 = vmatpush2.bf16.xpose.msra.mxu0 0
        %2608 = vmatprep.subr.bf16.mxu0 0
        %2609 = vmatpush2.bf16.xpose.msra.mxu0 0
        %2610 = vmatprep.subr.bf16.mxu0 0
        %2611 = vmatpush2.bf16.xpose.msra.mxu0 0
        %2612 = vmatprep.subr.bf16.mxu0 0
        %2613 = vmatpush2.bf16.xpose.msra.mxu0 0
        %2614 = vmatprep.subr.bf16.mxu0 0
        %2615 = vmatpush2.bf16.xpose.msra.mxu0 0
        %2616 = vmatprep.subr.bf16.mxu0 0
        %2617 = vmatpush2.bf16.xpose.msra.mxu0 0
        %2618 = vmatprep.subr.bf16.mxu0 0
        %2619 = vmatpush2.bf16.xpose.msra.mxu0 0
        %2620 = vmatprep.mubr.bf16.mxu0 0
        %2621 = vmatmul.mubr.bf16.gmra.mxu0 %v2583
        %v2622 = vpop.f32.mrf.mxu0
        %v2623 = vadd.f32 0.0, %v2622
        %v2624 = vpop.f32.mrf.mxu0
        %v2625 = vpop.f32.mrf.mxu0
        %v2626 = vadd.f32 0.0, %v2625
        %v2627 = vpop.f32.mrf.mxu0
        %2628 = vdwg.mxu0
        %v2629 = vmul.f32 %v2572, 0.25
        %v2630 = vmul.f32 %v2575, 0.25
        %v2631 = vmul.f32 %v2623, 0.25
        %v2632 = vmul.f32 %v2626, 0.25
        %v2633 = vadd.f32 %v2629, %v1593
        %v2634 = vadd.f32 %v2630, %v1594
        %v2635 = vadd.f32 %v2631, %v1593
        %v2636 = vadd.f32 %v2632, %v1594
        %v2637 = vsel %vm1595, %v2633, -inf
        %2638 = vmax.xlane.f32.xlu0 %v2637
        %v2639 = vpop.xlane.xlu0 %2638
        %v2640 = vsel %vm1595, %v2634, -inf
        %2641 = vmax.xlane.f32.xlu0 %v2640
        %v2642 = vpop.xlane.xlu0 %2641
        %v2643 = vsel %vm1595, %v2635, -inf
        %2644 = vmax.xlane.f32.xlu0 %v2643
        %v2645 = vpop.xlane.xlu0 %2644
        %v2646 = vsel %vm1595, %v2636, -inf
        %2647 = vmax.xlane.f32.xlu0 %v2646
        %v2648 = vpop.xlane.xlu0 %2647
        %v2649 = vsub.f32 %v2633, %v2639
        %v2650 = vsub.f32 %v2634, %v2642
        %v2651 = vsub.f32 %v2635, %v2645
        %v2652 = vsub.f32 %v2636, %v2648
        %v2653 = vmul.f32 %v2649, 1.442695
        %v2654 = vpow.pop %v2653
        %v2655 = vmul.f32 %v2650, 1.442695
        %v2656 = vpow.pop %v2655
        %v2657 = vmul.f32 %v2651, 1.442695
        %v2658 = vpow.pop %v2657
        %v2659 = vmul.f32 %v2652, 1.442695
        %v2660 = vpow.pop %v2659
        %v2661 = vsel %vm1595, %v2654, 0.0
        %2662 = vadd.xlane.f32.xlu0 %v2661
        %v2663 = vpop.xlane.xlu0 %2662
        %v2664 = vsel %vm1595, %v2656, 0.0
        %2665 = vadd.xlane.f32.xlu0 %v2664
        %v2666 = vpop.xlane.xlu0 %2665
        %v2667 = vsel %vm1595, %v2658, 0.0
        %2668 = vadd.xlane.f32.xlu0 %v2667
        %v2669 = vpop.xlane.xlu0 %2668
        %v2670 = vsel %vm1595, %v2660, 0.0
        %2671 = vadd.xlane.f32.xlu0 %v2670
        %v2672 = vpop.xlane.xlu0 %2671
        %v2673 = vrcp.pop %v2663
        %v2674 = vrcp.pop %v2666
        %v2675 = vrcp.pop %v2669
        %v2676 = vrcp.pop %v2672
        %v2677 = vmul.f32 %v2654, %v2673
        %v2678 = vmul.f32 %v2656, %v2674
        %v2679 = vmul.f32 %v2658, %v2675
        %v2680 = vmul.f32 %v2660, %v2676
        %2681 = vrot.lane.b32.xlu0 %v1589, 80
        %v2682 = vpop.permute.xlu0 %2681
        %2683 = vrot.lane.b32.xlu0 %v1592, 80
        %v2684 = vpop.permute.xlu0 %2683
        %v2687 = vunpack.c.l.b16 %v441
        %v2688 = vunpack.c.l.b16 %v442
        %v2689 = vpack.c.b16 %v2688, %v2687
        %v2692 = vsel %vm1595, %v2682, 0
        %v2695 = vsel %vm1595, %v2684, 0
        %2697 = vmatprep.subr.bf16.mxu0 0
        %2698 = vmatpush1.bf16.msra.mxu0 0
        %2699 = vmatprep.subr.bf16.mxu0 0
        %2700 = vmatpush1.bf16.msra.mxu0 0
        %2701 = vmatprep.subr.bf16.mxu0 0
        %2702 = vmatpush1.bf16.msra.mxu0 0
        %2703 = vmatprep.subr.bf16.mxu0 0
        %2704 = vmatpush1.bf16.msra.mxu0 0
        %2705 = vmatprep.subr.bf16.mxu0 0
        %2706 = vmatpush1.bf16.msra.mxu0 0
        %2707 = vmatprep.subr.bf16.mxu0 0
        %2708 = vmatpush1.bf16.msra.mxu0 0
        %2709 = vmatprep.subr.bf16.mxu0 0
        %2710 = vmatpush1.bf16.msra.mxu0 0
        %2711 = vmatprep.subr.bf16.mxu0 0
        %2712 = vmatpush1.bf16.msra.mxu0 %v2689
        %2713 = vmatprep.subr.bf16.mxu0 0
        %2714 = vmatpush2.bf16.msra.mxu0 0
        %2715 = vmatprep.subr.bf16.mxu0 0
        %2716 = vmatpush2.bf16.msra.mxu0 0
        %2717 = vmatprep.subr.bf16.mxu0 0
        %2718 = vmatpush2.bf16.msra.mxu0 0
        %2719 = vmatprep.subr.bf16.mxu0 0
        %2720 = vmatpush2.bf16.msra.mxu0 0
        %2721 = vmatprep.subr.bf16.mxu0 0
        %2722 = vmatpush2.bf16.msra.mxu0 0
        %2723 = vmatprep.subr.bf16.mxu0 0
        %2724 = vmatpush2.bf16.msra.mxu0 0
        %2725 = vmatprep.subr.bf16.mxu0 0
        %2726 = vmatpush2.bf16.msra.mxu0 0
        %2727 = vmatprep.subr.bf16.mxu0 0
        %2728 = vmatpush2.bf16.msra.mxu0 0
        %2729 = vmatprep.mubr.bf16.mxu0 0
        %2730 = vmatmul.mubr.bf16.gmra.mxu0 %v2692
        %v2731 = vpop.f32.mrf.mxu0
        %v2732 = vadd.f32 0.0, %v2731
        %v2733 = vpop.f32.mrf.mxu0
        %v2734 = vpop.f32.mrf.mxu0
        %v2735 = vadd.f32 0.0, %v2734
        %v2736 = vpop.f32.mrf.mxu0
        %2737 = vmatprep.mubr.bf16.mxu0 0
        %2738 = vmatmul.mubr.bf16.gmra.mxu0 %v2695
        %v2739 = vpop.f32.mrf.mxu0
        %v2740 = vadd.f32 0.0, %v2739
        %v2741 = vpop.f32.mrf.mxu0
        %v2742 = vpop.f32.mrf.mxu0
        %v2743 = vadd.f32 0.0, %v2742
        %v2744 = vpop.f32.mrf.mxu0
        %2745 = vdwg.mxu0
        %v2746 = vpack.c.bf16 %v2735, %v2732
        %v2747 = vpack.c.bf16 %v2743, %v2740
        %v2748 = vpack.c.bf16 %v2678, %v2677
        %v2749 = vpack.c.bf16 %v2680, %v2679
        %v2751 = vsel %vm1595, %v2748, 0
        %2753 = vmatprep.subr.bf16.mxu0 0
        %2754 = vmatpush1.bf16.msra.mxu0 0
        %2755 = vmatprep.subr.bf16.mxu0 0
        %2756 = vmatpush1.bf16.msra.mxu0 0
        %2757 = vmatprep.subr.bf16.mxu0 0
        %2758 = vmatpush1.bf16.msra.mxu0 0
        %2759 = vmatprep.subr.bf16.mxu0 0
        %2760 = vmatpush1.bf16.msra.mxu0 0
        %2761 = vmatprep.subr.bf16.mxu0 0
        %2762 = vmatpush1.bf16.msra.mxu0 0
        %2763 = vmatprep.subr.bf16.mxu0 0
        %2764 = vmatpush1.bf16.msra.mxu0 0
        %2765 = vmatprep.subr.bf16.mxu0 0
        %2766 = vmatpush1.bf16.msra.mxu0 0
        %2767 = vmatprep.subr.bf16.mxu0 0
        %2768 = vmatpush1.bf16.msra.mxu0 %v2746
        %2769 = vmatprep.subr.bf16.mxu0 0
        %2770 = vmatpush2.bf16.msra.mxu0 0
        %2771 = vmatprep.subr.bf16.mxu0 0
        %2772 = vmatpush2.bf16.msra.mxu0 0
        %2773 = vmatprep.subr.bf16.mxu0 0
        %2774 = vmatpush2.bf16.msra.mxu0 0
        %2775 = vmatprep.subr.bf16.mxu0 0
        %2776 = vmatpush2.bf16.msra.mxu0 0
        %2777 = vmatprep.subr.bf16.mxu0 0
        %2778 = vmatpush2.bf16.msra.mxu0 0
        %2779 = vmatprep.subr.bf16.mxu0 0
        %2780 = vmatpush2.bf16.msra.mxu0 0
        %2781 = vmatprep.subr.bf16.mxu0 0
        %2782 = vmatpush2.bf16.msra.mxu0 0
        %2783 = vmatprep.subr.bf16.mxu0 0
        %2784 = vmatpush2.bf16.msra.mxu0 0
        %2785 = vmatprep.mubr.bf16.mxu0 0
        %2786 = vmatmul.mubr.bf16.gmra.mxu0 %v2751
        %v2787 = vpop.f32.mrf.mxu0
        %v2788 = vadd.f32 0.0, %v2787
        %v2789 = vpop.f32.mrf.mxu0
        %v2790 = vpop.f32.mrf.mxu0
        %v2791 = vadd.f32 0.0, %v2790
        %v2792 = vpop.f32.mrf.mxu0
        %2793 = vdwg.mxu0
        %v2795 = vsel %vm1595, %v2749, 0
        %2797 = vmatprep.subr.bf16.mxu0 0
        %2798 = vmatpush1.bf16.msra.mxu0 0
        %2799 = vmatprep.subr.bf16.mxu0 0
        %2800 = vmatpush1.bf16.msra.mxu0 0
        %2801 = vmatprep.subr.bf16.mxu0 0
        %2802 = vmatpush1.bf16.msra.mxu0 0
        %2803 = vmatprep.subr.bf16.mxu0 0
        %2804 = vmatpush1.bf16.msra.mxu0 0
        %2805 = vmatprep.subr.bf16.mxu0 0
        %2806 = vmatpush1.bf16.msra.mxu0 0
        %2807 = vmatprep.subr.bf16.mxu0 0
        %2808 = vmatpush1.bf16.msra.mxu0 0
        %2809 = vmatprep.subr.bf16.mxu0 0
        %2810 = vmatpush1.bf16.msra.mxu0 0
        %2811 = vmatprep.subr.bf16.mxu0 0
        %2812 = vmatpush1.bf16.msra.mxu0 %v2747
        %2813 = vmatprep.subr.bf16.mxu0 0
        %2814 = vmatpush2.bf16.msra.mxu0 0
        %2815 = vmatprep.subr.bf16.mxu0 0
        %2816 = vmatpush2.bf16.msra.mxu0 0
        %2817 = vmatprep.subr.bf16.mxu0 0
        %2818 = vmatpush2.bf16.msra.mxu0 0
        %2819 = vmatprep.subr.bf16.mxu0 0
        %2820 = vmatpush2.bf16.msra.mxu0 0
        %2821 = vmatprep.subr.bf16.mxu0 0
        %2822 = vmatpush2.bf16.msra.mxu0 0
        %2823 = vmatprep.subr.bf16.mxu0 0
        %2824 = vmatpush2.bf16.msra.mxu0 0
        %2825 = vmatprep.subr.bf16.mxu0 0
        %2826 = vmatpush2.bf16.msra.mxu0 0
        %2827 = vmatprep.subr.bf16.mxu0 0
        %2828 = vmatpush2.bf16.msra.mxu0 0
        %2829 = vmatprep.mubr.bf16.mxu0 0
        %2830 = vmatmul.mubr.bf16.gmra.mxu0 %v2795
        %v2831 = vpop.f32.mrf.mxu0
        %v2832 = vadd.f32 0.0, %v2831
        %v2833 = vpop.f32.mrf.mxu0
        %v2834 = vpop.f32.mrf.mxu0
        %v2835 = vadd.f32 0.0, %v2834
        %v2836 = vpop.f32.mrf.mxu0
        %2837 = vdwg.mxu0
        %v2838 = vadd.f32 %v2523, %v2788
        %v2839 = vadd.f32 %v2524, %v2791
        %v2840 = vadd.f32 %v2525, %v2832
        %v2841 = vadd.f32 %v2526, %v2835
        %2842 = vrot.lane.b32.xlu0 %v1587, 64
        %v2843 = vpop.permute.xlu0 %2842
        %2844 = vrot.lane.b32.xlu0 %v1588, 64
        %v2845 = vpop.permute.xlu0 %2844
        %v2847 = vsel %vm1595, %v2843, 0
        %v2850 = vsel %vm1595, %v2845, 0
        %2852 = vmatprep.subr.bf16.mxu0 0
        %2853 = vmatpush1.bf16.xpose.msra.mxu0 0
        %2854 = vmatprep.subr.bf16.mxu0 0
        %2855 = vmatpush1.bf16.xpose.msra.mxu0 0
        %2856 = vmatprep.subr.bf16.mxu0 0
        %2857 = vmatpush1.bf16.xpose.msra.mxu0 0
        %2858 = vmatprep.subr.bf16.mxu0 0
        %2859 = vmatpush1.bf16.xpose.msra.mxu0 0
        %2860 = vmatprep.subr.bf16.mxu0 0
        %2861 = vmatpush1.bf16.xpose.msra.mxu0 0
        %2862 = vmatprep.subr.bf16.mxu0 0
        %2863 = vmatpush1.bf16.xpose.msra.mxu0 0
        %2864 = vmatprep.subr.bf16.mxu0 0
        %2865 = vmatpush1.bf16.xpose.msra.mxu0 0
        %2866 = vmatprep.subr.bf16.mxu0 0
        %2867 = vmatpush1.bf16.xpose.msra.mxu0 %v2850
        %2868 = vmatprep.subr.bf16.mxu0 0
        %2869 = vmatpush2.bf16.xpose.msra.mxu0 0
        %2870 = vmatprep.subr.bf16.mxu0 0
        %2871 = vmatpush2.bf16.xpose.msra.mxu0 0
        %2872 = vmatprep.subr.bf16.mxu0 0
        %2873 = vmatpush2.bf16.xpose.msra.mxu0 0
        %2874 = vmatprep.subr.bf16.mxu0 0
        %2875 = vmatpush2.bf16.xpose.msra.mxu0 0
        %2876 = vmatprep.subr.bf16.mxu0 0
        %2877 = vmatpush2.bf16.xpose.msra.mxu0 0
        %2878 = vmatprep.subr.bf16.mxu0 0
        %2879 = vmatpush2.bf16.xpose.msra.mxu0 0
        %2880 = vmatprep.subr.bf16.mxu0 0
        %2881 = vmatpush2.bf16.xpose.msra.mxu0 0
        %2882 = vmatprep.subr.bf16.mxu0 0
        %2883 = vmatpush2.bf16.xpose.msra.mxu0 0
        %2884 = vmatprep.mubr.bf16.mxu0 0
        %2885 = vmatmul.mubr.bf16.gmra.mxu0 %v2847
        %v2886 = vpop.f32.mrf.mxu0
        %v2887 = vadd.f32 0.0, %v2886
        %v2888 = vpop.f32.mrf.mxu0
        %v2889 = vpop.f32.mrf.mxu0
        %v2890 = vadd.f32 0.0, %v2889
        %v2891 = vpop.f32.mrf.mxu0
        %2892 = vdwg.mxu0
        %2893 = vrot.lane.b32.xlu0 %v1590, 64
        %v2894 = vpop.permute.xlu0 %2893
        %2895 = vrot.lane.b32.xlu0 %v1591, 64
        %v2896 = vpop.permute.xlu0 %2895
        %v2898 = vsel %vm1595, %v2894, 0
        %v2901 = vsel %vm1595, %v2896, 0
        %2903 = vmatprep.subr.bf16.mxu0 0
        %2904 = vmatpush1.bf16.xpose.msra.mxu0 0
        %2905 = vmatprep.subr.bf16.mxu0 0
        %2906 = vmatpush1.bf16.xpose.msra.mxu0 0
        %2907 = vmatprep.subr.bf16.mxu0 0
        %2908 = vmatpush1.bf16.xpose.msra.mxu0 0
        %2909 = vmatprep.subr.bf16.mxu0 0
        %2910 = vmatpush1.bf16.xpose.msra.mxu0 0
        %2911 = vmatprep.subr.bf16.mxu0 0
        %2912 = vmatpush1.bf16.xpose.msra.mxu0 0
        %2913 = vmatprep.subr.bf16.mxu0 0
        %2914 = vmatpush1.bf16.xpose.msra.mxu0 0
        %2915 = vmatprep.subr.bf16.mxu0 0
        %2916 = vmatpush1.bf16.xpose.msra.mxu0 0
        %2917 = vmatprep.subr.bf16.mxu0 0
        %2918 = vmatpush1.bf16.xpose.msra.mxu0 %v2901
        %2919 = vmatprep.subr.bf16.mxu0 0
        %2920 = vmatpush2.bf16.xpose.msra.mxu0 0
        %2921 = vmatprep.subr.bf16.mxu0 0
        %2922 = vmatpush2.bf16.xpose.msra.mxu0 0
        %2923 = vmatprep.subr.bf16.mxu0 0
        %2924 = vmatpush2.bf16.xpose.msra.mxu0 0
        %2925 = vmatprep.subr.bf16.mxu0 0
        %2926 = vmatpush2.bf16.xpose.msra.mxu0 0
        %2927 = vmatprep.subr.bf16.mxu0 0
        %2928 = vmatpush2.bf16.xpose.msra.mxu0 0
        %2929 = vmatprep.subr.bf16.mxu0 0
        %2930 = vmatpush2.bf16.xpose.msra.mxu0 0
        %2931 = vmatprep.subr.bf16.mxu0 0
        %2932 = vmatpush2.bf16.xpose.msra.mxu0 0
        %2933 = vmatprep.subr.bf16.mxu0 0
        %2934 = vmatpush2.bf16.xpose.msra.mxu0 0
        %2935 = vmatprep.mubr.bf16.mxu0 0
        %2936 = vmatmul.mubr.bf16.gmra.mxu0 %v2898
        %v2937 = vpop.f32.mrf.mxu0
        %v2938 = vadd.f32 0.0, %v2937
        %v2939 = vpop.f32.mrf.mxu0
        %v2940 = vpop.f32.mrf.mxu0
        %v2941 = vadd.f32 0.0, %v2940
        %v2942 = vpop.f32.mrf.mxu0
        %2943 = vdwg.mxu0
        %v2944 = vmul.f32 %v2887, 0.25
        %v2945 = vmul.f32 %v2890, 0.25
        %v2946 = vmul.f32 %v2938, 0.25
        %v2947 = vmul.f32 %v2941, 0.25
        %v2948 = vadd.f32 %v2944, %v1593
        %v2949 = vadd.f32 %v2945, %v1594
        %v2950 = vadd.f32 %v2946, %v1593
        %v2951 = vadd.f32 %v2947, %v1594
        %v2952 = vsel %vm1595, %v2948, -inf
        %2953 = vmax.xlane.f32.xlu0 %v2952
        %v2954 = vpop.xlane.xlu0 %2953
        %v2955 = vsel %vm1595, %v2949, -inf
        %2956 = vmax.xlane.f32.xlu0 %v2955
        %v2957 = vpop.xlane.xlu0 %2956
        %v2958 = vsel %vm1595, %v2950, -inf
        %2959 = vmax.xlane.f32.xlu0 %v2958
        %v2960 = vpop.xlane.xlu0 %2959
        %v2961 = vsel %vm1595, %v2951, -inf
        %2962 = vmax.xlane.f32.xlu0 %v2961
        %v2963 = vpop.xlane.xlu0 %2962
        %v2964 = vsub.f32 %v2948, %v2954
        %v2965 = vsub.f32 %v2949, %v2957
        %v2966 = vsub.f32 %v2950, %v2960
        %v2967 = vsub.f32 %v2951, %v2963
        %v2968 = vmul.f32 %v2964, 1.442695
        %v2969 = vpow.pop %v2968
        %v2970 = vmul.f32 %v2965, 1.442695
        %v2971 = vpow.pop %v2970
        %v2972 = vmul.f32 %v2966, 1.442695
        %v2973 = vpow.pop %v2972
        %v2974 = vmul.f32 %v2967, 1.442695
        %v2975 = vpow.pop %v2974
        %v2976 = vsel %vm1595, %v2969, 0.0
        %2977 = vadd.xlane.f32.xlu0 %v2976
        %v2978 = vpop.xlane.xlu0 %2977
        %v2979 = vsel %vm1595, %v2971, 0.0
        %2980 = vadd.xlane.f32.xlu0 %v2979
        %v2981 = vpop.xlane.xlu0 %2980
        %v2982 = vsel %vm1595, %v2973, 0.0
        %2983 = vadd.xlane.f32.xlu0 %v2982
        %v2984 = vpop.xlane.xlu0 %2983
        %v2985 = vsel %vm1595, %v2975, 0.0
        %2986 = vadd.xlane.f32.xlu0 %v2985
        %v2987 = vpop.xlane.xlu0 %2986
        %v2988 = vrcp.pop %v2978
        %v2989 = vrcp.pop %v2981
        %v2990 = vrcp.pop %v2984
        %v2991 = vrcp.pop %v2987
        %v2992 = vmul.f32 %v2969, %v2988
        %v2993 = vmul.f32 %v2971, %v2989
        %v2994 = vmul.f32 %v2973, %v2990
        %v2995 = vmul.f32 %v2975, %v2991
        %2996 = vrot.lane.b32.xlu0 %v1589, 64
        %v2997 = vpop.permute.xlu0 %2996
        %2998 = vrot.lane.b32.xlu0 %v1592, 64
        %v2999 = vpop.permute.xlu0 %2998
        %v3002 = vunpack.c.l.b16 %v443
        %v3003 = vunpack.c.l.b16 %v444
        %v3004 = vpack.c.b16 %v3003, %v3002
        %v3007 = vsel %vm1595, %v2997, 0
        %v3010 = vsel %vm1595, %v2999, 0
        %3012 = vmatprep.subr.bf16.mxu0 0
        %3013 = vmatpush1.bf16.msra.mxu0 0
        %3014 = vmatprep.subr.bf16.mxu0 0
        %3015 = vmatpush1.bf16.msra.mxu0 0
        %3016 = vmatprep.subr.bf16.mxu0 0
        %3017 = vmatpush1.bf16.msra.mxu0 0
        %3018 = vmatprep.subr.bf16.mxu0 0
        %3019 = vmatpush1.bf16.msra.mxu0 0
        %3020 = vmatprep.subr.bf16.mxu0 0
        %3021 = vmatpush1.bf16.msra.mxu0 0
        %3022 = vmatprep.subr.bf16.mxu0 0
        %3023 = vmatpush1.bf16.msra.mxu0 0
        %3024 = vmatprep.subr.bf16.mxu0 0
        %3025 = vmatpush1.bf16.msra.mxu0 0
        %3026 = vmatprep.subr.bf16.mxu0 0
        %3027 = vmatpush1.bf16.msra.mxu0 %v3004
        %3028 = vmatprep.subr.bf16.mxu0 0
        %3029 = vmatpush2.bf16.msra.mxu0 0
        %3030 = vmatprep.subr.bf16.mxu0 0
        %3031 = vmatpush2.bf16.msra.mxu0 0
        %3032 = vmatprep.subr.bf16.mxu0 0
        %3033 = vmatpush2.bf16.msra.mxu0 0
        %3034 = vmatprep.subr.bf16.mxu0 0
        %3035 = vmatpush2.bf16.msra.mxu0 0
        %3036 = vmatprep.subr.bf16.mxu0 0
        %3037 = vmatpush2.bf16.msra.mxu0 0
        %3038 = vmatprep.subr.bf16.mxu0 0
        %3039 = vmatpush2.bf16.msra.mxu0 0
        %3040 = vmatprep.subr.bf16.mxu0 0
        %3041 = vmatpush2.bf16.msra.mxu0 0
        %3042 = vmatprep.subr.bf16.mxu0 0
        %3043 = vmatpush2.bf16.msra.mxu0 0
        %3044 = vmatprep.mubr.bf16.mxu0 0
        %3045 = vmatmul.mubr.bf16.gmra.mxu0 %v3007
        %v3046 = vpop.f32.mrf.mxu0
        %v3047 = vadd.f32 0.0, %v3046
        %v3048 = vpop.f32.mrf.mxu0
        %v3049 = vpop.f32.mrf.mxu0
        %v3050 = vadd.f32 0.0, %v3049
        %v3051 = vpop.f32.mrf.mxu0
        %3052 = vmatprep.mubr.bf16.mxu0 0
        %3053 = vmatmul.mubr.bf16.gmra.mxu0 %v3010
        %v3054 = vpop.f32.mrf.mxu0
        %v3055 = vadd.f32 0.0, %v3054
        %v3056 = vpop.f32.mrf.mxu0
        %v3057 = vpop.f32.mrf.mxu0
        %v3058 = vadd.f32 0.0, %v3057
        %v3059 = vpop.f32.mrf.mxu0
        %3060 = vdwg.mxu0
        %v3061 = vpack.c.bf16 %v3050, %v3047
        %v3062 = vpack.c.bf16 %v3058, %v3055
        %v3063 = vpack.c.bf16 %v2993, %v2992
        %v3064 = vpack.c.bf16 %v2995, %v2994
        %v3066 = vsel %vm1595, %v3063, 0
        %3068 = vmatprep.subr.bf16.mxu0 0
        %3069 = vmatpush1.bf16.msra.mxu0 0
        %3070 = vmatprep.subr.bf16.mxu0 0
        %3071 = vmatpush1.bf16.msra.mxu0 0
        %3072 = vmatprep.subr.bf16.mxu0 0
        %3073 = vmatpush1.bf16.msra.mxu0 0
        %3074 = vmatprep.subr.bf16.mxu0 0
        %3075 = vmatpush1.bf16.msra.mxu0 0
        %3076 = vmatprep.subr.bf16.mxu0 0
        %3077 = vmatpush1.bf16.msra.mxu0 0
        %3078 = vmatprep.subr.bf16.mxu0 0
        %3079 = vmatpush1.bf16.msra.mxu0 0
        %3080 = vmatprep.subr.bf16.mxu0 0
        %3081 = vmatpush1.bf16.msra.mxu0 0
        %3082 = vmatprep.subr.bf16.mxu0 0
        %3083 = vmatpush1.bf16.msra.mxu0 %v3061
        %3084 = vmatprep.subr.bf16.mxu0 0
        %3085 = vmatpush2.bf16.msra.mxu0 0
        %3086 = vmatprep.subr.bf16.mxu0 0
        %3087 = vmatpush2.bf16.msra.mxu0 0
        %3088 = vmatprep.subr.bf16.mxu0 0
        %3089 = vmatpush2.bf16.msra.mxu0 0
        %3090 = vmatprep.subr.bf16.mxu0 0
        %3091 = vmatpush2.bf16.msra.mxu0 0
        %3092 = vmatprep.subr.bf16.mxu0 0
        %3093 = vmatpush2.bf16.msra.mxu0 0
        %3094 = vmatprep.subr.bf16.mxu0 0
        %3095 = vmatpush2.bf16.msra.mxu0 0
        %3096 = vmatprep.subr.bf16.mxu0 0
        %3097 = vmatpush2.bf16.msra.mxu0 0
        %3098 = vmatprep.subr.bf16.mxu0 0
        %3099 = vmatpush2.bf16.msra.mxu0 0
        %3100 = vmatprep.mubr.bf16.mxu0 0
        %3101 = vmatmul.mubr.bf16.gmra.mxu0 %v3066
        %v3102 = vpop.f32.mrf.mxu0
        %v3103 = vadd.f32 0.0, %v3102
        %v3104 = vpop.f32.mrf.mxu0
        %v3105 = vpop.f32.mrf.mxu0
        %v3106 = vadd.f32 0.0, %v3105
        %v3107 = vpop.f32.mrf.mxu0
        %3108 = vdwg.mxu0
        %v3110 = vsel %vm1595, %v3064, 0
        %3112 = vmatprep.subr.bf16.mxu0 0
        %3113 = vmatpush1.bf16.msra.mxu0 0
        %3114 = vmatprep.subr.bf16.mxu0 0
        %3115 = vmatpush1.bf16.msra.mxu0 0
        %3116 = vmatprep.subr.bf16.mxu0 0
        %3117 = vmatpush1.bf16.msra.mxu0 0
        %3118 = vmatprep.subr.bf16.mxu0 0
        %3119 = vmatpush1.bf16.msra.mxu0 0
        %3120 = vmatprep.subr.bf16.mxu0 0
        %3121 = vmatpush1.bf16.msra.mxu0 0
        %3122 = vmatprep.subr.bf16.mxu0 0
        %3123 = vmatpush1.bf16.msra.mxu0 0
        %3124 = vmatprep.subr.bf16.mxu0 0
        %3125 = vmatpush1.bf16.msra.mxu0 0
        %3126 = vmatprep.subr.bf16.mxu0 0
        %3127 = vmatpush1.bf16.msra.mxu0 %v3062
        %3128 = vmatprep.subr.bf16.mxu0 0
        %3129 = vmatpush2.bf16.msra.mxu0 0
        %3130 = vmatprep.subr.bf16.mxu0 0
        %3131 = vmatpush2.bf16.msra.mxu0 0
        %3132 = vmatprep.subr.bf16.mxu0 0
        %3133 = vmatpush2.bf16.msra.mxu0 0
        %3134 = vmatprep.subr.bf16.mxu0 0
        %3135 = vmatpush2.bf16.msra.mxu0 0
        %3136 = vmatprep.subr.bf16.mxu0 0
        %3137 = vmatpush2.bf16.msra.mxu0 0
        %3138 = vmatprep.subr.bf16.mxu0 0
        %3139 = vmatpush2.bf16.msra.mxu0 0
        %3140 = vmatprep.subr.bf16.mxu0 0
        %3141 = vmatpush2.bf16.msra.mxu0 0
        %3142 = vmatprep.subr.bf16.mxu0 0
        %3143 = vmatpush2.bf16.msra.mxu0 0
        %3144 = vmatprep.mubr.bf16.mxu0 0
        %3145 = vmatmul.mubr.bf16.gmra.mxu0 %v3110
        %v3146 = vpop.f32.mrf.mxu0
        %v3147 = vadd.f32 0.0, %v3146
        %v3148 = vpop.f32.mrf.mxu0
        %v3149 = vpop.f32.mrf.mxu0
        %v3150 = vadd.f32 0.0, %v3149
        %v3151 = vpop.f32.mrf.mxu0
        %3152 = vdwg.mxu0
        %v3153 = vadd.f32 %v2838, %v3103
        %v3154 = vadd.f32 %v2839, %v3106
        %v3155 = vadd.f32 %v2840, %v3147
        %v3156 = vadd.f32 %v2841, %v3150
        %3157 = vrot.lane.b32.xlu0 %v1587, 48
        %v3158 = vpop.permute.xlu0 %3157
        %3159 = vrot.lane.b32.xlu0 %v1588, 48
        %v3160 = vpop.permute.xlu0 %3159
        %v3162 = vsel %vm1595, %v3158, 0
        %v3165 = vsel %vm1595, %v3160, 0
        %3167 = vmatprep.subr.bf16.mxu0 0
        %3168 = vmatpush1.bf16.xpose.msra.mxu0 0
        %3169 = vmatprep.subr.bf16.mxu0 0
        %3170 = vmatpush1.bf16.xpose.msra.mxu0 0
        %3171 = vmatprep.subr.bf16.mxu0 0
        %3172 = vmatpush1.bf16.xpose.msra.mxu0 0
        %3173 = vmatprep.subr.bf16.mxu0 0
        %3174 = vmatpush1.bf16.xpose.msra.mxu0 0
        %3175 = vmatprep.subr.bf16.mxu0 0
        %3176 = vmatpush1.bf16.xpose.msra.mxu0 0
        %3177 = vmatprep.subr.bf16.mxu0 0
        %3178 = vmatpush1.bf16.xpose.msra.mxu0 0
        %3179 = vmatprep.subr.bf16.mxu0 0
        %3180 = vmatpush1.bf16.xpose.msra.mxu0 0
        %3181 = vmatprep.subr.bf16.mxu0 0
        %3182 = vmatpush1.bf16.xpose.msra.mxu0 %v3165
        %3183 = vmatprep.subr.bf16.mxu0 0
        %3184 = vmatpush2.bf16.xpose.msra.mxu0 0
        %3185 = vmatprep.subr.bf16.mxu0 0
        %3186 = vmatpush2.bf16.xpose.msra.mxu0 0
        %3187 = vmatprep.subr.bf16.mxu0 0
        %3188 = vmatpush2.bf16.xpose.msra.mxu0 0
        %3189 = vmatprep.subr.bf16.mxu0 0
        %3190 = vmatpush2.bf16.xpose.msra.mxu0 0
        %3191 = vmatprep.subr.bf16.mxu0 0
        %3192 = vmatpush2.bf16.xpose.msra.mxu0 0
        %3193 = vmatprep.subr.bf16.mxu0 0
        %3194 = vmatpush2.bf16.xpose.msra.mxu0 0
        %3195 = vmatprep.subr.bf16.mxu0 0
        %3196 = vmatpush2.bf16.xpose.msra.mxu0 0
        %3197 = vmatprep.subr.bf16.mxu0 0
        %3198 = vmatpush2.bf16.xpose.msra.mxu0 0
        %3199 = vmatprep.mubr.bf16.mxu0 0
        %3200 = vmatmul.mubr.bf16.gmra.mxu0 %v3162
        %v3201 = vpop.f32.mrf.mxu0
        %v3202 = vadd.f32 0.0, %v3201
        %v3203 = vpop.f32.mrf.mxu0
        %v3204 = vpop.f32.mrf.mxu0
        %v3205 = vadd.f32 0.0, %v3204
        %v3206 = vpop.f32.mrf.mxu0
        %3207 = vdwg.mxu0
        %3208 = vrot.lane.b32.xlu0 %v1590, 48
        %v3209 = vpop.permute.xlu0 %3208
        %3210 = vrot.lane.b32.xlu0 %v1591, 48
        %v3211 = vpop.permute.xlu0 %3210
        %v3213 = vsel %vm1595, %v3209, 0
        %v3216 = vsel %vm1595, %v3211, 0
        %3218 = vmatprep.subr.bf16.mxu0 0
        %3219 = vmatpush1.bf16.xpose.msra.mxu0 0
        %3220 = vmatprep.subr.bf16.mxu0 0
        %3221 = vmatpush1.bf16.xpose.msra.mxu0 0
        %3222 = vmatprep.subr.bf16.mxu0 0
        %3223 = vmatpush1.bf16.xpose.msra.mxu0 0
        %3224 = vmatprep.subr.bf16.mxu0 0
        %3225 = vmatpush1.bf16.xpose.msra.mxu0 0
        %3226 = vmatprep.subr.bf16.mxu0 0
        %3227 = vmatpush1.bf16.xpose.msra.mxu0 0
        %3228 = vmatprep.subr.bf16.mxu0 0
        %3229 = vmatpush1.bf16.xpose.msra.mxu0 0
        %3230 = vmatprep.subr.bf16.mxu0 0
        %3231 = vmatpush1.bf16.xpose.msra.mxu0 0
        %3232 = vmatprep.subr.bf16.mxu0 0
        %3233 = vmatpush1.bf16.xpose.msra.mxu0 %v3216
        %3234 = vmatprep.subr.bf16.mxu0 0
        %3235 = vmatpush2.bf16.xpose.msra.mxu0 0
        %3236 = vmatprep.subr.bf16.mxu0 0
        %3237 = vmatpush2.bf16.xpose.msra.mxu0 0
        %3238 = vmatprep.subr.bf16.mxu0 0
        %3239 = vmatpush2.bf16.xpose.msra.mxu0 0
        %3240 = vmatprep.subr.bf16.mxu0 0
        %3241 = vmatpush2.bf16.xpose.msra.mxu0 0
        %3242 = vmatprep.subr.bf16.mxu0 0
        %3243 = vmatpush2.bf16.xpose.msra.mxu0 0
        %3244 = vmatprep.subr.bf16.mxu0 0
        %3245 = vmatpush2.bf16.xpose.msra.mxu0 0
        %3246 = vmatprep.subr.bf16.mxu0 0
        %3247 = vmatpush2.bf16.xpose.msra.mxu0 0
        %3248 = vmatprep.subr.bf16.mxu0 0
        %3249 = vmatpush2.bf16.xpose.msra.mxu0 0
        %3250 = vmatprep.mubr.bf16.mxu0 0
        %3251 = vmatmul.mubr.bf16.gmra.mxu0 %v3213
        %v3252 = vpop.f32.mrf.mxu0
        %v3253 = vadd.f32 0.0, %v3252
        %v3254 = vpop.f32.mrf.mxu0
        %v3255 = vpop.f32.mrf.mxu0
        %v3256 = vadd.f32 0.0, %v3255
        %v3257 = vpop.f32.mrf.mxu0
        %3258 = vdwg.mxu0
        %v3259 = vmul.f32 %v3202, 0.25
        %v3260 = vmul.f32 %v3205, 0.25
        %v3261 = vmul.f32 %v3253, 0.25
        %v3262 = vmul.f32 %v3256, 0.25
        %v3263 = vadd.f32 %v3259, %v1593
        %v3264 = vadd.f32 %v3260, %v1594
        %v3265 = vadd.f32 %v3261, %v1593
        %v3266 = vadd.f32 %v3262, %v1594
        %v3267 = vsel %vm1595, %v3263, -inf
        %3268 = vmax.xlane.f32.xlu0 %v3267
        %v3269 = vpop.xlane.xlu0 %3268
        %v3270 = vsel %vm1595, %v3264, -inf
        %3271 = vmax.xlane.f32.xlu0 %v3270
        %v3272 = vpop.xlane.xlu0 %3271
        %v3273 = vsel %vm1595, %v3265, -inf
        %3274 = vmax.xlane.f32.xlu0 %v3273
        %v3275 = vpop.xlane.xlu0 %3274
        %v3276 = vsel %vm1595, %v3266, -inf
        %3277 = vmax.xlane.f32.xlu0 %v3276
        %v3278 = vpop.xlane.xlu0 %3277
        %v3279 = vsub.f32 %v3263, %v3269
        %v3280 = vsub.f32 %v3264, %v3272
        %v3281 = vsub.f32 %v3265, %v3275
        %v3282 = vsub.f32 %v3266, %v3278
        %v3283 = vmul.f32 %v3279, 1.442695
        %v3284 = vpow.pop %v3283
        %v3285 = vmul.f32 %v3280, 1.442695
        %v3286 = vpow.pop %v3285
        %v3287 = vmul.f32 %v3281, 1.442695
        %v3288 = vpow.pop %v3287
        %v3289 = vmul.f32 %v3282, 1.442695
        %v3290 = vpow.pop %v3289
        %v3291 = vsel %vm1595, %v3284, 0.0
        %3292 = vadd.xlane.f32.xlu0 %v3291
        %v3293 = vpop.xlane.xlu0 %3292
        %v3294 = vsel %vm1595, %v3286, 0.0
        %3295 = vadd.xlane.f32.xlu0 %v3294
        %v3296 = vpop.xlane.xlu0 %3295
        %v3297 = vsel %vm1595, %v3288, 0.0
        %3298 = vadd.xlane.f32.xlu0 %v3297
        %v3299 = vpop.xlane.xlu0 %3298
        %v3300 = vsel %vm1595, %v3290, 0.0
        %3301 = vadd.xlane.f32.xlu0 %v3300
        %v3302 = vpop.xlane.xlu0 %3301
        %v3303 = vrcp.pop %v3293
        %v3304 = vrcp.pop %v3296
        %v3305 = vrcp.pop %v3299
        %v3306 = vrcp.pop %v3302
        %v3307 = vmul.f32 %v3284, %v3303
        %v3308 = vmul.f32 %v3286, %v3304
        %v3309 = vmul.f32 %v3288, %v3305
        %v3310 = vmul.f32 %v3290, %v3306
        %3311 = vrot.lane.b32.xlu0 %v1589, 48
        %v3312 = vpop.permute.xlu0 %3311
        %3313 = vrot.lane.b32.xlu0 %v1592, 48
        %v3314 = vpop.permute.xlu0 %3313
        %v3317 = vunpack.c.l.b16 %v445
        %v3318 = vunpack.c.l.b16 %v446
        %v3319 = vpack.c.b16 %v3318, %v3317
        %v3322 = vsel %vm1595, %v3312, 0
        %v3325 = vsel %vm1595, %v3314, 0
        %3327 = vmatprep.subr.bf16.mxu0 0
        %3328 = vmatpush1.bf16.msra.mxu0 0
        %3329 = vmatprep.subr.bf16.mxu0 0
        %3330 = vmatpush1.bf16.msra.mxu0 0
        %3331 = vmatprep.subr.bf16.mxu0 0
        %3332 = vmatpush1.bf16.msra.mxu0 0
        %3333 = vmatprep.subr.bf16.mxu0 0
        %3334 = vmatpush1.bf16.msra.mxu0 0
        %3335 = vmatprep.subr.bf16.mxu0 0
        %3336 = vmatpush1.bf16.msra.mxu0 0
        %3337 = vmatprep.subr.bf16.mxu0 0
        %3338 = vmatpush1.bf16.msra.mxu0 0
        %3339 = vmatprep.subr.bf16.mxu0 0
        %3340 = vmatpush1.bf16.msra.mxu0 0
        %3341 = vmatprep.subr.bf16.mxu0 0
        %3342 = vmatpush1.bf16.msra.mxu0 %v3319
        %3343 = vmatprep.subr.bf16.mxu0 0
        %3344 = vmatpush2.bf16.msra.mxu0 0
        %3345 = vmatprep.subr.bf16.mxu0 0
        %3346 = vmatpush2.bf16.msra.mxu0 0
        %3347 = vmatprep.subr.bf16.mxu0 0
        %3348 = vmatpush2.bf16.msra.mxu0 0
        %3349 = vmatprep.subr.bf16.mxu0 0
        %3350 = vmatpush2.bf16.msra.mxu0 0
        %3351 = vmatprep.subr.bf16.mxu0 0
        %3352 = vmatpush2.bf16.msra.mxu0 0
        %3353 = vmatprep.subr.bf16.mxu0 0
        %3354 = vmatpush2.bf16.msra.mxu0 0
        %3355 = vmatprep.subr.bf16.mxu0 0
        %3356 = vmatpush2.bf16.msra.mxu0 0
        %3357 = vmatprep.subr.bf16.mxu0 0
        %3358 = vmatpush2.bf16.msra.mxu0 0
        %3359 = vmatprep.mubr.bf16.mxu0 0
        %3360 = vmatmul.mubr.bf16.gmra.mxu0 %v3322
        %v3361 = vpop.f32.mrf.mxu0
        %v3362 = vadd.f32 0.0, %v3361
        %v3363 = vpop.f32.mrf.mxu0
        %v3364 = vpop.f32.mrf.mxu0
        %v3365 = vadd.f32 0.0, %v3364
        %v3366 = vpop.f32.mrf.mxu0
        %3367 = vmatprep.mubr.bf16.mxu0 0
        %3368 = vmatmul.mubr.bf16.gmra.mxu0 %v3325
        %v3369 = vpop.f32.mrf.mxu0
        %v3370 = vadd.f32 0.0, %v3369
        %v3371 = vpop.f32.mrf.mxu0
        %v3372 = vpop.f32.mrf.mxu0
        %v3373 = vadd.f32 0.0, %v3372
        %v3374 = vpop.f32.mrf.mxu0
        %3375 = vdwg.mxu0
        %v3376 = vpack.c.bf16 %v3365, %v3362
        %v3377 = vpack.c.bf16 %v3373, %v3370
        %v3378 = vpack.c.bf16 %v3308, %v3307
        %v3379 = vpack.c.bf16 %v3310, %v3309
        %v3381 = vsel %vm1595, %v3378, 0
        %3383 = vmatprep.subr.bf16.mxu0 0
        %3384 = vmatpush1.bf16.msra.mxu0 0
        %3385 = vmatprep.subr.bf16.mxu0 0
        %3386 = vmatpush1.bf16.msra.mxu0 0
        %3387 = vmatprep.subr.bf16.mxu0 0
        %3388 = vmatpush1.bf16.msra.mxu0 0
        %3389 = vmatprep.subr.bf16.mxu0 0
        %3390 = vmatpush1.bf16.msra.mxu0 0
        %3391 = vmatprep.subr.bf16.mxu0 0
        %3392 = vmatpush1.bf16.msra.mxu0 0
        %3393 = vmatprep.subr.bf16.mxu0 0
        %3394 = vmatpush1.bf16.msra.mxu0 0
        %3395 = vmatprep.subr.bf16.mxu0 0
        %3396 = vmatpush1.bf16.msra.mxu0 0
        %3397 = vmatprep.subr.bf16.mxu0 0
        %3398 = vmatpush1.bf16.msra.mxu0 %v3376
        %3399 = vmatprep.subr.bf16.mxu0 0
        %3400 = vmatpush2.bf16.msra.mxu0 0
        %3401 = vmatprep.subr.bf16.mxu0 0
        %3402 = vmatpush2.bf16.msra.mxu0 0
        %3403 = vmatprep.subr.bf16.mxu0 0
        %3404 = vmatpush2.bf16.msra.mxu0 0
        %3405 = vmatprep.subr.bf16.mxu0 0
        %3406 = vmatpush2.bf16.msra.mxu0 0
        %3407 = vmatprep.subr.bf16.mxu0 0
        %3408 = vmatpush2.bf16.msra.mxu0 0
        %3409 = vmatprep.subr.bf16.mxu0 0
        %3410 = vmatpush2.bf16.msra.mxu0 0
        %3411 = vmatprep.subr.bf16.mxu0 0
        %3412 = vmatpush2.bf16.msra.mxu0 0
        %3413 = vmatprep.subr.bf16.mxu0 0
        %3414 = vmatpush2.bf16.msra.mxu0 0
        %3415 = vmatprep.mubr.bf16.mxu0 0
        %3416 = vmatmul.mubr.bf16.gmra.mxu0 %v3381
        %v3417 = vpop.f32.mrf.mxu0
        %v3418 = vadd.f32 0.0, %v3417
        %v3419 = vpop.f32.mrf.mxu0
        %v3420 = vpop.f32.mrf.mxu0
        %v3421 = vadd.f32 0.0, %v3420
        %v3422 = vpop.f32.mrf.mxu0
        %3423 = vdwg.mxu0
        %v3425 = vsel %vm1595, %v3379, 0
        %3427 = vmatprep.subr.bf16.mxu0 0
        %3428 = vmatpush1.bf16.msra.mxu0 0
        %3429 = vmatprep.subr.bf16.mxu0 0
        %3430 = vmatpush1.bf16.msra.mxu0 0
        %3431 = vmatprep.subr.bf16.mxu0 0
        %3432 = vmatpush1.bf16.msra.mxu0 0
        %3433 = vmatprep.subr.bf16.mxu0 0
        %3434 = vmatpush1.bf16.msra.mxu0 0
        %3435 = vmatprep.subr.bf16.mxu0 0
        %3436 = vmatpush1.bf16.msra.mxu0 0
        %3437 = vmatprep.subr.bf16.mxu0 0
        %3438 = vmatpush1.bf16.msra.mxu0 0
        %3439 = vmatprep.subr.bf16.mxu0 0
        %3440 = vmatpush1.bf16.msra.mxu0 0
        %3441 = vmatprep.subr.bf16.mxu0 0
        %3442 = vmatpush1.bf16.msra.mxu0 %v3377
        %3443 = vmatprep.subr.bf16.mxu0 0
        %3444 = vmatpush2.bf16.msra.mxu0 0
        %3445 = vmatprep.subr.bf16.mxu0 0
        %3446 = vmatpush2.bf16.msra.mxu0 0
        %3447 = vmatprep.subr.bf16.mxu0 0
        %3448 = vmatpush2.bf16.msra.mxu0 0
        %3449 = vmatprep.subr.bf16.mxu0 0
        %3450 = vmatpush2.bf16.msra.mxu0 0
        %3451 = vmatprep.subr.bf16.mxu0 0
        %3452 = vmatpush2.bf16.msra.mxu0 0
        %3453 = vmatprep.subr.bf16.mxu0 0
        %3454 = vmatpush2.bf16.msra.mxu0 0
        %3455 = vmatprep.subr.bf16.mxu0 0
        %3456 = vmatpush2.bf16.msra.mxu0 0
        %3457 = vmatprep.subr.bf16.mxu0 0
        %3458 = vmatpush2.bf16.msra.mxu0 0
        %3459 = vmatprep.mubr.bf16.mxu0 0
        %3460 = vmatmul.mubr.bf16.gmra.mxu0 %v3425
        %v3461 = vpop.f32.mrf.mxu0
        %v3462 = vadd.f32 0.0, %v3461
        %v3463 = vpop.f32.mrf.mxu0
        %v3464 = vpop.f32.mrf.mxu0
        %v3465 = vadd.f32 0.0, %v3464
        %v3466 = vpop.f32.mrf.mxu0
        %3467 = vdwg.mxu0
        %v3468 = vadd.f32 %v3153, %v3418
        %v3469 = vadd.f32 %v3154, %v3421
        %v3470 = vadd.f32 %v3155, %v3462
        %v3471 = vadd.f32 %v3156, %v3465
        %3472 = vrot.lane.b32.xlu0 %v1587, 32
        %v3473 = vpop.permute.xlu0 %3472
        %3474 = vrot.lane.b32.xlu0 %v1588, 32
        %v3475 = vpop.permute.xlu0 %3474
        %v3477 = vsel %vm1595, %v3473, 0
        %v3480 = vsel %vm1595, %v3475, 0
        %3482 = vmatprep.subr.bf16.mxu0 0
        %3483 = vmatpush1.bf16.xpose.msra.mxu0 0
        %3484 = vmatprep.subr.bf16.mxu0 0
        %3485 = vmatpush1.bf16.xpose.msra.mxu0 0
        %3486 = vmatprep.subr.bf16.mxu0 0
        %3487 = vmatpush1.bf16.xpose.msra.mxu0 0
        %3488 = vmatprep.subr.bf16.mxu0 0
        %3489 = vmatpush1.bf16.xpose.msra.mxu0 0
        %3490 = vmatprep.subr.bf16.mxu0 0
        %3491 = vmatpush1.bf16.xpose.msra.mxu0 0
        %3492 = vmatprep.subr.bf16.mxu0 0
        %3493 = vmatpush1.bf16.xpose.msra.mxu0 0
        %3494 = vmatprep.subr.bf16.mxu0 0
        %3495 = vmatpush1.bf16.xpose.msra.mxu0 0
        %3496 = vmatprep.subr.bf16.mxu0 0
        %3497 = vmatpush1.bf16.xpose.msra.mxu0 %v3480
        %3498 = vmatprep.subr.bf16.mxu0 0
        %3499 = vmatpush2.bf16.xpose.msra.mxu0 0
        %3500 = vmatprep.subr.bf16.mxu0 0
        %3501 = vmatpush2.bf16.xpose.msra.mxu0 0
        %3502 = vmatprep.subr.bf16.mxu0 0
        %3503 = vmatpush2.bf16.xpose.msra.mxu0 0
        %3504 = vmatprep.subr.bf16.mxu0 0
        %3505 = vmatpush2.bf16.xpose.msra.mxu0 0
        %3506 = vmatprep.subr.bf16.mxu0 0
        %3507 = vmatpush2.bf16.xpose.msra.mxu0 0
        %3508 = vmatprep.subr.bf16.mxu0 0
        %3509 = vmatpush2.bf16.xpose.msra.mxu0 0
        %3510 = vmatprep.subr.bf16.mxu0 0
        %3511 = vmatpush2.bf16.xpose.msra.mxu0 0
        %3512 = vmatprep.subr.bf16.mxu0 0
        %3513 = vmatpush2.bf16.xpose.msra.mxu0 0
        %3514 = vmatprep.mubr.bf16.mxu0 0
        %3515 = vmatmul.mubr.bf16.gmra.mxu0 %v3477
        %v3516 = vpop.f32.mrf.mxu0
        %v3517 = vadd.f32 0.0, %v3516
        %v3518 = vpop.f32.mrf.mxu0
        %v3519 = vpop.f32.mrf.mxu0
        %v3520 = vadd.f32 0.0, %v3519
        %v3521 = vpop.f32.mrf.mxu0
        %3522 = vdwg.mxu0
        %3523 = vrot.lane.b32.xlu0 %v1590, 32
        %v3524 = vpop.permute.xlu0 %3523
        %3525 = vrot.lane.b32.xlu0 %v1591, 32
        %v3526 = vpop.permute.xlu0 %3525
        %v3528 = vsel %vm1595, %v3524, 0
        %v3531 = vsel %vm1595, %v3526, 0
        %3533 = vmatprep.subr.bf16.mxu0 0
        %3534 = vmatpush1.bf16.xpose.msra.mxu0 0
        %3535 = vmatprep.subr.bf16.mxu0 0
        %3536 = vmatpush1.bf16.xpose.msra.mxu0 0
        %3537 = vmatprep.subr.bf16.mxu0 0
        %3538 = vmatpush1.bf16.xpose.msra.mxu0 0
        %3539 = vmatprep.subr.bf16.mxu0 0
        %3540 = vmatpush1.bf16.xpose.msra.mxu0 0
        %3541 = vmatprep.subr.bf16.mxu0 0
        %3542 = vmatpush1.bf16.xpose.msra.mxu0 0
        %3543 = vmatprep.subr.bf16.mxu0 0
        %3544 = vmatpush1.bf16.xpose.msra.mxu0 0
        %3545 = vmatprep.subr.bf16.mxu0 0
        %3546 = vmatpush1.bf16.xpose.msra.mxu0 0
        %3547 = vmatprep.subr.bf16.mxu0 0
        %3548 = vmatpush1.bf16.xpose.msra.mxu0 %v3531
        %3549 = vmatprep.subr.bf16.mxu0 0
        %3550 = vmatpush2.bf16.xpose.msra.mxu0 0
        %3551 = vmatprep.subr.bf16.mxu0 0
        %3552 = vmatpush2.bf16.xpose.msra.mxu0 0
        %3553 = vmatprep.subr.bf16.mxu0 0
        %3554 = vmatpush2.bf16.xpose.msra.mxu0 0
        %3555 = vmatprep.subr.bf16.mxu0 0
        %3556 = vmatpush2.bf16.xpose.msra.mxu0 0
        %3557 = vmatprep.subr.bf16.mxu0 0
        %3558 = vmatpush2.bf16.xpose.msra.mxu0 0
        %3559 = vmatprep.subr.bf16.mxu0 0
        %3560 = vmatpush2.bf16.xpose.msra.mxu0 0
        %3561 = vmatprep.subr.bf16.mxu0 0
        %3562 = vmatpush2.bf16.xpose.msra.mxu0 0
        %3563 = vmatprep.subr.bf16.mxu0 0
        %3564 = vmatpush2.bf16.xpose.msra.mxu0 0
        %3565 = vmatprep.mubr.bf16.mxu0 0
        %3566 = vmatmul.mubr.bf16.gmra.mxu0 %v3528
        %v3567 = vpop.f32.mrf.mxu0
        %v3568 = vadd.f32 0.0, %v3567
        %v3569 = vpop.f32.mrf.mxu0
        %v3570 = vpop.f32.mrf.mxu0
        %v3571 = vadd.f32 0.0, %v3570
        %v3572 = vpop.f32.mrf.mxu0
        %3573 = vdwg.mxu0
        %v3574 = vmul.f32 %v3517, 0.25
        %v3575 = vmul.f32 %v3520, 0.25
        %v3576 = vmul.f32 %v3568, 0.25
        %v3577 = vmul.f32 %v3571, 0.25
        %v3578 = vadd.f32 %v3574, %v1593
        %v3579 = vadd.f32 %v3575, %v1594
        %v3580 = vadd.f32 %v3576, %v1593
        %v3581 = vadd.f32 %v3577, %v1594
        %v3582 = vsel %vm1595, %v3578, -inf
        %3583 = vmax.xlane.f32.xlu0 %v3582
        %v3584 = vpop.xlane.xlu0 %3583
        %v3585 = vsel %vm1595, %v3579, -inf
        %3586 = vmax.xlane.f32.xlu0 %v3585
        %v3587 = vpop.xlane.xlu0 %3586
        %v3588 = vsel %vm1595, %v3580, -inf
        %3589 = vmax.xlane.f32.xlu0 %v3588
        %v3590 = vpop.xlane.xlu0 %3589
        %v3591 = vsel %vm1595, %v3581, -inf
        %3592 = vmax.xlane.f32.xlu0 %v3591
        %v3593 = vpop.xlane.xlu0 %3592
        %v3594 = vsub.f32 %v3578, %v3584
        %v3595 = vsub.f32 %v3579, %v3587
        %v3596 = vsub.f32 %v3580, %v3590
        %v3597 = vsub.f32 %v3581, %v3593
        %v3598 = vmul.f32 %v3594, 1.442695
        %v3599 = vpow.pop %v3598
        %v3600 = vmul.f32 %v3595, 1.442695
        %v3601 = vpow.pop %v3600
        %v3602 = vmul.f32 %v3596, 1.442695
        %v3603 = vpow.pop %v3602
        %v3604 = vmul.f32 %v3597, 1.442695
        %v3605 = vpow.pop %v3604
        %v3606 = vsel %vm1595, %v3599, 0.0
        %3607 = vadd.xlane.f32.xlu0 %v3606
        %v3608 = vpop.xlane.xlu0 %3607
        %v3609 = vsel %vm1595, %v3601, 0.0
        %3610 = vadd.xlane.f32.xlu0 %v3609
        %v3611 = vpop.xlane.xlu0 %3610
        %v3612 = vsel %vm1595, %v3603, 0.0
        %3613 = vadd.xlane.f32.xlu0 %v3612
        %v3614 = vpop.xlane.xlu0 %3613
        %v3615 = vsel %vm1595, %v3605, 0.0
        %3616 = vadd.xlane.f32.xlu0 %v3615
        %v3617 = vpop.xlane.xlu0 %3616
        %v3618 = vrcp.pop %v3608
        %v3619 = vrcp.pop %v3611
        %v3620 = vrcp.pop %v3614
        %v3621 = vrcp.pop %v3617
        %v3622 = vmul.f32 %v3599, %v3618
        %v3623 = vmul.f32 %v3601, %v3619
        %v3624 = vmul.f32 %v3603, %v3620
        %v3625 = vmul.f32 %v3605, %v3621
        %3626 = vrot.lane.b32.xlu0 %v1589, 32
        %v3627 = vpop.permute.xlu0 %3626
        %3628 = vrot.lane.b32.xlu0 %v1592, 32
        %v3629 = vpop.permute.xlu0 %3628
        %v3632 = vunpack.c.l.b16 %v447
        %v3633 = vunpack.c.l.b16 %v448
        %v3634 = vpack.c.b16 %v3633, %v3632
        %v3637 = vsel %vm1595, %v3627, 0
        %v3640 = vsel %vm1595, %v3629, 0
        %3642 = vmatprep.subr.bf16.mxu0 0
        %3643 = vmatpush1.bf16.msra.mxu0 0
        %3644 = vmatprep.subr.bf16.mxu0 0
        %3645 = vmatpush1.bf16.msra.mxu0 0
        %3646 = vmatprep.subr.bf16.mxu0 0
        %3647 = vmatpush1.bf16.msra.mxu0 0
        %3648 = vmatprep.subr.bf16.mxu0 0
        %3649 = vmatpush1.bf16.msra.mxu0 0
        %3650 = vmatprep.subr.bf16.mxu0 0
        %3651 = vmatpush1.bf16.msra.mxu0 0
        %3652 = vmatprep.subr.bf16.mxu0 0
        %3653 = vmatpush1.bf16.msra.mxu0 0
        %3654 = vmatprep.subr.bf16.mxu0 0
        %3655 = vmatpush1.bf16.msra.mxu0 0
        %3656 = vmatprep.subr.bf16.mxu0 0
        %3657 = vmatpush1.bf16.msra.mxu0 %v3634
        %3658 = vmatprep.subr.bf16.mxu0 0
        %3659 = vmatpush2.bf16.msra.mxu0 0
        %3660 = vmatprep.subr.bf16.mxu0 0
        %3661 = vmatpush2.bf16.msra.mxu0 0
        %3662 = vmatprep.subr.bf16.mxu0 0
        %3663 = vmatpush2.bf16.msra.mxu0 0
        %3664 = vmatprep.subr.bf16.mxu0 0
        %3665 = vmatpush2.bf16.msra.mxu0 0
        %3666 = vmatprep.subr.bf16.mxu0 0
        %3667 = vmatpush2.bf16.msra.mxu0 0
        %3668 = vmatprep.subr.bf16.mxu0 0
        %3669 = vmatpush2.bf16.msra.mxu0 0
        %3670 = vmatprep.subr.bf16.mxu0 0
        %3671 = vmatpush2.bf16.msra.mxu0 0
        %3672 = vmatprep.subr.bf16.mxu0 0
        %3673 = vmatpush2.bf16.msra.mxu0 0
        %3674 = vmatprep.mubr.bf16.mxu0 0
        %3675 = vmatmul.mubr.bf16.gmra.mxu0 %v3637
        %v3676 = vpop.f32.mrf.mxu0
        %v3677 = vadd.f32 0.0, %v3676
        %v3678 = vpop.f32.mrf.mxu0
        %v3679 = vpop.f32.mrf.mxu0
        %v3680 = vadd.f32 0.0, %v3679
        %v3681 = vpop.f32.mrf.mxu0
        %3682 = vmatprep.mubr.bf16.mxu0 0
        %3683 = vmatmul.mubr.bf16.gmra.mxu0 %v3640
        %v3684 = vpop.f32.mrf.mxu0
        %v3685 = vadd.f32 0.0, %v3684
        %v3686 = vpop.f32.mrf.mxu0
        %v3687 = vpop.f32.mrf.mxu0
        %v3688 = vadd.f32 0.0, %v3687
        %v3689 = vpop.f32.mrf.mxu0
        %3690 = vdwg.mxu0
        %v3691 = vpack.c.bf16 %v3680, %v3677
        %v3692 = vpack.c.bf16 %v3688, %v3685
        %v3693 = vpack.c.bf16 %v3623, %v3622
        %v3694 = vpack.c.bf16 %v3625, %v3624
        %v3696 = vsel %vm1595, %v3693, 0
        %3698 = vmatprep.subr.bf16.mxu0 0
        %3699 = vmatpush1.bf16.msra.mxu0 0
        %3700 = vmatprep.subr.bf16.mxu0 0
        %3701 = vmatpush1.bf16.msra.mxu0 0
        %3702 = vmatprep.subr.bf16.mxu0 0
        %3703 = vmatpush1.bf16.msra.mxu0 0
        %3704 = vmatprep.subr.bf16.mxu0 0
        %3705 = vmatpush1.bf16.msra.mxu0 0
        %3706 = vmatprep.subr.bf16.mxu0 0
        %3707 = vmatpush1.bf16.msra.mxu0 0
        %3708 = vmatprep.subr.bf16.mxu0 0
        %3709 = vmatpush1.bf16.msra.mxu0 0
        %3710 = vmatprep.subr.bf16.mxu0 0
        %3711 = vmatpush1.bf16.msra.mxu0 0
        %3712 = vmatprep.subr.bf16.mxu0 0
        %3713 = vmatpush1.bf16.msra.mxu0 %v3691
        %3714 = vmatprep.subr.bf16.mxu0 0
        %3715 = vmatpush2.bf16.msra.mxu0 0
        %3716 = vmatprep.subr.bf16.mxu0 0
        %3717 = vmatpush2.bf16.msra.mxu0 0
        %3718 = vmatprep.subr.bf16.mxu0 0
        %3719 = vmatpush2.bf16.msra.mxu0 0
        %3720 = vmatprep.subr.bf16.mxu0 0
        %3721 = vmatpush2.bf16.msra.mxu0 0
        %3722 = vmatprep.subr.bf16.mxu0 0
        %3723 = vmatpush2.bf16.msra.mxu0 0
        %3724 = vmatprep.subr.bf16.mxu0 0
        %3725 = vmatpush2.bf16.msra.mxu0 0
        %3726 = vmatprep.subr.bf16.mxu0 0
        %3727 = vmatpush2.bf16.msra.mxu0 0
        %3728 = vmatprep.subr.bf16.mxu0 0
        %3729 = vmatpush2.bf16.msra.mxu0 0
        %3730 = vmatprep.mubr.bf16.mxu0 0
        %3731 = vmatmul.mubr.bf16.gmra.mxu0 %v3696
        %v3732 = vpop.f32.mrf.mxu0
        %v3733 = vadd.f32 0.0, %v3732
        %v3734 = vpop.f32.mrf.mxu0
        %v3735 = vpop.f32.mrf.mxu0
        %v3736 = vadd.f32 0.0, %v3735
        %v3737 = vpop.f32.mrf.mxu0
        %3738 = vdwg.mxu0
        %v3740 = vsel %vm1595, %v3694, 0
        %3742 = vmatprep.subr.bf16.mxu0 0
        %3743 = vmatpush1.bf16.msra.mxu0 0
        %3744 = vmatprep.subr.bf16.mxu0 0
        %3745 = vmatpush1.bf16.msra.mxu0 0
        %3746 = vmatprep.subr.bf16.mxu0 0
        %3747 = vmatpush1.bf16.msra.mxu0 0
        %3748 = vmatprep.subr.bf16.mxu0 0
        %3749 = vmatpush1.bf16.msra.mxu0 0
        %3750 = vmatprep.subr.bf16.mxu0 0
        %3751 = vmatpush1.bf16.msra.mxu0 0
        %3752 = vmatprep.subr.bf16.mxu0 0
        %3753 = vmatpush1.bf16.msra.mxu0 0
        %3754 = vmatprep.subr.bf16.mxu0 0
        %3755 = vmatpush1.bf16.msra.mxu0 0
        %3756 = vmatprep.subr.bf16.mxu0 0
        %3757 = vmatpush1.bf16.msra.mxu0 %v3692
        %3758 = vmatprep.subr.bf16.mxu0 0
        %3759 = vmatpush2.bf16.msra.mxu0 0
        %3760 = vmatprep.subr.bf16.mxu0 0
        %3761 = vmatpush2.bf16.msra.mxu0 0
        %3762 = vmatprep.subr.bf16.mxu0 0
        %3763 = vmatpush2.bf16.msra.mxu0 0
        %3764 = vmatprep.subr.bf16.mxu0 0
        %3765 = vmatpush2.bf16.msra.mxu0 0
        %3766 = vmatprep.subr.bf16.mxu0 0
        %3767 = vmatpush2.bf16.msra.mxu0 0
        %3768 = vmatprep.subr.bf16.mxu0 0
        %3769 = vmatpush2.bf16.msra.mxu0 0
        %3770 = vmatprep.subr.bf16.mxu0 0
        %3771 = vmatpush2.bf16.msra.mxu0 0
        %3772 = vmatprep.subr.bf16.mxu0 0
        %3773 = vmatpush2.bf16.msra.mxu0 0
        %3774 = vmatprep.mubr.bf16.mxu0 0
        %3775 = vmatmul.mubr.bf16.gmra.mxu0 %v3740
        %v3776 = vpop.f32.mrf.mxu0
        %v3777 = vadd.f32 0.0, %v3776
        %v3778 = vpop.f32.mrf.mxu0
        %v3779 = vpop.f32.mrf.mxu0
        %v3780 = vadd.f32 0.0, %v3779
        %v3781 = vpop.f32.mrf.mxu0
        %3782 = vdwg.mxu0
        %v3783 = vadd.f32 %v3468, %v3733
        %v3784 = vadd.f32 %v3469, %v3736
        %v3785 = vadd.f32 %v3470, %v3777
        %v3786 = vadd.f32 %v3471, %v3780
        %3787 = vrot.lane.b32.xlu0 %v1587, 16
        %v3788 = vpop.permute.xlu0 %3787
        %3789 = vrot.lane.b32.xlu0 %v1588, 16
        %v3790 = vpop.permute.xlu0 %3789
        %v3792 = vsel %vm1595, %v3788, 0
        %v3795 = vsel %vm1595, %v3790, 0
        %3797 = vmatprep.subr.bf16.mxu0 0
        %3798 = vmatpush1.bf16.xpose.msra.mxu0 0
        %3799 = vmatprep.subr.bf16.mxu0 0
        %3800 = vmatpush1.bf16.xpose.msra.mxu0 0
        %3801 = vmatprep.subr.bf16.mxu0 0
        %3802 = vmatpush1.bf16.xpose.msra.mxu0 0
        %3803 = vmatprep.subr.bf16.mxu0 0
        %3804 = vmatpush1.bf16.xpose.msra.mxu0 0
        %3805 = vmatprep.subr.bf16.mxu0 0
        %3806 = vmatpush1.bf16.xpose.msra.mxu0 0
        %3807 = vmatprep.subr.bf16.mxu0 0
        %3808 = vmatpush1.bf16.xpose.msra.mxu0 0
        %3809 = vmatprep.subr.bf16.mxu0 0
        %3810 = vmatpush1.bf16.xpose.msra.mxu0 0
        %3811 = vmatprep.subr.bf16.mxu0 0
        %3812 = vmatpush1.bf16.xpose.msra.mxu0 %v3795
        %3813 = vmatprep.subr.bf16.mxu0 0
        %3814 = vmatpush2.bf16.xpose.msra.mxu0 0
        %3815 = vmatprep.subr.bf16.mxu0 0
        %3816 = vmatpush2.bf16.xpose.msra.mxu0 0
        %3817 = vmatprep.subr.bf16.mxu0 0
        %3818 = vmatpush2.bf16.xpose.msra.mxu0 0
        %3819 = vmatprep.subr.bf16.mxu0 0
        %3820 = vmatpush2.bf16.xpose.msra.mxu0 0
        %3821 = vmatprep.subr.bf16.mxu0 0
        %3822 = vmatpush2.bf16.xpose.msra.mxu0 0
        %3823 = vmatprep.subr.bf16.mxu0 0
        %3824 = vmatpush2.bf16.xpose.msra.mxu0 0
        %3825 = vmatprep.subr.bf16.mxu0 0
        %3826 = vmatpush2.bf16.xpose.msra.mxu0 0
        %3827 = vmatprep.subr.bf16.mxu0 0
        %3828 = vmatpush2.bf16.xpose.msra.mxu0 0
        %3829 = vmatprep.mubr.bf16.mxu0 0
        %3830 = vmatmul.mubr.bf16.gmra.mxu0 %v3792
        %v3831 = vpop.f32.mrf.mxu0
        %v3832 = vadd.f32 0.0, %v3831
        %v3833 = vpop.f32.mrf.mxu0
        %v3834 = vpop.f32.mrf.mxu0
        %v3835 = vadd.f32 0.0, %v3834
        %v3836 = vpop.f32.mrf.mxu0
        %3837 = vdwg.mxu0
        %3838 = vrot.lane.b32.xlu0 %v1590, 16
        %v3839 = vpop.permute.xlu0 %3838
        %3840 = vrot.lane.b32.xlu0 %v1591, 16
        %v3841 = vpop.permute.xlu0 %3840
        %v3843 = vsel %vm1595, %v3839, 0
        %v3846 = vsel %vm1595, %v3841, 0
        %3848 = vmatprep.subr.bf16.mxu0 0
        %3849 = vmatpush1.bf16.xpose.msra.mxu0 0
        %3850 = vmatprep.subr.bf16.mxu0 0
        %3851 = vmatpush1.bf16.xpose.msra.mxu0 0
        %3852 = vmatprep.subr.bf16.mxu0 0
        %3853 = vmatpush1.bf16.xpose.msra.mxu0 0
        %3854 = vmatprep.subr.bf16.mxu0 0
        %3855 = vmatpush1.bf16.xpose.msra.mxu0 0
        %3856 = vmatprep.subr.bf16.mxu0 0
        %3857 = vmatpush1.bf16.xpose.msra.mxu0 0
        %3858 = vmatprep.subr.bf16.mxu0 0
        %3859 = vmatpush1.bf16.xpose.msra.mxu0 0
        %3860 = vmatprep.subr.bf16.mxu0 0
        %3861 = vmatpush1.bf16.xpose.msra.mxu0 0
        %3862 = vmatprep.subr.bf16.mxu0 0
        %3863 = vmatpush1.bf16.xpose.msra.mxu0 %v3846
        %3864 = vmatprep.subr.bf16.mxu0 0
        %3865 = vmatpush2.bf16.xpose.msra.mxu0 0
        %3866 = vmatprep.subr.bf16.mxu0 0
        %3867 = vmatpush2.bf16.xpose.msra.mxu0 0
        %3868 = vmatprep.subr.bf16.mxu0 0
        %3869 = vmatpush2.bf16.xpose.msra.mxu0 0
        %3870 = vmatprep.subr.bf16.mxu0 0
        %3871 = vmatpush2.bf16.xpose.msra.mxu0 0
        %3872 = vmatprep.subr.bf16.mxu0 0
        %3873 = vmatpush2.bf16.xpose.msra.mxu0 0
        %3874 = vmatprep.subr.bf16.mxu0 0
        %3875 = vmatpush2.bf16.xpose.msra.mxu0 0
        %3876 = vmatprep.subr.bf16.mxu0 0
        %3877 = vmatpush2.bf16.xpose.msra.mxu0 0
        %3878 = vmatprep.subr.bf16.mxu0 0
        %3879 = vmatpush2.bf16.xpose.msra.mxu0 0
        %3880 = vmatprep.mubr.bf16.mxu0 0
        %3881 = vmatmul.mubr.bf16.gmra.mxu0 %v3843
        %v3882 = vpop.f32.mrf.mxu0
        %v3883 = vadd.f32 0.0, %v3882
        %v3884 = vpop.f32.mrf.mxu0
        %v3885 = vpop.f32.mrf.mxu0
        %v3886 = vadd.f32 0.0, %v3885
        %v3887 = vpop.f32.mrf.mxu0
        %3888 = vdwg.mxu0
        %v3889 = vmul.f32 %v3832, 0.25
        %v3890 = vmul.f32 %v3835, 0.25
        %v3891 = vmul.f32 %v3883, 0.25
        %v3892 = vmul.f32 %v3886, 0.25
        %v3893 = vadd.f32 %v3889, %v1593
        %v3894 = vadd.f32 %v3890, %v1594
        %v3895 = vadd.f32 %v3891, %v1593
        %v3896 = vadd.f32 %v3892, %v1594
        %v3897 = vsel %vm1595, %v3893, -inf
        %3898 = vmax.xlane.f32.xlu0 %v3897
        %v3899 = vpop.xlane.xlu0 %3898
        %v3900 = vsel %vm1595, %v3894, -inf
        %3901 = vmax.xlane.f32.xlu0 %v3900
        %v3902 = vpop.xlane.xlu0 %3901
        %v3903 = vsel %vm1595, %v3895, -inf
        %3904 = vmax.xlane.f32.xlu0 %v3903
        %v3905 = vpop.xlane.xlu0 %3904
        %v3906 = vsel %vm1595, %v3896, -inf
        %3907 = vmax.xlane.f32.xlu0 %v3906
        %v3908 = vpop.xlane.xlu0 %3907
        %v3909 = vsub.f32 %v3893, %v3899
        %v3910 = vsub.f32 %v3894, %v3902
        %v3911 = vsub.f32 %v3895, %v3905
        %v3912 = vsub.f32 %v3896, %v3908
        %v3913 = vmul.f32 %v3909, 1.442695
        %v3914 = vpow.pop %v3913
        %v3915 = vmul.f32 %v3910, 1.442695
        %v3916 = vpow.pop %v3915
        %v3917 = vmul.f32 %v3911, 1.442695
        %v3918 = vpow.pop %v3917
        %v3919 = vmul.f32 %v3912, 1.442695
        %v3920 = vpow.pop %v3919
        %v3921 = vsel %vm1595, %v3914, 0.0
        %3922 = vadd.xlane.f32.xlu0 %v3921
        %v3923 = vpop.xlane.xlu0 %3922
        %v3924 = vsel %vm1595, %v3916, 0.0
        %3925 = vadd.xlane.f32.xlu0 %v3924
        %v3926 = vpop.xlane.xlu0 %3925
        %v3927 = vsel %vm1595, %v3918, 0.0
        %3928 = vadd.xlane.f32.xlu0 %v3927
        %v3929 = vpop.xlane.xlu0 %3928
        %v3930 = vsel %vm1595, %v3920, 0.0
        %3931 = vadd.xlane.f32.xlu0 %v3930
        %v3932 = vpop.xlane.xlu0 %3931
        %v3933 = vrcp.pop %v3923
        %v3934 = vrcp.pop %v3926
        %v3935 = vrcp.pop %v3929
        %v3936 = vrcp.pop %v3932
        %v3937 = vmul.f32 %v3914, %v3933
        %v3938 = vmul.f32 %v3916, %v3934
        %v3939 = vmul.f32 %v3918, %v3935
        %v3940 = vmul.f32 %v3920, %v3936
        %3941 = vrot.lane.b32.xlu0 %v1589, 16
        %v3942 = vpop.permute.xlu0 %3941
        %3943 = vrot.lane.b32.xlu0 %v1592, 16
        %v3944 = vpop.permute.xlu0 %3943
        %v3947 = vunpack.c.l.b16 %v449
        %v3948 = vunpack.c.l.b16 %v450
        %v3949 = vpack.c.b16 %v3948, %v3947
        %v3952 = vsel %vm1595, %v3942, 0
        %v3955 = vsel %vm1595, %v3944, 0
        %3957 = vmatprep.subr.bf16.mxu0 0
        %3958 = vmatpush1.bf16.msra.mxu0 0
        %3959 = vmatprep.subr.bf16.mxu0 0
        %3960 = vmatpush1.bf16.msra.mxu0 0
        %3961 = vmatprep.subr.bf16.mxu0 0
        %3962 = vmatpush1.bf16.msra.mxu0 0
        %3963 = vmatprep.subr.bf16.mxu0 0
        %3964 = vmatpush1.bf16.msra.mxu0 0
        %3965 = vmatprep.subr.bf16.mxu0 0
        %3966 = vmatpush1.bf16.msra.mxu0 0
        %3967 = vmatprep.subr.bf16.mxu0 0
        %3968 = vmatpush1.bf16.msra.mxu0 0
        %3969 = vmatprep.subr.bf16.mxu0 0
        %3970 = vmatpush1.bf16.msra.mxu0 0
        %3971 = vmatprep.subr.bf16.mxu0 0
        %3972 = vmatpush1.bf16.msra.mxu0 %v3949
        %3973 = vmatprep.subr.bf16.mxu0 0
        %3974 = vmatpush2.bf16.msra.mxu0 0
        %3975 = vmatprep.subr.bf16.mxu0 0
        %3976 = vmatpush2.bf16.msra.mxu0 0
        %3977 = vmatprep.subr.bf16.mxu0 0
        %3978 = vmatpush2.bf16.msra.mxu0 0
        %3979 = vmatprep.subr.bf16.mxu0 0
        %3980 = vmatpush2.bf16.msra.mxu0 0
        %3981 = vmatprep.subr.bf16.mxu0 0
        %3982 = vmatpush2.bf16.msra.mxu0 0
        %3983 = vmatprep.subr.bf16.mxu0 0
        %3984 = vmatpush2.bf16.msra.mxu0 0
        %3985 = vmatprep.subr.bf16.mxu0 0
        %3986 = vmatpush2.bf16.msra.mxu0 0
        %3987 = vmatprep.subr.bf16.mxu0 0
        %3988 = vmatpush2.bf16.msra.mxu0 0
        %3989 = vmatprep.mubr.bf16.mxu0 0
        %3990 = vmatmul.mubr.bf16.gmra.mxu0 %v3952
        %v3991 = vpop.f32.mrf.mxu0
        %v3992 = vadd.f32 0.0, %v3991
        %v3993 = vpop.f32.mrf.mxu0
        %v3994 = vpop.f32.mrf.mxu0
        %v3995 = vadd.f32 0.0, %v3994
        %v3996 = vpop.f32.mrf.mxu0
        %3997 = vmatprep.mubr.bf16.mxu0 0
        %3998 = vmatmul.mubr.bf16.gmra.mxu0 %v3955
        %v3999 = vpop.f32.mrf.mxu0
        %v4000 = vadd.f32 0.0, %v3999
        %v4001 = vpop.f32.mrf.mxu0
        %v4002 = vpop.f32.mrf.mxu0
        %v4003 = vadd.f32 0.0, %v4002
        %v4004 = vpop.f32.mrf.mxu0
        %4005 = vdwg.mxu0
        %v4006 = vpack.c.bf16 %v3995, %v3992
        %v4007 = vpack.c.bf16 %v4003, %v4000
        %v4008 = vpack.c.bf16 %v3938, %v3937
        %v4009 = vpack.c.bf16 %v3940, %v3939
        %v4011 = vsel %vm1595, %v4008, 0
        %4013 = vmatprep.subr.bf16.mxu0 0
        %4014 = vmatpush1.bf16.msra.mxu0 0
        %4015 = vmatprep.subr.bf16.mxu0 0
        %4016 = vmatpush1.bf16.msra.mxu0 0
        %4017 = vmatprep.subr.bf16.mxu0 0
        %4018 = vmatpush1.bf16.msra.mxu0 0
        %4019 = vmatprep.subr.bf16.mxu0 0
        %4020 = vmatpush1.bf16.msra.mxu0 0
        %4021 = vmatprep.subr.bf16.mxu0 0
        %4022 = vmatpush1.bf16.msra.mxu0 0
        %4023 = vmatprep.subr.bf16.mxu0 0
        %4024 = vmatpush1.bf16.msra.mxu0 0
        %4025 = vmatprep.subr.bf16.mxu0 0
        %4026 = vmatpush1.bf16.msra.mxu0 0
        %4027 = vmatprep.subr.bf16.mxu0 0
        %4028 = vmatpush1.bf16.msra.mxu0 %v4006
        %4029 = vmatprep.subr.bf16.mxu0 0
        %4030 = vmatpush2.bf16.msra.mxu0 0
        %4031 = vmatprep.subr.bf16.mxu0 0
        %4032 = vmatpush2.bf16.msra.mxu0 0
        %4033 = vmatprep.subr.bf16.mxu0 0
        %4034 = vmatpush2.bf16.msra.mxu0 0
        %4035 = vmatprep.subr.bf16.mxu0 0
        %4036 = vmatpush2.bf16.msra.mxu0 0
        %4037 = vmatprep.subr.bf16.mxu0 0
        %4038 = vmatpush2.bf16.msra.mxu0 0
        %4039 = vmatprep.subr.bf16.mxu0 0
        %4040 = vmatpush2.bf16.msra.mxu0 0
        %4041 = vmatprep.subr.bf16.mxu0 0
        %4042 = vmatpush2.bf16.msra.mxu0 0
        %4043 = vmatprep.subr.bf16.mxu0 0
        %4044 = vmatpush2.bf16.msra.mxu0 0
        %4045 = vmatprep.mubr.bf16.mxu0 0
        %4046 = vmatmul.mubr.bf16.gmra.mxu0 %v4011
        %v4047 = vpop.f32.mrf.mxu0
        %v4048 = vadd.f32 0.0, %v4047
        %v4049 = vpop.f32.mrf.mxu0
        %v4050 = vpop.f32.mrf.mxu0
        %v4051 = vadd.f32 0.0, %v4050
        %v4052 = vpop.f32.mrf.mxu0
        %4053 = vdwg.mxu0
        %v4055 = vsel %vm1595, %v4009, 0
        %4057 = vmatprep.subr.bf16.mxu0 0
        %4058 = vmatpush1.bf16.msra.mxu0 0
        %4059 = vmatprep.subr.bf16.mxu0 0
        %4060 = vmatpush1.bf16.msra.mxu0 0
        %4061 = vmatprep.subr.bf16.mxu0 0
        %4062 = vmatpush1.bf16.msra.mxu0 0
        %4063 = vmatprep.subr.bf16.mxu0 0
        %4064 = vmatpush1.bf16.msra.mxu0 0
        %4065 = vmatprep.subr.bf16.mxu0 0
        %4066 = vmatpush1.bf16.msra.mxu0 0
        %4067 = vmatprep.subr.bf16.mxu0 0
        %4068 = vmatpush1.bf16.msra.mxu0 0
        %4069 = vmatprep.subr.bf16.mxu0 0
        %4070 = vmatpush1.bf16.msra.mxu0 0
        %4071 = vmatprep.subr.bf16.mxu0 0
        %4072 = vmatpush1.bf16.msra.mxu0 %v4007
        %4073 = vmatprep.subr.bf16.mxu0 0
        %4074 = vmatpush2.bf16.msra.mxu0 0
        %4075 = vmatprep.subr.bf16.mxu0 0
        %4076 = vmatpush2.bf16.msra.mxu0 0
        %4077 = vmatprep.subr.bf16.mxu0 0
        %4078 = vmatpush2.bf16.msra.mxu0 0
        %4079 = vmatprep.subr.bf16.mxu0 0
        %4080 = vmatpush2.bf16.msra.mxu0 0
        %4081 = vmatprep.subr.bf16.mxu0 0
        %4082 = vmatpush2.bf16.msra.mxu0 0
        %4083 = vmatprep.subr.bf16.mxu0 0
        %4084 = vmatpush2.bf16.msra.mxu0 0
        %4085 = vmatprep.subr.bf16.mxu0 0
        %4086 = vmatpush2.bf16.msra.mxu0 0
        %4087 = vmatprep.subr.bf16.mxu0 0
        %4088 = vmatpush2.bf16.msra.mxu0 0
        %4089 = vmatprep.mubr.bf16.mxu0 0
        %4090 = vmatmul.mubr.bf16.gmra.mxu0 %v4055
        %v4091 = vpop.f32.mrf.mxu0
        %v4092 = vadd.f32 0.0, %v4091
        %v4093 = vpop.f32.mrf.mxu0
        %v4094 = vpop.f32.mrf.mxu0
        %v4095 = vadd.f32 0.0, %v4094
        %v4096 = vpop.f32.mrf.mxu0
        %4097 = vdwg.mxu0
        %v4098 = vadd.f32 %v3783, %v4048
        %v4099 = vadd.f32 %v3784, %v4051
        %v4100 = vadd.f32 %v3785, %v4092
        %v4101 = vadd.f32 %v3786, %v4095
        %v4102 = vadd.f32 %v1274, %v4098
        %v4103 = vadd.f32 %v1275, %v4099
        %v4104 = vadd.f32 %v1276, %v4100
        %v4105 = vadd.f32 %v1277, %v4101
        %v4107 = vlaneseq
        %v4108 = vshrl.u32 %v4107, 7
        %v4109 = vsub.s32 0, %v4108
        %v4110 = vrot.slane %v518, %v4109
        %v4112 = vadd.f32 %v4102, %v4110
        %v4113 = vadd.f32 %v4103, %v4110
        %v4114 = vadd.f32 %v4104, %v4110
        %v4115 = vadd.f32 %v4105, %v4110
        %4116 = vadd.xlane.f32.xlu0 %v4112
        %v4117 = vpop.xlane.xlu0 %4116
        %4118 = vadd.xlane.f32.xlu0 %v4113
        %v4119 = vpop.xlane.xlu0 %4118
        %4120 = vadd.xlane.f32.xlu0 %v4114
        %v4121 = vpop.xlane.xlu0 %4120
        %4122 = vadd.xlane.f32.xlu0 %v4115
        %v4123 = vpop.xlane.xlu0 %4122
        %v4124 = vmul.f32 %v4117, %v1286
        %v4125 = vmul.f32 %v4119, %v1286
        %v4126 = vmul.f32 %v4121, %v1286
        %v4127 = vmul.f32 %v4123, %v1286
        %v4128 = vsub.f32 %v4112, %v4124
        %v4129 = vsub.f32 %v4113, %v4125
        %v4130 = vsub.f32 %v4114, %v4126
        %v4131 = vsub.f32 %v4115, %v4127
        %v4132 = vmul.f32 %v4128, %v4128
        %v4133 = vmul.f32 %v4129, %v4129
        %v4134 = vmul.f32 %v4130, %v4130
        %v4135 = vmul.f32 %v4131, %v4131
        %4136 = vadd.xlane.f32.xlu0 %v4132
        %v4137 = vpop.xlane.xlu0 %4136
        %4138 = vadd.xlane.f32.xlu0 %v4133
        %v4139 = vpop.xlane.xlu0 %4138
        %4140 = vadd.xlane.f32.xlu0 %v4134
        %v4141 = vpop.xlane.xlu0 %4140
        %4142 = vadd.xlane.f32.xlu0 %v4135
        %v4143 = vpop.xlane.xlu0 %4142
        %v4144 = vmul.f32 %v4137, %v1286
        %v4145 = vmul.f32 %v4139, %v1286
        %v4146 = vmul.f32 %v4141, %v1286
        %v4147 = vmul.f32 %v4143, %v1286
        %v4148 = vadd.f32 %v4144, 1e-06
        %v4149 = vadd.f32 %v4145, 1e-06
        %v4150 = vadd.f32 %v4146, 1e-06
        %v4151 = vadd.f32 %v4147, 1e-06
        %v4152 = vrsqrt.pop %v4148
        %v4153 = vrsqrt.pop %v4149
        %v4154 = vrsqrt.pop %v4150
        %v4155 = vrsqrt.pop %v4151
        %v4156 = vmul.f32 %v4128, %v4152
        %v4157 = vmul.f32 %v4129, %v4153
        %v4158 = vmul.f32 %v4130, %v4154
        %v4159 = vmul.f32 %v4131, %v4155
        %v4160 = vlaneseq
        %v4161 = vshrl.u32 %v4160, 7
        %v4162 = vsub.s32 2, %v4161
        %v4163 = vrot.slane %v522, %v4162
        %v4164 = vmul.f32 %v4156, %v4163
        %v4165 = vmul.f32 %v4157, %v4163
        %v4166 = vmul.f32 %v4158, %v4163
        %v4167 = vmul.f32 %v4159, %v4163
        %v4168 = vlaneseq
        %v4169 = vshrl.u32 %v4168, 7
        %v4170 = vsub.s32 3, %v4169
        %v4171 = vrot.slane %v522, %v4170
        %v4172 = vadd.f32 %v4164, %v4171
        %v4173 = vadd.f32 %v4165, %v4171
        %v4174 = vadd.f32 %v4166, %v4171
        %v4175 = vadd.f32 %v4167, %v4171
        %v4176 = vpack.c.bf16 %v4173, %v4172
        %v4177 = vpack.c.bf16 %v4175, %v4174
        %v4179 = vlaneseq
        %v4180 = vshrl.u32 %v4179, 7
        %v4181 = vsub.s32 0, %v4180
        %v4182 = vrot.slane %v519, %v4181
        %v4200 = vunpack.c.l.b16 %v451
        %v4201 = vunpack.c.l.b16 %v452
        %v4202 = vunpack.c.l.b16 %v453
        %v4203 = vunpack.c.l.b16 %v454
        %v4204 = vunpack.c.l.b16 %v455
        %v4205 = vunpack.c.l.b16 %v456
        %v4206 = vunpack.c.l.b16 %v457
        %v4207 = vunpack.c.l.b16 %v458
        %v4208 = vunpack.c.l.b16 %v459
        %v4209 = vunpack.c.l.b16 %v460
        %v4210 = vunpack.c.l.b16 %v461
        %v4211 = vunpack.c.l.b16 %v462
        %v4212 = vunpack.c.l.b16 %v463
        %v4213 = vunpack.c.l.b16 %v464
        %v4214 = vunpack.c.l.b16 %v465
        %v4215 = vunpack.c.l.b16 %v466
        %v4216 = vpack.c.b16 %v4201, %v4200
        %v4217 = vpack.c.b16 %v4203, %v4202
        %v4218 = vpack.c.b16 %v4205, %v4204
        %v4219 = vpack.c.b16 %v4207, %v4206
        %v4220 = vpack.c.b16 %v4209, %v4208
        %v4221 = vpack.c.b16 %v4211, %v4210
        %v4222 = vpack.c.b16 %v4213, %v4212
        %v4223 = vpack.c.b16 %v4215, %v4214
        %4232 = vmatprep.subr.bf16.mxu0 0
        %4233 = vmatpush1.bf16.msra.mxu0 %v4223
        %4234 = vmatprep.subr.bf16.mxu0 0
        %4235 = vmatpush1.bf16.msra.mxu0 %v4222
        %4236 = vmatprep.subr.bf16.mxu0 0
        %4237 = vmatpush1.bf16.msra.mxu0 %v4221
        %4238 = vmatprep.subr.bf16.mxu0 0
        %4239 = vmatpush1.bf16.msra.mxu0 %v4220
        %4240 = vmatprep.subr.bf16.mxu0 0
        %4241 = vmatpush1.bf16.msra.mxu0 %v4219
        %4242 = vmatprep.subr.bf16.mxu0 0
        %4243 = vmatpush1.bf16.msra.mxu0 %v4218
        %4244 = vmatprep.subr.bf16.mxu0 0
        %4245 = vmatpush1.bf16.msra.mxu0 %v4217
        %4246 = vmatprep.subr.bf16.mxu0 0
        %4247 = vmatpush1.bf16.msra.mxu0 %v4216
        %4248 = vmatprep.subr.bf16.mxu0 0
        %4249 = vmatpush2.bf16.msra.mxu0 0
        %4250 = vmatprep.subr.bf16.mxu0 0
        %4251 = vmatpush2.bf16.msra.mxu0 0
        %4252 = vmatprep.subr.bf16.mxu0 0
        %4253 = vmatpush2.bf16.msra.mxu0 0
        %4254 = vmatprep.subr.bf16.mxu0 0
        %4255 = vmatpush2.bf16.msra.mxu0 0
        %4256 = vmatprep.subr.bf16.mxu0 0
        %4257 = vmatpush2.bf16.msra.mxu0 0
        %4258 = vmatprep.subr.bf16.mxu0 0
        %4259 = vmatpush2.bf16.msra.mxu0 0
        %4260 = vmatprep.subr.bf16.mxu0 0
        %4261 = vmatpush2.bf16.msra.mxu0 0
        %4262 = vmatprep.subr.bf16.mxu0 0
        %4263 = vmatpush2.bf16.msra.mxu0 0
        %4264 = vmatprep.mubr.bf16.mxu0 0
        %4265 = vmatmul.mubr.bf16.gmra.mxu0 %v4176
        %v4266 = vpop.f32.mrf.mxu0
        %v4267 = vadd.f32 %v4182, %v4266
        %v4268 = vpop.f32.mrf.mxu0
        %v4269 = vpop.f32.mrf.mxu0
        %v4270 = vadd.f32 %v4182, %v4269
        %v4271 = vpop.f32.mrf.mxu0
        %4272 = vmatprep.mubr.bf16.mxu0 0
        %4273 = vmatmul.mubr.bf16.gmra.mxu0 %v4177
        %v4274 = vpop.f32.mrf.mxu0
        %v4275 = vadd.f32 %v4182, %v4274
        %v4276 = vpop.f32.mrf.mxu0
        %v4277 = vpop.f32.mrf.mxu0
        %v4278 = vadd.f32 %v4182, %v4277
        %v4279 = vpop.f32.mrf.mxu0
        %4280 = vdwg.mxu0
        %v4281 = vmax.f32 %v4267, 0.0
        %v4282 = vmax.f32 %v4270, 0.0
        %v4283 = vmax.f32 %v4275, 0.0
        %v4284 = vmax.f32 %v4278, 0.0
        %v4285 = vpack.c.bf16 %v4282, %v4281
        %v4286 = vpack.c.bf16 %v4284, %v4283
        %v4288 = vlaneseq
        %v4289 = vshrl.u32 %v4288, 7
        %v4290 = vsub.s32 0, %v4289
        %v4291 = vrot.slane %v520, %v4290
        %v4309 = vunpack.c.l.b16 %v467
        %v4310 = vunpack.c.l.b16 %v468
        %v4311 = vunpack.c.l.b16 %v469
        %v4312 = vunpack.c.l.b16 %v470
        %v4313 = vunpack.c.l.b16 %v471
        %v4314 = vunpack.c.l.b16 %v472
        %v4315 = vunpack.c.l.b16 %v473
        %v4316 = vunpack.c.l.b16 %v474
        %v4317 = vunpack.c.l.b16 %v475
        %v4318 = vunpack.c.l.b16 %v476
        %v4319 = vunpack.c.l.b16 %v477
        %v4320 = vunpack.c.l.b16 %v478
        %v4321 = vunpack.c.l.b16 %v479
        %v4322 = vunpack.c.l.b16 %v480
        %v4323 = vunpack.c.l.b16 %v481
        %v4324 = vunpack.c.l.b16 %v482
        %v4325 = vpack.c.b16 %v4310, %v4309
        %v4326 = vpack.c.b16 %v4312, %v4311
        %v4327 = vpack.c.b16 %v4314, %v4313
        %v4328 = vpack.c.b16 %v4316, %v4315
        %v4329 = vpack.c.b16 %v4318, %v4317
        %v4330 = vpack.c.b16 %v4320, %v4319
        %v4331 = vpack.c.b16 %v4322, %v4321
        %v4332 = vpack.c.b16 %v4324, %v4323
        %4341 = vmatprep.subr.bf16.mxu0 0
        %4342 = vmatpush1.bf16.msra.mxu0 %v4332
        %4343 = vmatprep.subr.bf16.mxu0 0
        %4344 = vmatpush1.bf16.msra.mxu0 %v4331
        %4345 = vmatprep.subr.bf16.mxu0 0
        %4346 = vmatpush1.bf16.msra.mxu0 %v4330
        %4347 = vmatprep.subr.bf16.mxu0 0
        %4348 = vmatpush1.bf16.msra.mxu0 %v4329
        %4349 = vmatprep.subr.bf16.mxu0 0
        %4350 = vmatpush1.bf16.msra.mxu0 %v4328
        %4351 = vmatprep.subr.bf16.mxu0 0
        %4352 = vmatpush1.bf16.msra.mxu0 %v4327
        %4353 = vmatprep.subr.bf16.mxu0 0
        %4354 = vmatpush1.bf16.msra.mxu0 %v4326
        %4355 = vmatprep.subr.bf16.mxu0 0
        %4356 = vmatpush1.bf16.msra.mxu0 %v4325
        %4357 = vmatprep.subr.bf16.mxu0 0
        %4358 = vmatpush2.bf16.msra.mxu0 0
        %4359 = vmatprep.subr.bf16.mxu0 0
        %4360 = vmatpush2.bf16.msra.mxu0 0
        %4361 = vmatprep.subr.bf16.mxu0 0
        %4362 = vmatpush2.bf16.msra.mxu0 0
        %4363 = vmatprep.subr.bf16.mxu0 0
        %4364 = vmatpush2.bf16.msra.mxu0 0
        %4365 = vmatprep.subr.bf16.mxu0 0
        %4366 = vmatpush2.bf16.msra.mxu0 0
        %4367 = vmatprep.subr.bf16.mxu0 0
        %4368 = vmatpush2.bf16.msra.mxu0 0
        %4369 = vmatprep.subr.bf16.mxu0 0
        %4370 = vmatpush2.bf16.msra.mxu0 0
        %4371 = vmatprep.subr.bf16.mxu0 0
        %4372 = vmatpush2.bf16.msra.mxu0 0
        %4373 = vmatprep.mubr.bf16.mxu0 0
        %4374 = vmatmul.mubr.bf16.gmra.mxu0 %v4285
        %v4375 = vpop.f32.mrf.mxu0
        %v4376 = vadd.f32 %v4291, %v4375
        %v4377 = vpop.f32.mrf.mxu0
        %v4378 = vpop.f32.mrf.mxu0
        %v4379 = vadd.f32 %v4291, %v4378
        %v4380 = vpop.f32.mrf.mxu0
        %4381 = vmatprep.mubr.bf16.mxu0 0
        %4382 = vmatmul.mubr.bf16.gmra.mxu0 %v4286
        %v4383 = vpop.f32.mrf.mxu0
        %v4384 = vadd.f32 %v4291, %v4383
        %v4385 = vpop.f32.mrf.mxu0
        %v4386 = vpop.f32.mrf.mxu0
        %v4387 = vadd.f32 %v4291, %v4386
        %v4388 = vpop.f32.mrf.mxu0
        %4389 = vdwg.mxu0
        %v4390 = vadd.f32 %v4112, %v4376
        %v4391 = vadd.f32 %v4113, %v4379
        %v4392 = vadd.f32 %v4114, %v4384
        %v4393 = vadd.f32 %v4115, %v4387
        %4394 = vadd.xlane.f32.xlu0 %v4390
        %v4395 = vpop.xlane.xlu0 %4394
        %4396 = vadd.xlane.f32.xlu0 %v4391
        %v4397 = vpop.xlane.xlu0 %4396
        %4398 = vadd.xlane.f32.xlu0 %v4392
        %v4399 = vpop.xlane.xlu0 %4398
        %4400 = vadd.xlane.f32.xlu0 %v4393
        %v4401 = vpop.xlane.xlu0 %4400
        %v4402 = vmul.f32 %v4395, %v1286
        %v4403 = vmul.f32 %v4397, %v1286
        %v4404 = vmul.f32 %v4399, %v1286
        %v4405 = vmul.f32 %v4401, %v1286
        %v4406 = vsub.f32 %v4390, %v4402
        %v4407 = vsub.f32 %v4391, %v4403
        %v4408 = vsub.f32 %v4392, %v4404
        %v4409 = vsub.f32 %v4393, %v4405
        %v4410 = vmul.f32 %v4406, %v4406
        %v4411 = vmul.f32 %v4407, %v4407
        %v4412 = vmul.f32 %v4408, %v4408
        %v4413 = vmul.f32 %v4409, %v4409
        %4414 = vadd.xlane.f32.xlu0 %v4410
        %v4415 = vpop.xlane.xlu0 %4414
        %4416 = vadd.xlane.f32.xlu0 %v4411
        %v4417 = vpop.xlane.xlu0 %4416
        %4418 = vadd.xlane.f32.xlu0 %v4412
        %v4419 = vpop.xlane.xlu0 %4418
        %4420 = vadd.xlane.f32.xlu0 %v4413
        %v4421 = vpop.xlane.xlu0 %4420
        %v4422 = vmul.f32 %v4415, %v1286
        %v4423 = vmul.f32 %v4417, %v1286
        %v4424 = vmul.f32 %v4419, %v1286
        %v4425 = vmul.f32 %v4421, %v1286
        %v4426 = vadd.f32 %v4422, 1e-06
        %v4427 = vadd.f32 %v4423, 1e-06
        %v4428 = vadd.f32 %v4424, 1e-06
        %v4429 = vadd.f32 %v4425, 1e-06
        %v4430 = vrsqrt.pop %v4426
        %v4431 = vrsqrt.pop %v4427
        %v4432 = vrsqrt.pop %v4428
        %v4433 = vrsqrt.pop %v4429
        %v4434 = vmul.f32 %v4406, %v4430
        %v4435 = vmul.f32 %v4407, %v4431
        %v4436 = vmul.f32 %v4408, %v4432
        %v4437 = vmul.f32 %v4409, %v4433
        %v4438 = vlaneseq
        %v4439 = vshrl.u32 %v4438, 7
        %v4440 = vsub.s32 4, %v4439
        %v4441 = vrot.slane %v522, %v4440
        %v4442 = vmul.f32 %v4434, %v4441
        %v4443 = vmul.f32 %v4435, %v4441
        %v4444 = vmul.f32 %v4436, %v4441
        %v4445 = vmul.f32 %v4437, %v4441
        %v4446 = vlaneseq
        %v4447 = vshrl.u32 %v4446, 7
        %v4448 = vsub.s32 5, %v4447
        %v4449 = vrot.slane %v522, %v4448
        %v4450 = vadd.f32 %v4442, %v4449
        %v4451 = vadd.f32 %v4443, %v4449
        %v4452 = vadd.f32 %v4444, %v4449
        %v4453 = vadd.f32 %v4445, %v4449
        %v4454 = vpack.c.bf16 %v4451, %v4450
        %v4455 = vpack.c.bf16 %v4453, %v4452
        %v4457 = vlaneseq
        %v4458 = vshrl.u32 %v4457, 7
        %v4459 = vsub.s32 0, %v4458
        %v4460 = vrot.slane %v521, %v4459
        %v4461 = vlaneseq
        %v4462 = vshrl.u32 %v4461, 7
        %v4463 = vsub.s32 1, %v4462
        %v4464 = vrot.slane %v521, %v4463
        %v4483 = vunpack.c.l.b16 %v483
        %v4484 = vunpack.c.h.b16 %v483
        %v4485 = vunpack.c.l.b16 %v484
        %v4486 = vunpack.c.h.b16 %v484
        %v4487 = vunpack.c.l.b16 %v485
        %v4488 = vunpack.c.h.b16 %v485
        %v4489 = vunpack.c.l.b16 %v486
        %v4490 = vunpack.c.h.b16 %v486
        %v4491 = vunpack.c.l.b16 %v487
        %v4492 = vunpack.c.h.b16 %v487
        %v4493 = vunpack.c.l.b16 %v488
        %v4494 = vunpack.c.h.b16 %v488
        %v4495 = vunpack.c.l.b16 %v489
        %v4496 = vunpack.c.h.b16 %v489
        %v4497 = vunpack.c.l.b16 %v490
        %v4498 = vunpack.c.h.b16 %v490
        %v4499 = vunpack.c.l.b16 %v491
        %v4500 = vunpack.c.h.b16 %v491
        %v4501 = vunpack.c.l.b16 %v492
        %v4502 = vunpack.c.h.b16 %v492
        %v4503 = vunpack.c.l.b16 %v493
        %v4504 = vunpack.c.h.b16 %v493
        %v4505 = vunpack.c.l.b16 %v494
        %v4506 = vunpack.c.h.b16 %v494
        %v4507 = vunpack.c.l.b16 %v495
        %v4508 = vunpack.c.h.b16 %v495
        %v4509 = vunpack.c.l.b16 %v496
        %v4510 = vunpack.c.h.b16 %v496
        %v4511 = vunpack.c.l.b16 %v497
        %v4512 = vunpack.c.h.b16 %v497
        %v4513 = vunpack.c.l.b16 %v498
        %v4514 = vunpack.c.h.b16 %v498
        %v4515 = vpack.c.b16 %v4485, %v4483
        %v4516 = vpack.c.b16 %v4486, %v4484
        %v4517 = vpack.c.b16 %v4489, %v4487
        %v4518 = vpack.c.b16 %v4490, %v4488
        %v4519 = vpack.c.b16 %v4493, %v4491
        %v4520 = vpack.c.b16 %v4494, %v4492
        %v4521 = vpack.c.b16 %v4497, %v4495
        %v4522 = vpack.c.b16 %v4498, %v4496
        %v4523 = vpack.c.b16 %v4501, %v4499
        %v4524 = vpack.c.b16 %v4502, %v4500
        %v4525 = vpack.c.b16 %v4505, %v4503
        %v4526 = vpack.c.b16 %v4506, %v4504
        %v4527 = vpack.c.b16 %v4509, %v4507
        %v4528 = vpack.c.b16 %v4510, %v4508
        %v4529 = vpack.c.b16 %v4513, %v4511
        %v4530 = vpack.c.b16 %v4514, %v4512
        %4547 = vmatprep.subr.bf16.mxu0 %v4530
        %4548 = vmatpush1.bf16.msra.mxu0 %v4529
        %4549 = vmatprep.subr.bf16.mxu0 %v4528
        %4550 = vmatpush1.bf16.msra.mxu0 %v4527
        %4551 = vmatprep.subr.bf16.mxu0 %v4526
        %4552 = vmatpush1.bf16.msra.mxu0 %v4525
        %4553 = vmatprep.subr.bf16.mxu0 %v4524
        %4554 = vmatpush1.bf16.msra.mxu0 %v4523
        %4555 = vmatprep.subr.bf16.mxu0 %v4522
        %4556 = vmatpush1.bf16.msra.mxu0 %v4521
        %4557 = vmatprep.subr.bf16.mxu0 %v4520
        %4558 = vmatpush1.bf16.msra.mxu0 %v4519
        %4559 = vmatprep.subr.bf16.mxu0 %v4518
        %4560 = vmatpush1.bf16.msra.mxu0 %v4517
        %4561 = vmatprep.subr.bf16.mxu0 %v4516
        %4562 = vmatpush1.bf16.msra.mxu0 %v4515
        %4563 = vmatprep.subr.bf16.mxu0 0
        %4564 = vmatpush2.bf16.msra.mxu0 0
        %4565 = vmatprep.subr.bf16.mxu0 0
        %4566 = vmatpush2.bf16.msra.mxu0 0
        %4567 = vmatprep.subr.bf16.mxu0 0
        %4568 = vmatpush2.bf16.msra.mxu0 0
        %4569 = vmatprep.subr.bf16.mxu0 0
        %4570 = vmatpush2.bf16.msra.mxu0 0
        %4571 = vmatprep.subr.bf16.mxu0 0
        %4572 = vmatpush2.bf16.msra.mxu0 0
        %4573 = vmatprep.subr.bf16.mxu0 0
        %4574 = vmatpush2.bf16.msra.mxu0 0
        %4575 = vmatprep.subr.bf16.mxu0 0
        %4576 = vmatpush2.bf16.msra.mxu0 0
        %4577 = vmatprep.subr.bf16.mxu0 0
        %4578 = vmatpush2.bf16.msra.mxu0 0
        %4579 = vmatprep.mubr.bf16.mxu0 0
        %4580 = vmatmul.mubr.bf16.gmra.mxu0 %v4454
        %v4581 = vpop.f32.mrf.mxu0
        %v4582 = vadd.f32 %v4460, %v4581
        %v4583 = vpop.f32.mrf.mxu0
        %v4584 = vadd.f32 %v4464, %v4583
        %v4585 = vpop.f32.mrf.mxu0
        %v4586 = vadd.f32 %v4460, %v4585
        %v4587 = vpop.f32.mrf.mxu0
        %v4588 = vadd.f32 %v4464, %v4587
        %4589 = vmatprep.mubr.bf16.mxu0 0
        %4590 = vmatmul.mubr.bf16.gmra.mxu0 %v4455
        %v4591 = vpop.f32.mrf.mxu0
        %v4592 = vadd.f32 %v4460, %v4591
        %v4593 = vpop.f32.mrf.mxu0
        %v4594 = vadd.f32 %v4464, %v4593
        %v4595 = vpop.f32.mrf.mxu0
        %v4596 = vadd.f32 %v4460, %v4595
        %v4597 = vpop.f32.mrf.mxu0
        %v4598 = vadd.f32 %v4464, %v4597
        %4599 = vdwg.mxu0
        %4600 = vst [vmem:[%s372] sm:$0xff] %v4582
        %4601 = vst [vmem:[%s372 + $0x8] sm:$0xff] %v4584
        %4602 = vst [vmem:[%s372 + $0x10] sm:$0xff] %v4586
        %4603 = vst [vmem:[%s372 + $0x18] sm:$0xff] %v4588
        %4604 = vst [vmem:[%s372 + $0x20] sm:$0xff] %v4592
        %4605 = vst [vmem:[%s372 + $0x28] sm:$0xff] %v4594
        %4606 = vst [vmem:[%s372 + $0x30] sm:$0xff] %v4596
        %4607 = vst [vmem:[%s372 + $0x38] sm:$0xff] %v4598
        %s4608 = sand.u32 %s232, 1
        %s4609 = scalar_lea.sflag [#allocation5], %s4608
        %s4610 = sand.u32 %s232, 1
        %s4611 = smul.addr %s4610, 64
        %s4612 = scalar_lea.vmem [#allocation8], %s4611
        // Predicated region
        $region65: #{tpu_custom_call.1} parent=55 // pred_check
          %p4613 = pneg %p242
        $region66: #{tpu_custom_call.1} parent=55 // pred_check_branch
          %4615 = sbr.rel (%p4613) target = $region68
        $region67: #{tpu_custom_call.1} parent=55 // pred_region
          %s4616 = smul.u32 2, %s25
          %s4618 = ssub.s32 1024, 1024
          %4619 = vsyncadd %s4609, %s4618
          %s4620 = smul.addr %s4616, 4
          %s4621 = smul.addr %s4620, 128
          %s4622 = scalar_lea.hbm %s9, %s4621
          %s4623 = sshll.u32 %s4612, 4
          %s4624 = int_to_ptr.vmem [resolvable:$true] %s4623
          %4629 = dma.vmem_to_hbm [thread:$0]  %s4624, 1024, %s4622, %s4609, 256, 256, 16
        $region68: #{tpu_custom_call.1} parent=55 // pred_fallthru
          _
      $region56: #{tpu_custom_call.1} parent=5 // pred_fallthru
        _
      %p4630 = scmp.le.s32.totalorder 2, %s20
      // Predicated region
      $region69: #{tpu_custom_call.1} parent=5 // pred_check
        %p4631 = pneg %p4630
      $region70: #{tpu_custom_call.1} parent=5 // pred_check_branch
        %4633 = sbr.rel (%p4631) target = $region72
      $region71: #{tpu_custom_call.1} parent=5 // pred_region
        %s4634 = ssub.s32 %s20, 2
        // Predicated region
        $region73: #{tpu_custom_call.1} parent=71 // pred_check
          %p4635 = pneg %p248
        $region74: #{tpu_custom_call.1} parent=71 // pred_check_branch
          %4637 = sbr.rel (%p4635) target = $region76
        $region75: #{tpu_custom_call.1} parent=71 // pred_region
          %s4638 = sand.u32 %s233, 1
          %s4639 = scalar_lea.sflag [#allocation5], %s4638
          %s4640 = sand.u32 %s233, 1
          %s4641 = smul.addr %s4640, 64
          %s4642 = scalar_lea.vmem [#allocation8], %s4641
          %4643 = dma.done %s4639, 1024
        $region76: #{tpu_custom_call.1} parent=71 // pred_fallthru
          _
      $region72: #{tpu_custom_call.1} parent=5 // pred_fallthru
        _
    $region6: #{tpu_custom_call.1} parent=1 // loop_footer
      %s24 = sadd.s32 1, %s20
    $region7: #{tpu_custom_call.1} parent=1 // loop_footer_branch
      %19 = sbr.rel target = $region3
    $region8: #{tpu_custom_call.1} parent=1 // loop_exit
      _
    %4644 = vsyncpa [#allocation4], 1
    %s4645 = scalar_lea.sflag [#allocation4], 1
    %4646 = vsyncpa %s4645, 1
    %4647 = vsyncpa [#allocation7], 1
    %4648 = vsyncpa [#allocation5], 1
    %s4649 = scalar_lea.sflag [#allocation5], 1
    %4650 = vsyncpa %s4649, 1

</llo_original>
